<compile_context>
chip_gen: v7x
topology: tpu7x:2x2x1
jax: 0.10.0
libtpu: 0.0.40
codegen_flags: <defaults>
</compile_context>

<pallas_src>
import numpy as np
import jax
import jax.numpy as jnp
from jax.experimental import pallas as pl
from jax.experimental.pallas import tpu as pltpu


RP = 8  # rows per image stripe (1 top pad + H2 interior rows + bottom pads)


# ----------------------------------------------------------------------------
# Fused kernel
# ----------------------------------------------------------------------------
def _make_fenet_kernel(Nb, Ho1, Wo1, H2, W2, Cout):
    WL = W2 * Cout              # lanes of one (w, c)-packed activation row
    R = Nb * RP                 # activation rows handled per grid step

    def kernel(p1_ref, w1_ref, b_ref, sc_ref, sh_ref, out_ref):
        f32 = jnp.float32

        # ---------------- conv1: one im2col matmul + folded BN + ReLU -------
        a1 = jnp.dot(p1_ref[...], w1_ref[...], preferred_element_type=f32)
        a1 = a1 * sc_ref[0:1, 0:Cout] + sh_ref[0:1, 0:Cout]
        a1 = jnp.maximum(a1, 0.0)                       # (Nb*Ho1*Wo1, Cout)

        # rows were ordered (n, hp, hh, wp, wh) by the wrapper; regroup so
        # each 8-row group (= one sublane tile) is one image row with
        # [even-w | odd-w] halves.  This reshape moves no data.
        G = a1.reshape(Nb * Ho1, Wo1, Cout)

        # ------------- 3x3 / stride-2 / pad-1 max-pool (vectorized) ---------
        # horizontal: out col j = max over w in {2j-1, 2j, 2j+1}; post-ReLU
        # values are >= 0 so the clipped left border just drops a term.
        cols = []
        for j in range(W2):
            m = jnp.maximum(G[:, j, :], G[:, W2 + j, :])        # w=2j, w=2j+1
            if j > 0:
                m = jnp.maximum(m, G[:, W2 + j - 1, :])         # w=2j-1
            cols.append(m)
        Hp = jnp.concatenate(cols, axis=-1)        # (Nb*Ho1, WL), lanes (j, c)

        # vertical: out row i = max over h in {2i-1, 2i, 2i+1}
        Hp3 = Hp.reshape(Nb, Ho1, WL)              # rows 0..H2-1: even h,
        HpE = Hp3[:, 0:H2, :]                      # rows H2..2H2-1: odd h
        HpO = Hp3[:, H2:2 * H2, :]
        HpOp = jnp.concatenate(
            [jnp.zeros((Nb, 1, WL), f32), HpO[:, 0:H2 - 1, :]], axis=1)
        pooled = jnp.maximum(jnp.maximum(HpE, HpO), HpOp)       # (Nb, H2, WL)

        # pad every image stripe to RP rows (zero rows give the H-direction
        # 'same' padding for conv2..5; W padding is inside the banded weights)
        x1 = jnp.concatenate(
            [jnp.zeros((Nb, 1, WL), f32), pooled,
             jnp.zeros((Nb, RP - 1 - H2, WL), f32)], axis=1).reshape(R, WL)

        # interior-row mask: pad rows are forced back to zero after each layer
        ridx = jax.lax.broadcasted_iota(jnp.int32, (R, WL), 0) % RP
        interior = jnp.logical_and(ridx >= 1, ridx <= H2)

        zrow = jnp.zeros((1, WL), f32)

        # -------- conv2..conv5: one K=3*WL banded matmul per layer ----------
        def conv3x3(x_full, li, resid):
            xm1 = jnp.concatenate([zrow, x_full[:R - 1, :]], axis=0)  # x[r-1]
            xp1 = jnp.concatenate([x_full[1:, :], zrow], axis=0)      # x[r+1]
            xcat = jnp.concatenate([xm1, x_full, xp1],
                                   axis=-1).astype(jnp.bfloat16)      # (R,3WL)
            y = jnp.dot(xcat, b_ref[li - 2], preferred_element_type=f32)
            y = y * sc_ref[li - 1:li, :] + sh_ref[li - 1:li, :]
            if resid is not None:
                y = y + resid
            y = jnp.maximum(y, 0.0)
            return jnp.where(interior, y, 0.0)

        y2 = conv3x3(x1, 2, None)
        y3 = conv3x3(y2, 3, x1)          # + pooled residual, then ReLU
        y4 = conv3x3(y3, 4, None)
        y5 = conv3x3(y4, 5, y3)          # + conv3 output residual, then ReLU

        # single lane-dense, unmasked store (wrapper drops the pad rows)
        out_ref[...] = y5.reshape(Nb, RP, WL)

    return kernel


# ----------------------------------------------------------------------------
# Host-side weight preparation
# ----------------------------------------------------------------------------
def _band_matrices(wl, W2):
    """Embed a 3x3 stride-1 pad-1 conv along W into banded matrices.

    Returns B of shape (3, W2*Cin, W2*Cout) with
      B[kh, win*Cin + ci, wo*Cout + co] = wl[kh, win - wo + 1, ci, co]
    (zero outside the band): kernel row kh multiplies the activation row at
    vertical offset kh - 1 from the output row.
    """
    KH, KW, Cin, Co = wl.shape
    z = jnp.zeros((Cin, Co), wl.dtype)
    mats = []
    for kh in range(KH):
        cols = []
        for wo in range(W2):
            blocks = []
            for win in range(W2):
                kw = win - wo + 1
                blocks.append(wl[kh, kw] if 0 <= kw < KW else z)
            cols.append(jnp.concatenate(blocks, axis=0))        # (W2*Cin, Co)
        mats.append(jnp.concatenate(cols, axis=1))              # (W2*Cin, W2*Co)
    return jnp.stack(mats)                                      # (3, ..., ...)


def _pick_block_images(N, block_images):
    divs = [d for d in range(1, N + 1) if N % d == 0 and d <= block_images]
    pref = [d for d in divs if N // d >= 2]      # keep grid >= 2 (v7x megacore)
    return max(pref) if pref else max(divs)


# ----------------------------------------------------------------------------
# Forward pass (wrapper around one pallas_call)
# ----------------------------------------------------------------------------
def fenet_forward(x5, params, block_images=8):
    B, T, Cin, H, W = x5.shape
    N = B * T

    w1 = params["w1"]
    KH1 = w1.shape[0]
    Cout = w1.shape[-1]
    Ho1 = (H + 6 - KH1) // 2 + 1          # conv1 output (stride 2, pad 3)
    Wo1 = (W + 6 - KH1) // 2 + 1
    H2, W2 = Ho1 // 2, Wo1 // 2           # after 3x3/s2/p1 max-pool
    assert Ho1 == 2 * H2 and Wo1 == 2 * W2 and H2 + 2 <= RP
    WL = W2 * Cout
    K1 = KH1 * KH1 * Cin

    Nb = _pick_block_images(N, block_images)

    # conv1 im2col (stride-2, Cin=3) built once host-side.  Rows are ordered
    # (n, h-parity, h//2, w-parity, w//2) so the in-kernel max-pool reduces to
    # maxima over contiguous slices and lands directly in (w, c) lane order.
    x = x5.reshape(N, Cin, H, W).transpose(0, 2, 3, 1)          # NHWC
    xp = jnp.pad(x, ((0, 0), (3, 3), (3, 3), (0, 0)))
    patches = [xp[:, kh:kh + 2 * Ho1:2, kw:kw + 2 * Wo1:2, :]
               for kh in range(KH1) for kw in range(KH1)]
    pat = jnp.concatenate(patches, axis=-1)                     # (N, Ho1, Wo1, K1)
    pat = pat.reshape(N, H2, 2, W2, 2, K1).transpose(0, 2, 1, 4, 3, 5)
    pat = pat.reshape(N * Ho1 * Wo1, K1).astype(jnp.bfloat16)

    w1m = w1.reshape(K1, Cout).astype(jnp.bfloat16)
    # banded conv weights, the 3 kernel rows concatenated along K (K = 3*WL)
    bmats = jnp.stack([_band_matrices(params["w%d" % i], W2).reshape(3 * WL, WL)
                       for i in range(2, 6)]).astype(jnp.bfloat16)
    scf = jnp.tile(params["scale"], (1, W2))                    # (5, WL)
    shf = jnp.tile(params["shift"], (1, W2))

    kernel = _make_fenet_kernel(Nb, Ho1, Wo1, H2, W2, Cout)
    out = pl.pallas_call(
        kernel,
        out_shape=jax.ShapeDtypeStruct((N, RP, WL), jnp.float32),
        grid=(N // Nb,),
        in_specs=[
            pl.BlockSpec((Nb * Ho1 * Wo1, K1), lambda n: (n, 0)),
            pl.BlockSpec(w1m.shape, lambda n: (0, 0)),
            pl.BlockSpec(bmats.shape, lambda n: (0, 0, 0)),
            pl.BlockSpec(scf.shape, lambda n: (0, 0)),
            pl.BlockSpec(shf.shape, lambda n: (0, 0)),
        ],
        out_specs=pl.BlockSpec((Nb, RP, WL), lambda n: (n, 0, 0)),
        compiler_params=pltpu.CompilerParams(
            dimension_semantics=("parallel",)),
    )(pat, w1m, bmats, scf, shf)

    out = out[:, 1:1 + H2, :]                                   # drop pad rows
    out = out.reshape(N, H2, W2, Cout).transpose(0, 3, 1, 2)    # NCHW
    return out.reshape(B, T, Cout, H2, W2)


# ----------------------------------------------------------------------------
# Deterministic synthetic parameters and pure-JAX reference
# ----------------------------------------------------------------------------
def init_params(key):
    def conv_layer(k, kh, kw, cin, cout):
        kw_, kb, kg, kbeta = jax.random.split(k, 4)
        w = jax.random.normal(kw_, (kh, kw, cin, cout), jnp.float32)
        w = w / np.sqrt(kh * kw * cin)
        b = 0.1 * jax.random.normal(kb, (cout,), jnp.float32)
        gamma = 1.0 + 0.1 * jax.random.normal(kg, (cout,), jnp.float32)
        beta = 0.1 * jax.random.normal(kbeta, (cout,), jnp.float32)
        mean = jnp.zeros((cout,), jnp.float32)
        var = jnp.ones((cout,), jnp.float32)
        eps = 1e-5
        scale = gamma / jnp.sqrt(var + eps)
        shift = beta - mean * scale + b * scale
        return w, scale, shift

    ks = jax.random.split(key, 5)
    w1, s1, b1 = conv_layer(ks[0], 7, 7, 3, 64)
    w2, s2, b2 = conv_layer(ks[1], 3, 3, 64, 64)
    w3, s3, b3 = conv_layer(ks[2], 3, 3, 64, 64)
    w4, s4, b4 = conv_layer(ks[3], 3, 3, 64, 64)
    w5, s5, b5 = conv_layer(ks[4], 3, 3, 64, 64)
    return {
        "w1": w1, "w2": w2, "w3": w3, "w4": w4, "w5": w5,
        "scale": jnp.stack([s1, s2, s3, s4, s5]),
        "shift": jnp.stack([b1, b2, b3, b4, b5]),
    }


def ref_forward(x5, params):
    """Pure-JAX reference (XLA convs), same folded-BN semantics.

    Conv inputs/weights are quantised to bf16 exactly like the kernel's MXU
    operands (accumulation, BN affine, residual and ReLU stay f32).
    """
    B, T, Cin, H, W = x5.shape
    x = x5.reshape(B * T, Cin, H, W).transpose(0, 2, 3, 1)
    dn = ("NHWC", "HWIO", "NHWC")

    def conv(x, w, scale, shift, stride, pad):
        y = jax.lax.conv_general_dilated(
            x.astype(jnp.bfloat16), w.astype(jnp.bfloat16),
            (stride, stride), [(pad, pad), (pad, pad)],
            dimension_numbers=dn, preferred_element_type=jnp.float32)
        return y * scale + shift

    p = params
    sc, sh = p["scale"], p["shift"]
    x = jnp.maximum(conv(x, p["w1"], sc[0], sh[0], 2, 3), 0.0)
    x = jax.lax.reduce_window(x, -jnp.inf, jax.lax.max,
                              (1, 3, 3, 1), (1, 2, 2, 1),
                              [(0, 0), (1, 1), (1, 1), (0, 0)])
    x1 = x
    x = jnp.maximum(conv(x, p["w2"], sc[1], sh[1], 1, 1), 0.0)
    x = jnp.maximum(conv(x, p["w3"], sc[2], sh[2], 1, 1) + x1, 0.0)
    x2 = x
    x = jnp.maximum(conv(x, p["w4"], sc[3], sh[3], 1, 1), 0.0)
    x = jnp.maximum(conv(x, p["w5"], sc[4], sh[4], 1, 1) + x2, 0.0)
    _, Ho, Wo, Co = x.shape
    return x.transpose(0, 3, 1, 2).reshape(B, T, Co, Ho, Wo)


# ----------------------------------------------------------------------------
if __name__ == "__main__":
    B, T, C, H, W = 2, 2, 3, 16, 16
    key = jax.random.PRNGKey(0)
    kx, kp = jax.random.split(key)
    x = jax.random.normal(kx, (B, T, C, H, W), jnp.float32)
    params = init_params(kp)

    out = jax.jit(fenet_forward)(x, params)
    out = jax.block_until_ready(out)

    ref = ref_forward(x, params)
    np.testing.assert_allclose(np.asarray(out), np.asarray(ref),
                               rtol=1e-2, atol=1e-2)
    assert out.shape == (B, T, 64, 4, 4)
    print("KERNEL_OK")
</pallas_src>

<mosaic_0001>
module attributes {stable_mosaic.version = 11 : i64} {
  func.func @kernel(%arg0: i32, %arg1: memref<128x147xbf16, #tpu.memory_space<vmem>>, %arg2: memref<147x64xbf16, #tpu.memory_space<vmem>>, %arg3: memref<4x768x256xbf16, #tpu.memory_space<vmem>>, %arg4: memref<5x256xf32, #tpu.memory_space<vmem>>, %arg5: memref<5x256xf32, #tpu.memory_space<vmem>>, %arg6: memref<2x8x256xf32, #tpu.memory_space<vmem>>) attributes {dimension_semantics = [#tpu.dimension_semantics<parallel>], iteration_bounds = array<i64: 2>, scalar_prefetch = 0 : i64, scratch_operands = 0 : i64, tpu.core_type = #tpu.core_type<tc>, window_params = [{transform_indices = @transform_0, window_bounds = array<i64: 128, 147>}, {pipeline_mode = #tpu.pipeline_mode<synchronous>, transform_indices = @transform_1, window_bounds = array<i64: 147, 64>}, {pipeline_mode = #tpu.pipeline_mode<synchronous>, transform_indices = @transform_2, window_bounds = array<i64: 4, 768, 256>}, {pipeline_mode = #tpu.pipeline_mode<synchronous>, transform_indices = @transform_3, window_bounds = array<i64: 5, 256>}, {pipeline_mode = #tpu.pipeline_mode<synchronous>, transform_indices = @transform_4, window_bounds = array<i64: 5, 256>}, {transform_indices = @transform_5, window_bounds = array<i64: 2, 8, 256>}]} {
    %c0 = arith.constant 0 : index
    %c0_0 = arith.constant 0 : index
    %0 = vector.load %arg1[%c0, %c0_0] : memref<128x147xbf16, #tpu.memory_space<vmem>>, vector<128x147xbf16>
    %c0_1 = arith.constant 0 : index
    %c0_2 = arith.constant 0 : index
    %1 = vector.load %arg2[%c0_1, %c0_2] : memref<147x64xbf16, #tpu.memory_space<vmem>>, vector<147x64xbf16>
    %cst = arith.constant dense<0.000000e+00> : vector<128x64xf32>
    %2 = tpu.matmul %0, %1, %cst {dimension_numbers = #tpu.dot_dimension_numbers<[1], [0], [0], [1], [0, 0, 1, 1], [], []>} : vector<128x147xbf16>, vector<147x64xbf16>, vector<128x64xf32> -> vector<128x64xf32>
    %c0_3 = arith.constant 0 : index
    %c0_4 = arith.constant 0 : index
    %3 = vector.load %arg4[%c0_3, %c0_4] : memref<5x256xf32, #tpu.memory_space<vmem>>, vector<1x64xf32>
    %4 = vector.broadcast %3 : vector<1x64xf32> to vector<128x64xf32>
    %5 = arith.mulf %2, %4 : vector<128x64xf32>
    %c0_5 = arith.constant 0 : index
    %c0_6 = arith.constant 0 : index
    %6 = vector.load %arg5[%c0_5, %c0_6] : memref<5x256xf32, #tpu.memory_space<vmem>>, vector<1x64xf32>
    %7 = vector.broadcast %6 : vector<1x64xf32> to vector<128x64xf32>
    %8 = arith.addf %5, %7 : vector<128x64xf32>
    %cst_7 = arith.constant 0.000000e+00 : f32
    %9 = vector.broadcast %cst_7 : f32 to vector<128x64xf32>
    %10 = arith.maximumf %8, %9 : vector<128x64xf32>
    %11 = vector.shape_cast %10 : vector<128x64xf32> to vector<16x8x64xf32>
    %12 = vector.extract_strided_slice %11 {offsets = [0, 0, 0], sizes = [16, 1, 64], strides = [1, 1, 1]} : vector<16x8x64xf32> to vector<16x1x64xf32>
    %13 = vector.shape_cast %12 : vector<16x1x64xf32> to vector<16x64xf32>
    %14 = vector.extract_strided_slice %11 {offsets = [0, 4, 0], sizes = [16, 1, 64], strides = [1, 1, 1]} : vector<16x8x64xf32> to vector<16x1x64xf32>
    %15 = vector.shape_cast %14 : vector<16x1x64xf32> to vector<16x64xf32>
    %16 = arith.maximumf %13, %15 : vector<16x64xf32>
    %17 = vector.extract_strided_slice %11 {offsets = [0, 1, 0], sizes = [16, 1, 64], strides = [1, 1, 1]} : vector<16x8x64xf32> to vector<16x1x64xf32>
    %18 = vector.shape_cast %17 : vector<16x1x64xf32> to vector<16x64xf32>
    %19 = vector.extract_strided_slice %11 {offsets = [0, 5, 0], sizes = [16, 1, 64], strides = [1, 1, 1]} : vector<16x8x64xf32> to vector<16x1x64xf32>
    %20 = vector.shape_cast %19 : vector<16x1x64xf32> to vector<16x64xf32>
    %21 = arith.maximumf %18, %20 : vector<16x64xf32>
    %22 = vector.extract_strided_slice %11 {offsets = [0, 4, 0], sizes = [16, 1, 64], strides = [1, 1, 1]} : vector<16x8x64xf32> to vector<16x1x64xf32>
    %23 = vector.shape_cast %22 : vector<16x1x64xf32> to vector<16x64xf32>
    %24 = arith.maximumf %21, %23 : vector<16x64xf32>
    %25 = vector.extract_strided_slice %11 {offsets = [0, 2, 0], sizes = [16, 1, 64], strides = [1, 1, 1]} : vector<16x8x64xf32> to vector<16x1x64xf32>
    %26 = vector.shape_cast %25 : vector<16x1x64xf32> to vector<16x64xf32>
    %27 = vector.extract_strided_slice %11 {offsets = [0, 6, 0], sizes = [16, 1, 64], strides = [1, 1, 1]} : vector<16x8x64xf32> to vector<16x1x64xf32>
    %28 = vector.shape_cast %27 : vector<16x1x64xf32> to vector<16x64xf32>
    %29 = arith.maximumf %26, %28 : vector<16x64xf32>
    %30 = vector.extract_strided_slice %11 {offsets = [0, 5, 0], sizes = [16, 1, 64], strides = [1, 1, 1]} : vector<16x8x64xf32> to vector<16x1x64xf32>
    %31 = vector.shape_cast %30 : vector<16x1x64xf32> to vector<16x64xf32>
    %32 = arith.maximumf %29, %31 : vector<16x64xf32>
    %33 = vector.extract_strided_slice %11 {offsets = [0, 3, 0], sizes = [16, 1, 64], strides = [1, 1, 1]} : vector<16x8x64xf32> to vector<16x1x64xf32>
    %34 = vector.shape_cast %33 : vector<16x1x64xf32> to vector<16x64xf32>
    %35 = vector.extract_strided_slice %11 {offsets = [0, 7, 0], sizes = [16, 1, 64], strides = [1, 1, 1]} : vector<16x8x64xf32> to vector<16x1x64xf32>
    %36 = vector.shape_cast %35 : vector<16x1x64xf32> to vector<16x64xf32>
    %37 = arith.maximumf %34, %36 : vector<16x64xf32>
    %38 = vector.extract_strided_slice %11 {offsets = [0, 6, 0], sizes = [16, 1, 64], strides = [1, 1, 1]} : vector<16x8x64xf32> to vector<16x1x64xf32>
    %39 = vector.shape_cast %38 : vector<16x1x64xf32> to vector<16x64xf32>
    %40 = arith.maximumf %37, %39 : vector<16x64xf32>
    %41 = tpu.concatenate %16, %24, %32, %40 in 1 : vector<16x64xf32>, vector<16x64xf32>, vector<16x64xf32>, vector<16x64xf32> -> vector<16x256xf32>
    %42 = vector.shape_cast %41 : vector<16x256xf32> to vector<2x8x256xf32>
    %43 = vector.extract_strided_slice %42 {offsets = [0, 0, 0], sizes = [2, 4, 256], strides = [1, 1, 1]} : vector<2x8x256xf32> to vector<2x4x256xf32>
    %44 = vector.extract_strided_slice %42 {offsets = [0, 4, 0], sizes = [2, 4, 256], strides = [1, 1, 1]} : vector<2x8x256xf32> to vector<2x4x256xf32>
    %cst_8 = arith.constant 0.000000e+00 : f32
    %45 = vector.broadcast %cst_8 : f32 to vector<2x1x256xf32>
    %46 = vector.extract_strided_slice %44 {offsets = [0, 0, 0], sizes = [2, 3, 256], strides = [1, 1, 1]} : vector<2x4x256xf32> to vector<2x3x256xf32>
    %47 = tpu.concatenate %45, %46 in 1 : vector<2x1x256xf32>, vector<2x3x256xf32> -> vector<2x4x256xf32>
    %48 = arith.maximumf %43, %44 : vector<2x4x256xf32>
    %49 = arith.maximumf %48, %47 : vector<2x4x256xf32>
    %cst_9 = arith.constant 0.000000e+00 : f32
    %50 = vector.broadcast %cst_9 : f32 to vector<2x1x256xf32>
    %cst_10 = arith.constant 0.000000e+00 : f32
    %51 = vector.broadcast %cst_10 : f32 to vector<2x3x256xf32>
    %52 = tpu.concatenate %50, %49, %51 in 1 : vector<2x1x256xf32>, vector<2x4x256xf32>, vector<2x3x256xf32> -> vector<2x8x256xf32>
    %53 = vector.shape_cast %52 : vector<2x8x256xf32> to vector<16x256xf32>
    %54 = tpu.iota {dimensions = array<i32: 0>} : vector<16x256xi32>
    %c8_i32 = arith.constant 8 : i32
    %c0_i32 = arith.constant 0 : i32
    %55 = arith.cmpi eq, %c8_i32, %c0_i32 : i32
    %c1_i32 = arith.constant 1 : i32
    %56 = arith.select %55, %c1_i32, %c8_i32 : i32
    %57 = vector.broadcast %56 : i32 to vector<16x256xi32>
    %58 = arith.remsi %54, %57 : vector<16x256xi32>
    %c0_i32_11 = arith.constant 0 : i32
    %59 = vector.broadcast %c0_i32_11 : i32 to vector<16x256xi32>
    %60 = arith.cmpi ne, %58, %59 : vector<16x256xi32>
    %c0_i32_12 = arith.constant 0 : i32
    %61 = vector.broadcast %c0_i32_12 : i32 to vector<16x256xi32>
    %62 = arith.cmpi slt, %58, %61 : vector<16x256xi32>
    %c0_i32_13 = arith.constant 0 : i32
    %63 = arith.cmpi slt, %56, %c0_i32_13 : i32
    %64 = vector.broadcast %63 : i1 to vector<16x256xi1>
    %65 = vector.broadcast %64 : vector<16x256xi1> to vector<16x256xi1>
    %66 = arith.xori %62, %65 : vector<16x256xi1>
    %67 = arith.andi %66, %60 : vector<16x256xi1>
    %68 = vector.broadcast %56 : i32 to vector<16x256xi32>
    %69 = arith.addi %58, %68 : vector<16x256xi32>
    %70 = arith.select %67, %69, %58 : vector<16x256xi1>, vector<16x256xi32>
    %c1_i32_14 = arith.constant 1 : i32
    %71 = vector.broadcast %c1_i32_14 : i32 to vector<16x256xi32>
    %72 = arith.cmpi sge, %70, %71 : vector<16x256xi32>
    %c4_i32 = arith.constant 4 : i32
    %73 = vector.broadcast %c4_i32 : i32 to vector<16x256xi32>
    %74 = arith.cmpi sle, %70, %73 : vector<16x256xi32>
    %75 = arith.andi %72, %74 : vector<16x256xi1>
    %cst_15 = arith.constant 0.000000e+00 : f32
    %76 = vector.broadcast %cst_15 : f32 to vector<1x256xf32>
    %77 = vector.extract_strided_slice %53 {offsets = [0, 0], sizes = [15, 256], strides = [1, 1]} : vector<16x256xf32> to vector<15x256xf32>
    %78 = tpu.concatenate %76, %77 in 0 : vector<1x256xf32>, vector<15x256xf32> -> vector<16x256xf32>
    %79 = vector.extract_strided_slice %53 {offsets = [1, 0], sizes = [15, 256], strides = [1, 1]} : vector<16x256xf32> to vector<15x256xf32>
    %80 = tpu.concatenate %79, %76 in 0 : vector<15x256xf32>, vector<1x256xf32> -> vector<16x256xf32>
    %81 = tpu.concatenate %78, %53, %80 in 1 : vector<16x256xf32>, vector<16x256xf32>, vector<16x256xf32> -> vector<16x768xf32>
    %82 = arith.truncf %81 : vector<16x768xf32> to vector<16x768xbf16>
    %c0_16 = arith.constant 0 : index
    %c0_17 = arith.constant 0 : index
    %c0_18 = arith.constant 0 : index
    %83 = vector.load %arg3[%c0_16, %c0_17, %c0_18] : memref<4x768x256xbf16, #tpu.memory_space<vmem>>, vector<1x768x256xbf16>
    %84 = vector.shape_cast %83 : vector<1x768x256xbf16> to vector<768x256xbf16>
    %cst_19 = arith.constant dense<0.000000e+00> : vector<16x256xf32>
    %85 = tpu.matmul %82, %84, %cst_19 {dimension_numbers = #tpu.dot_dimension_numbers<[1], [0], [0], [1], [0, 0, 1, 1], [], []>} : vector<16x768xbf16>, vector<768x256xbf16>, vector<16x256xf32> -> vector<16x256xf32>
    %c1 = arith.constant 1 : index
    %c0_20 = arith.constant 0 : index
    %86 = vector.load %arg4[%c1, %c0_20] : memref<5x256xf32, #tpu.memory_space<vmem>>, vector<1x256xf32>
    %87 = vector.broadcast %86 : vector<1x256xf32> to vector<16x256xf32>
    %88 = arith.mulf %85, %87 : vector<16x256xf32>
    %c1_21 = arith.constant 1 : index
    %c0_22 = arith.constant 0 : index
    %89 = vector.load %arg5[%c1_21, %c0_22] : memref<5x256xf32, #tpu.memory_space<vmem>>, vector<1x256xf32>
    %90 = vector.broadcast %89 : vector<1x256xf32> to vector<16x256xf32>
    %91 = arith.addf %88, %90 : vector<16x256xf32>
    %cst_23 = arith.constant 0.000000e+00 : f32
    %92 = vector.broadcast %cst_23 : f32 to vector<16x256xf32>
    %93 = arith.maximumf %91, %92 : vector<16x256xf32>
    %cst_24 = arith.constant 0.000000e+00 : f32
    %94 = vector.broadcast %cst_24 : f32 to vector<16x256xf32>
    %95 = arith.select %75, %93, %94 : vector<16x256xi1>, vector<16x256xf32>
    %96 = vector.extract_strided_slice %95 {offsets = [0, 0], sizes = [15, 256], strides = [1, 1]} : vector<16x256xf32> to vector<15x256xf32>
    %97 = tpu.concatenate %76, %96 in 0 : vector<1x256xf32>, vector<15x256xf32> -> vector<16x256xf32>
    %98 = vector.extract_strided_slice %95 {offsets = [1, 0], sizes = [15, 256], strides = [1, 1]} : vector<16x256xf32> to vector<15x256xf32>
    %99 = tpu.concatenate %98, %76 in 0 : vector<15x256xf32>, vector<1x256xf32> -> vector<16x256xf32>
    %100 = tpu.concatenate %97, %95, %99 in 1 : vector<16x256xf32>, vector<16x256xf32>, vector<16x256xf32> -> vector<16x768xf32>
    %101 = arith.truncf %100 : vector<16x768xf32> to vector<16x768xbf16>
    %c1_25 = arith.constant 1 : index
    %c0_26 = arith.constant 0 : index
    %c0_27 = arith.constant 0 : index
    %102 = vector.load %arg3[%c1_25, %c0_26, %c0_27] : memref<4x768x256xbf16, #tpu.memory_space<vmem>>, vector<1x768x256xbf16>
    %103 = vector.shape_cast %102 : vector<1x768x256xbf16> to vector<768x256xbf16>
    %cst_28 = arith.constant dense<0.000000e+00> : vector<16x256xf32>
    %104 = tpu.matmul %101, %103, %cst_28 {dimension_numbers = #tpu.dot_dimension_numbers<[1], [0], [0], [1], [0, 0, 1, 1], [], []>} : vector<16x768xbf16>, vector<768x256xbf16>, vector<16x256xf32> -> vector<16x256xf32>
    %c2 = arith.constant 2 : index
    %c0_29 = arith.constant 0 : index
    %105 = vector.load %arg4[%c2, %c0_29] : memref<5x256xf32, #tpu.memory_space<vmem>>, vector<1x256xf32>
    %106 = vector.broadcast %105 : vector<1x256xf32> to vector<16x256xf32>
    %107 = arith.mulf %104, %106 : vector<16x256xf32>
    %c2_30 = arith.constant 2 : index
    %c0_31 = arith.constant 0 : index
    %108 = vector.load %arg5[%c2_30, %c0_31] : memref<5x256xf32, #tpu.memory_space<vmem>>, vector<1x256xf32>
    %109 = vector.broadcast %108 : vector<1x256xf32> to vector<16x256xf32>
    %110 = arith.addf %107, %109 : vector<16x256xf32>
    %111 = arith.addf %110, %53 : vector<16x256xf32>
    %cst_32 = arith.constant 0.000000e+00 : f32
    %112 = vector.broadcast %cst_32 : f32 to vector<16x256xf32>
    %113 = arith.maximumf %111, %112 : vector<16x256xf32>
    %cst_33 = arith.constant 0.000000e+00 : f32
    %114 = vector.broadcast %cst_33 : f32 to vector<16x256xf32>
    %115 = arith.select %75, %113, %114 : vector<16x256xi1>, vector<16x256xf32>
    %116 = vector.extract_strided_slice %115 {offsets = [0, 0], sizes = [15, 256], strides = [1, 1]} : vector<16x256xf32> to vector<15x256xf32>
    %117 = tpu.concatenate %76, %116 in 0 : vector<1x256xf32>, vector<15x256xf32> -> vector<16x256xf32>
    %118 = vector.extract_strided_slice %115 {offsets = [1, 0], sizes = [15, 256], strides = [1, 1]} : vector<16x256xf32> to vector<15x256xf32>
    %119 = tpu.concatenate %118, %76 in 0 : vector<15x256xf32>, vector<1x256xf32> -> vector<16x256xf32>
    %120 = tpu.concatenate %117, %115, %119 in 1 : vector<16x256xf32>, vector<16x256xf32>, vector<16x256xf32> -> vector<16x768xf32>
    %121 = arith.truncf %120 : vector<16x768xf32> to vector<16x768xbf16>
    %c2_34 = arith.constant 2 : index
    %c0_35 = arith.constant 0 : index
    %c0_36 = arith.constant 0 : index
    %122 = vector.load %arg3[%c2_34, %c0_35, %c0_36] : memref<4x768x256xbf16, #tpu.memory_space<vmem>>, vector<1x768x256xbf16>
    %123 = vector.shape_cast %122 : vector<1x768x256xbf16> to vector<768x256xbf16>
    %cst_37 = arith.constant dense<0.000000e+00> : vector<16x256xf32>
    %124 = tpu.matmul %121, %123, %cst_37 {dimension_numbers = #tpu.dot_dimension_numbers<[1], [0], [0], [1], [0, 0, 1, 1], [], []>} : vector<16x768xbf16>, vector<768x256xbf16>, vector<16x256xf32> -> vector<16x256xf32>
    %c3 = arith.constant 3 : index
    %c0_38 = arith.constant 0 : index
    %125 = vector.load %arg4[%c3, %c0_38] : memref<5x256xf32, #tpu.memory_space<vmem>>, vector<1x256xf32>
    %126 = vector.broadcast %125 : vector<1x256xf32> to vector<16x256xf32>
    %127 = arith.mulf %124, %126 : vector<16x256xf32>
    %c3_39 = arith.constant 3 : index
    %c0_40 = arith.constant 0 : index
    %128 = vector.load %arg5[%c3_39, %c0_40] : memref<5x256xf32, #tpu.memory_space<vmem>>, vector<1x256xf32>
    %129 = vector.broadcast %128 : vector<1x256xf32> to vector<16x256xf32>
    %130 = arith.addf %127, %129 : vector<16x256xf32>
    %cst_41 = arith.constant 0.000000e+00 : f32
    %131 = vector.broadcast %cst_41 : f32 to vector<16x256xf32>
    %132 = arith.maximumf %130, %131 : vector<16x256xf32>
    %cst_42 = arith.constant 0.000000e+00 : f32
    %133 = vector.broadcast %cst_42 : f32 to vector<16x256xf32>
    %134 = arith.select %75, %132, %133 : vector<16x256xi1>, vector<16x256xf32>
    %135 = vector.extract_strided_slice %134 {offsets = [0, 0], sizes = [15, 256], strides = [1, 1]} : vector<16x256xf32> to vector<15x256xf32>
    %136 = tpu.concatenate %76, %135 in 0 : vector<1x256xf32>, vector<15x256xf32> -> vector<16x256xf32>
    %137 = vector.extract_strided_slice %134 {offsets = [1, 0], sizes = [15, 256], strides = [1, 1]} : vector<16x256xf32> to vector<15x256xf32>
    %138 = tpu.concatenate %137, %76 in 0 : vector<15x256xf32>, vector<1x256xf32> -> vector<16x256xf32>
    %139 = tpu.concatenate %136, %134, %138 in 1 : vector<16x256xf32>, vector<16x256xf32>, vector<16x256xf32> -> vector<16x768xf32>
    %140 = arith.truncf %139 : vector<16x768xf32> to vector<16x768xbf16>
    %c3_43 = arith.constant 3 : index
    %c0_44 = arith.constant 0 : index
    %c0_45 = arith.constant 0 : index
    %141 = vector.load %arg3[%c3_43, %c0_44, %c0_45] : memref<4x768x256xbf16, #tpu.memory_space<vmem>>, vector<1x768x256xbf16>
    %142 = vector.shape_cast %141 : vector<1x768x256xbf16> to vector<768x256xbf16>
    %cst_46 = arith.constant dense<0.000000e+00> : vector<16x256xf32>
    %143 = tpu.matmul %140, %142, %cst_46 {dimension_numbers = #tpu.dot_dimension_numbers<[1], [0], [0], [1], [0, 0, 1, 1], [], []>} : vector<16x768xbf16>, vector<768x256xbf16>, vector<16x256xf32> -> vector<16x256xf32>
    %c4 = arith.constant 4 : index
    %c0_47 = arith.constant 0 : index
    %144 = vector.load %arg4[%c4, %c0_47] : memref<5x256xf32, #tpu.memory_space<vmem>>, vector<1x256xf32>
    %145 = vector.broadcast %144 : vector<1x256xf32> to vector<16x256xf32>
    %146 = arith.mulf %143, %145 : vector<16x256xf32>
    %c4_48 = arith.constant 4 : index
    %c0_49 = arith.constant 0 : index
    %147 = vector.load %arg5[%c4_48, %c0_49] : memref<5x256xf32, #tpu.memory_space<vmem>>, vector<1x256xf32>
    %148 = vector.broadcast %147 : vector<1x256xf32> to vector<16x256xf32>
    %149 = arith.addf %146, %148 : vector<16x256xf32>
    %150 = arith.addf %149, %115 : vector<16x256xf32>
    %cst_50 = arith.constant 0.000000e+00 : f32
    %151 = vector.broadcast %cst_50 : f32 to vector<16x256xf32>
    %152 = arith.maximumf %150, %151 : vector<16x256xf32>
    %cst_51 = arith.constant 0.000000e+00 : f32
    %153 = vector.broadcast %cst_51 : f32 to vector<16x256xf32>
    %154 = arith.select %75, %152, %153 : vector<16x256xi1>, vector<16x256xf32>
    %155 = vector.shape_cast %154 : vector<16x256xf32> to vector<2x8x256xf32>
    %c0_52 = arith.constant 0 : index
    %c0_53 = arith.constant 0 : index
    %c0_54 = arith.constant 0 : index
    %156 = vector.load %arg6[%c0_52, %c0_53, %c0_54] : memref<2x8x256xf32, #tpu.memory_space<vmem>>, vector<2x8x256xf32>
    tpu.vector_store %arg6[%c0_52, %c0_53, %c0_54], %155 {strides = array<i32>} : memref<2x8x256xf32, #tpu.memory_space<vmem>>, vector<2x8x256xf32>,
    return
  }
  func.func @transform_0(%arg0: i32) -> (i32, i32) {
    %c0_i32 = arith.constant 0 : i32
    %c0_i32_0 = arith.constant 0 : i32
    return %arg0, %c0_i32 : i32, i32
  }
  func.func @transform_1(%arg0: i32) -> (i32, i32) {
    %c0_i32 = arith.constant 0 : i32
    %c0_i32_0 = arith.constant 0 : i32
    %c0_i32_1 = arith.constant 0 : i32
    return %c0_i32, %c0_i32_0 : i32, i32
  }
  func.func @transform_2(%arg0: i32) -> (i32, i32, i32) {
    %c0_i32 = arith.constant 0 : i32
    %c0_i32_0 = arith.constant 0 : i32
    %c0_i32_1 = arith.constant 0 : i32
    %c0_i32_2 = arith.constant 0 : i32
    return %c0_i32, %c0_i32_0, %c0_i32_1 : i32, i32, i32
  }
  func.func @transform_3(%arg0: i32) -> (i32, i32) {
    %c0_i32 = arith.constant 0 : i32
    %c0_i32_0 = arith.constant 0 : i32
    %c0_i32_1 = arith.constant 0 : i32
    return %c0_i32, %c0_i32_0 : i32, i32
  }
  func.func @transform_4(%arg0: i32) -> (i32, i32) {
    %c0_i32 = arith.constant 0 : i32
    %c0_i32_0 = arith.constant 0 : i32
    %c0_i32_1 = arith.constant 0 : i32
    return %c0_i32, %c0_i32_0 : i32, i32
  }
  func.func @transform_5(%arg0: i32) -> (i32, i32, i32) {
    %c0_i32 = arith.constant 0 : i32
    %c0_i32_0 = arith.constant 0 : i32
    %c0_i32_1 = arith.constant 0 : i32
    return %arg0, %c0_i32, %c0_i32_0 : i32, i32, i32
  }
}

</mosaic_0001>

<llo_original>
// kernel: tile.14
$region0: #{tile.14}
  %s0 = inlined_call_operand.vmem [shape: f32[5,4,64], index: 0, kind: input, shape index: {}]
  %s1 = inlined_call_operand.vmem [shape: f32[5,256], index: 1, kind: output, shape index: {}]
  $region1: #{tile.14} parent=0
    #allocation0 [shape = 'u8[20480]{0}', space=vmem, size = 0x5000, scoped, tag = 'scoped mem for input reshape']
    %s3 = sshllo.u32 0, 4
    %s4 = smul.addr 4, 4
    %s5 = scalar_lea.vmem %s0, %s4
    %v6 = vld [vmem:[%s5] sm:%s3]
    %s7 = scalar_lea.vmem [#allocation0], 32
    %8 = vst [vmem:[%s7] sm:%s3] %v6
    %s9 = smul.addr 4, 3
    %s10 = scalar_lea.vmem %s0, %s9
    %v11 = vld [vmem:[%s10] sm:%s3]
    %s12 = scalar_lea.vmem [#allocation0], 24
    %13 = vst [vmem:[%s12] sm:%s3] %v11
    %s14 = smul.addr 4, 2
    %s15 = scalar_lea.vmem %s0, %s14
    %v16 = vld [vmem:[%s15] sm:%s3]
    %s17 = scalar_lea.vmem [#allocation0], 16
    %18 = vst [vmem:[%s17] sm:%s3] %v16
    %s19 = scalar_lea.vmem %s0, 4
    %v20 = vld [vmem:[%s19] sm:%s3]
    %s21 = scalar_lea.vmem [#allocation0], 8
    %22 = vst [vmem:[%s21] sm:%s3] %v20
    %v23 = vld [vmem:[%s0] sm:%s3]
    %24 = vst [vmem:[#allocation0] sm:%s3] %v23
    %s25 = smov 3
    %v26 = vld [vmem:[#allocation0] ss:$2 sm:%s25]
    %vm27 = vcmask 523264
    %28 = vst.msk [vmem:[%s1] ss:$8 sm:$0x3] %vm27, %v26
    %s29 = scalar_lea.vmem [#allocation0], 8
    %s30 = smov 3
    %v31 = vld [vmem:[%s29] ss:$2 sm:%s30]
    %vm32 = vcmask 523264
    %s33 = scalar_lea.vmem %s1, 1
    %34 = vst.msk [vmem:[%s33] ss:$8 sm:$0x3] %vm32, %v31
    %s35 = scalar_lea.vmem [#allocation0], 16
    %s36 = smov 3
    %v37 = vld [vmem:[%s35] ss:$2 sm:%s36]
    %vm38 = vcmask 523264
    %s39 = scalar_lea.vmem %s1, 2
    %40 = vst.msk [vmem:[%s39] ss:$8 sm:$0x3] %vm38, %v37
    %s41 = scalar_lea.vmem [#allocation0], 24
    %s42 = smov 3
    %v43 = vld [vmem:[%s41] ss:$2 sm:%s42]
    %vm44 = vcmask 523264
    %s45 = scalar_lea.vmem %s1, 3
    %46 = vst.msk [vmem:[%s45] ss:$8 sm:$0x3] %vm44, %v43
    %s47 = scalar_lea.vmem [#allocation0], 32
    %s48 = smov 3
    %v49 = vld [vmem:[%s47] ss:$2 sm:%s48]
    %vm50 = vcmask 523264
    %s51 = scalar_lea.vmem %s1, 4
    %52 = vst.msk [vmem:[%s51] ss:$8 sm:$0x3] %vm50, %v49
    %s53 = scalar_lea.vmem [#allocation0], 1
    %v54 = vld [vmem:[%s53] ss:$8 sm:$0xf]
    %s55 = scalar_lea.vmem [#allocation0], 153
    %s56 = smov 48
    %v57 = vld [vmem:[%s55] ss:$-30 sm:%s56]
    %vm58 = vcmask 1045508
    %v59 = vsel %vm58, %v57, %v54
    %s60 = scalar_lea.vmem [#allocation0], 4294967259
    %s61 = smov 192
    %v62 = vld [vmem:[%s60] ss:$8 sm:%s61]
    %vm63 = vcmask 1047558
    %v64 = vsel %vm63, %v62, %v59
    %65 = vrot.lane.b32.xlu0 %v64, 64
    %v66 = vpop.permute.xlu0 %65
    %vm67 = vcmask 1048064
    %68 = vst.msk [vmem:[%s1] sm:$0x1f] %vm67, %v66
    %s69 = scalar_lea.vmem %s1, 3
    %70 = vst.msk [vmem:[%s69] sm:$0xe0] %vm67, %v66
    %s71 = scalar_lea.vmem [#allocation0], 27
    %s72 = smov 3
    %v73 = vld [vmem:[%s71] ss:$8 sm:%s72]
    %74 = vrot.lane.b32.xlu0 %v73, 64
    %v75 = vpop.permute.xlu0 %74
    %vm76 = vcmask 1048064
    %s77 = scalar_lea.vmem %s1, 11
    %78 = vst.msk [vmem:[%s77] sm:$0x3] %vm76, %v75

// kernel: fenet_forward.1
$region0: #{fenet_forward.1}
  #allocation0 [shape = 'u32[]', space=smem, size = 0x4, offset = 0x4, fixed_abs, tag = 'smem constant byte address 0x4 - core index']
  #allocation1 [shape = 'u32[144,128]{1,0:T(1,128)}', space=vmem, size = 0x12000, scoped, tag = 'internal scratch']
  %s0 = inlined_call_operand.vmem [shape: bf16[256,147], index: 0, kind: input, shape index: {}]
  %s1 = inlined_call_operand.vmem [shape: bf16[147,64], index: 1, kind: input, shape index: {}]
  %s2 = inlined_call_operand.vmem [shape: bf16[4,768,256], index: 2, kind: input, shape index: {}]
  %s3 = inlined_call_operand.vmem [shape: f32[5,256], index: 3, kind: input, shape index: {}]
  %s4 = inlined_call_operand.vmem [shape: f32[5,256], index: 4, kind: input, shape index: {}]
  %s5 = inlined_call_operand.vmem [shape: f32[4,8,256], index: 5, kind: output, shape index: {}]
  %s6 = sld [smem:[#allocation0]]
  $region53: #{fenet_forward.1} parent=0
    _
  %s8 = ssub.s32 1, %s6
  %s9 = scalar_select 0, %s8, %s6
  loop: start=0, step=1, limit=4
  $region2: #{fenet_forward.1} parent=0 // loop_pre_header
    _
  $region3: #{fenet_forward.1} parent=0 // loop_header
    %s11 = sphi 0, %s15
    %p12 = scmp.ge.s32.totalorder %s11, 4
    %s21 = sphi 0, %s23
    %s24 = sphi 0, %s21
    %s25 = sphi 0, %s24
    %s41 = sphi 0, %s25
    %s45 = sphi 0, %s45
    %s47 = sphi 0, %s45
    %s48 = sphi 0, %s47
    %s62 = sphi 0, %s48
    %s66 = sphi 0, %s66
    %s68 = sphi 0, %s66
    %s69 = sphi 0, %s68
    %s83 = sphi 0, %s69
    %s87 = sphi 0, %s87
    %s89 = sphi 0, %s87
    %s90 = sphi 0, %s89
    %s104 = sphi 0, %s90
    %s108 = sphi 0, %s108
    %s110 = sphi 0, %s108
    %s111 = sphi 0, %s110
    %s125 = sphi 0, %s111
    %s131 = sphi 0, %s133
    %s134 = sphi 0, %s131
    %s135 = sphi 0, %s134
    %s151 = sphi 0, %s135
  $region4: #{fenet_forward.1} parent=0 // loop_header_branch
    %14 = sbr.rel (%p12) target = $region8
  $region5: #{fenet_forward.1} parent=0 // loop_body
    %s16 = ssub.s32 %s11, 1
    %s17 = ssub.s32 %s11, 2
    %s18 = sadd.s32 %s11, 1
    %s19 = ssub.s32 %s11, %s18
    %p20 = scmp.eq.s32.totalorder %s19, 0
    %s22 = sadd.s32 %s21, 1
    %s23 = scalar_select %p20, %s21, %s22
    %p26 = pneg %p20
    %p27 = scmp.eq.s32.totalorder %s11, 1
    %p28 = por %p26, %p27
    %p29 = scmp.ne.s32.totalorder %s21, %s24
    %p30 = scmp.eq.s32.totalorder %s11, 0
    %p31 = por %p29, %p30
    %p32 = scmp.ne.s32.totalorder %s21, %s24
    %p33 = scmp.eq.s32.totalorder %s16, 1
    %p34 = por %p32, %p33
    %p35 = scmp.ne.s32.totalorder %s24, %s25
    %p36 = scmp.eq.s32.totalorder %s16, 0
    %p37 = por %p35, %p36
    %p38 = scmp.ne.s32.totalorder %s24, %s25
    %p39 = scmp.eq.s32.totalorder %s17, 1
    %p40 = por %p38, %p39
    %p42 = scmp.ne.s32.totalorder %s25, %s41
    %p43 = scmp.eq.s32.totalorder %s17, 0
    %p44 = por %p42, %p43
    %s46 = sadd.s32 %s45, 1
    %p49 = scmp.eq.s32.totalorder %s11, 1
    %p50 = scmp.ne.s32.totalorder %s45, %s47
    %p51 = scmp.eq.s32.totalorder %s11, 0
    %p52 = por %p50, %p51
    %p53 = scmp.ne.s32.totalorder %s45, %s47
    %p54 = scmp.eq.s32.totalorder %s16, 1
    %p55 = por %p53, %p54
    %p56 = scmp.ne.s32.totalorder %s47, %s48
    %p57 = scmp.eq.s32.totalorder %s16, 0
    %p58 = por %p56, %p57
    %p59 = scmp.ne.s32.totalorder %s47, %s48
    %p60 = scmp.eq.s32.totalorder %s17, 1
    %p61 = por %p59, %p60
    %p63 = scmp.ne.s32.totalorder %s48, %s62
    %p64 = scmp.eq.s32.totalorder %s17, 0
    %p65 = por %p63, %p64
    %s67 = sadd.s32 %s66, 1
    %p70 = scmp.eq.s32.totalorder %s11, 1
    %p71 = scmp.ne.s32.totalorder %s66, %s68
    %p72 = scmp.eq.s32.totalorder %s11, 0
    %p73 = por %p71, %p72
    %p74 = scmp.ne.s32.totalorder %s66, %s68
    %p75 = scmp.eq.s32.totalorder %s16, 1
    %p76 = por %p74, %p75
    %p77 = scmp.ne.s32.totalorder %s68, %s69
    %p78 = scmp.eq.s32.totalorder %s16, 0
    %p79 = por %p77, %p78
    %p80 = scmp.ne.s32.totalorder %s68, %s69
    %p81 = scmp.eq.s32.totalorder %s17, 1
    %p82 = por %p80, %p81
    %p84 = scmp.ne.s32.totalorder %s69, %s83
    %p85 = scmp.eq.s32.totalorder %s17, 0
    %p86 = por %p84, %p85
    %s88 = sadd.s32 %s87, 1
    %p91 = scmp.eq.s32.totalorder %s11, 1
    %p92 = scmp.ne.s32.totalorder %s87, %s89
    %p93 = scmp.eq.s32.totalorder %s11, 0
    %p94 = por %p92, %p93
    %p95 = scmp.ne.s32.totalorder %s87, %s89
    %p96 = scmp.eq.s32.totalorder %s16, 1
    %p97 = por %p95, %p96
    %p98 = scmp.ne.s32.totalorder %s89, %s90
    %p99 = scmp.eq.s32.totalorder %s16, 0
    %p100 = por %p98, %p99
    %p101 = scmp.ne.s32.totalorder %s89, %s90
    %p102 = scmp.eq.s32.totalorder %s17, 1
    %p103 = por %p101, %p102
    %p105 = scmp.ne.s32.totalorder %s90, %s104
    %p106 = scmp.eq.s32.totalorder %s17, 0
    %p107 = por %p105, %p106
    %s109 = sadd.s32 %s108, 1
    %p112 = scmp.eq.s32.totalorder %s11, 1
    %p113 = scmp.ne.s32.totalorder %s108, %s110
    %p114 = scmp.eq.s32.totalorder %s11, 0
    %p115 = por %p113, %p114
    %p116 = scmp.ne.s32.totalorder %s108, %s110
    %p117 = scmp.eq.s32.totalorder %s16, 1
    %p118 = por %p116, %p117
    %p119 = scmp.ne.s32.totalorder %s110, %s111
    %p120 = scmp.eq.s32.totalorder %s16, 0
    %p121 = por %p119, %p120
    %p122 = scmp.ne.s32.totalorder %s110, %s111
    %p123 = scmp.eq.s32.totalorder %s17, 1
    %p124 = por %p122, %p123
    %p126 = scmp.ne.s32.totalorder %s111, %s125
    %p127 = scmp.eq.s32.totalorder %s17, 0
    %p128 = por %p126, %p127
    %s129 = ssub.s32 %s11, %s18
    %p130 = scmp.eq.s32.totalorder %s129, 0
    %s132 = sadd.s32 %s131, 1
    %s133 = scalar_select %p130, %s131, %s132
    %p136 = pneg %p130
    %p137 = scmp.eq.s32.totalorder %s11, 1
    %p138 = por %p136, %p137
    %p139 = scmp.ne.s32.totalorder %s131, %s134
    %p140 = scmp.eq.s32.totalorder %s11, 0
    %p141 = por %p139, %p140
    %p142 = scmp.ne.s32.totalorder %s131, %s134
    %p143 = scmp.eq.s32.totalorder %s16, 1
    %p144 = por %p142, %p143
    %p145 = scmp.ne.s32.totalorder %s134, %s135
    %p146 = scmp.eq.s32.totalorder %s16, 0
    %p147 = por %p145, %p146
    %p148 = scmp.ne.s32.totalorder %s134, %s135
    %p149 = scmp.eq.s32.totalorder %s17, 1
    %p150 = por %p148, %p149
    %p152 = scmp.ne.s32.totalorder %s135, %s151
    %p153 = scmp.eq.s32.totalorder %s17, 0
    %p154 = por %p152, %p153
    %p155 = scmp.le.s32.totalorder 1, %s11
    %p156 = scmp.lt.s32.totalorder %s11, 3
    %p157 = pnand %p155, %p156
    %p158 = pneg %p157
    // Predicated region
    $region9: #{fenet_forward.1} parent=5 // pred_check
      _
    $region10: #{fenet_forward.1} parent=5 // pred_check_branch
      %160 = sbr.rel (%p157) target = $region12
    $region11: #{fenet_forward.1} parent=5 // pred_region
      %s161 = ssub.s32 %s11, 1
      // Predicated region
      $region13: #{fenet_forward.1} parent=11 // pred_check
        %p162 = pneg %p58
      $region14: #{fenet_forward.1} parent=11 // pred_check_branch
        %164 = sbr.rel (%p162) target = $region16
      $region15: #{fenet_forward.1} parent=11 // pred_region
        _
      $region16: #{fenet_forward.1} parent=11 // pred_fallthru
        _
      // Predicated region
      $region17: #{fenet_forward.1} parent=11 // pred_check
        %p165 = pneg %p79
      $region18: #{fenet_forward.1} parent=11 // pred_check_branch
        %167 = sbr.rel (%p165) target = $region20
      $region19: #{fenet_forward.1} parent=11 // pred_region
        _
      $region20: #{fenet_forward.1} parent=11 // pred_fallthru
        _
      // Predicated region
      $region21: #{fenet_forward.1} parent=11 // pred_check
        %p168 = pneg %p100
      $region22: #{fenet_forward.1} parent=11 // pred_check_branch
        %170 = sbr.rel (%p168) target = $region24
      $region23: #{fenet_forward.1} parent=11 // pred_region
        _
      $region24: #{fenet_forward.1} parent=11 // pred_fallthru
        _
      // Predicated region
      $region25: #{fenet_forward.1} parent=11 // pred_check
        %p171 = pneg %p121
      $region26: #{fenet_forward.1} parent=11 // pred_check_branch
        %173 = sbr.rel (%p171) target = $region28
      $region27: #{fenet_forward.1} parent=11 // pred_region
        _
      $region28: #{fenet_forward.1} parent=11 // pred_fallthru
        _
    $region12: #{fenet_forward.1} parent=5 // pred_fallthru
      _
    %p174 = scmp.lt.s32.totalorder %s11, 2
    // Predicated region
    $region29: #{fenet_forward.1} parent=5 // pred_check
      %p175 = pneg %p174
    $region30: #{fenet_forward.1} parent=5 // pred_check_branch
      %177 = sbr.rel (%p175) target = $region32
    $region31: #{fenet_forward.1} parent=5 // pred_region
      // Predicated region
      $region33: #{fenet_forward.1} parent=31 // pred_check
        %p178 = pneg %p31
      $region34: #{fenet_forward.1} parent=31 // pred_check_branch
        %180 = sbr.rel (%p178) target = $region36
      $region35: #{fenet_forward.1} parent=31 // pred_region
        %s181 = smul.u32 16, %s11
        %p182 = scmp.lt.s32.totalorder %s181, 31
        %s183 = scalar_select %p182, %s181, 31
        %s184 = smul.addr %s183, 2
        %s185 = smul.addr %s184, 4
        %s186 = scalar_lea.vmem %s0, %s185
        %s187 = smul.u32 16, %s11
      $region36: #{fenet_forward.1} parent=31 // pred_fallthru
        _
    $region32: #{fenet_forward.1} parent=5 // pred_fallthru
      _
    %p188 = scmp.le.s32.totalorder 1, %s11
    %p189 = scmp.lt.s32.totalorder %s11, 3
    %p190 = pnand %p188, %p189
    %p191 = pneg %p190
    // Predicated region
    $region37: #{fenet_forward.1} parent=5 // pred_check
      _
    $region38: #{fenet_forward.1} parent=5 // pred_check_branch
      %193 = sbr.rel (%p190) target = $region40
    $region39: #{fenet_forward.1} parent=5 // pred_region
      %s194 = ssub.s32 %s11, 1
      %s195 = smul.u32 16, %s16
      %p196 = scmp.lt.s32.totalorder %s195, 31
      %s197 = scalar_select %p196, %s195, 31
      %s198 = smul.addr %s197, 2
      %s199 = smul.addr %s198, 4
      %s200 = scalar_lea.vmem %s0, %s199
      %p201 = pneg %p37
      %p202 = pneg %p34
      %p203 = pneg %p58
      %p204 = pneg %p55
      %p205 = pneg %p79
      %p206 = pneg %p76
      %p207 = pneg %p100
      %p208 = pneg %p97
      %p209 = pneg %p121
      %p210 = pneg %p118
      %p211 = pneg %p147
      %p212 = pneg %p144
      %s213 = smul.u32 2, %s16
      %p214 = scmp.lt.s32.totalorder %s213, 3
      %s215 = scalar_select %p214, %s213, 3
      %s216 = smul.addr %s215, 2
      %s217 = smul.addr %s216, 8
      %s218 = scalar_lea.vmem %s5, %s217
      %s219 = smul.u32 16, %s16
      %p220 = scmp.lt.s32.totalorder %s219, 31
      %s221 = scalar_select %p220, %s219, 31
      %s222 = smul.addr %s221, 2
      %s223 = smul.addr %s222, 4
      %s224 = scalar_lea.vmem %s0, %s223
      %s225 = smul.u32 16, %s16
      %s226 = smul.u32 2, %s16
      %p227 = scmp.lt.s32.totalorder %s226, 3
      %s228 = scalar_select %p227, %s226, 3
      %s229 = smul.addr %s228, 2
      %s230 = smul.addr %s229, 8
      %s231 = scalar_lea.vmem %s5, %s230
      %s232 = smul.u32 2, %s16
      %v234 = vld [vmem:[%s224] sm:$0xff]
      %v235 = vld [vmem:[%s224 + $0x8] sm:$0xff]
      %v236 = vld [vmem:[%s224 + $0x10] sm:$0xff]
      %v237 = vld [vmem:[%s224 + $0x18] sm:$0xff]
      %v238 = vld [vmem:[%s224 + $0x20] sm:$0xff]
      %v239 = vld [vmem:[%s224 + $0x28] sm:$0xff]
      %v240 = vld [vmem:[%s224 + $0x30] sm:$0xff]
      %v241 = vld [vmem:[%s224 + $0x38] sm:$0xff]
      %v242 = vld [vmem:[%s224 + $0x40] sm:$0xff]
      %v243 = vld [vmem:[%s224 + $0x48] sm:$0xff]
      %v244 = vld [vmem:[%s224 + $0x50] sm:$0xff]
      %v245 = vld [vmem:[%s224 + $0x58] sm:$0xff]
      %v246 = vld [vmem:[%s224 + $0x60] sm:$0xff]
      %v247 = vld [vmem:[%s224 + $0x68] sm:$0xff]
      %v248 = vld [vmem:[%s224 + $0x70] sm:$0xff]
      %v249 = vld [vmem:[%s224 + $0x78] sm:$0xff]
      %v250 = vld [vmem:[%s1] sm:$0xf]
      %v251 = vld [vmem:[%s1 + $0x4] sm:$0xf]
      %v252 = vld [vmem:[%s1 + $0x8] sm:$0xf]
      %v253 = vld [vmem:[%s1 + $0xc] sm:$0xf]
      %v254 = vld [vmem:[%s1 + $0x10] sm:$0xf]
      %v255 = vld [vmem:[%s1 + $0x14] sm:$0xf]
      %v256 = vld [vmem:[%s1 + $0x18] sm:$0xf]
      %v257 = vld [vmem:[%s1 + $0x1c] sm:$0xf]
      %v258 = vld [vmem:[%s1 + $0x20] sm:$0xf]
      %v259 = vld [vmem:[%s1 + $0x24] sm:$0xf]
      %v260 = vld [vmem:[%s1 + $0x28] sm:$0xf]
      %v261 = vld [vmem:[%s1 + $0x2c] sm:$0xf]
      %v262 = vld [vmem:[%s1 + $0x30] sm:$0xf]
      %v263 = vld [vmem:[%s1 + $0x34] sm:$0xf]
      %v264 = vld [vmem:[%s1 + $0x38] sm:$0xf]
      %v265 = vld [vmem:[%s1 + $0x3c] sm:$0xf]
      %v266 = vld [vmem:[%s1 + $0x40] sm:$0xf]
      %v267 = vld [vmem:[%s1 + $0x44] sm:$0xf]
      %v268 = vld [vmem:[%s1 + $0x48] sm:$0x3]
      %v285 = vunpack.c.l.b16 %v234
      %v286 = vunpack.c.h.b16 %v234
      %v287 = vunpack.c.l.b16 %v235
      %v288 = vunpack.c.h.b16 %v235
      %v289 = vunpack.c.l.b16 %v236
      %v290 = vunpack.c.h.b16 %v236
      %v291 = vunpack.c.l.b16 %v237
      %v292 = vunpack.c.h.b16 %v237
      %v293 = vunpack.c.l.b16 %v238
      %v294 = vunpack.c.h.b16 %v238
      %v295 = vunpack.c.l.b16 %v239
      %v296 = vunpack.c.h.b16 %v239
      %v297 = vunpack.c.l.b16 %v240
      %v298 = vunpack.c.h.b16 %v240
      %v299 = vunpack.c.l.b16 %v241
      %v300 = vunpack.c.h.b16 %v241
      %v301 = vunpack.c.l.b16 %v242
      %v302 = vunpack.c.h.b16 %v242
      %v303 = vunpack.c.l.b16 %v243
      %v304 = vunpack.c.h.b16 %v243
      %v305 = vunpack.c.l.b16 %v244
      %v306 = vunpack.c.h.b16 %v244
      %v307 = vunpack.c.l.b16 %v245
      %v308 = vunpack.c.h.b16 %v245
      %v309 = vunpack.c.l.b16 %v246
      %v310 = vunpack.c.h.b16 %v246
      %v311 = vunpack.c.l.b16 %v247
      %v312 = vunpack.c.h.b16 %v247
      %v313 = vunpack.c.l.b16 %v248
      %v314 = vunpack.c.h.b16 %v248
      %v315 = vunpack.c.l.b16 %v249
      %v316 = vunpack.c.h.b16 %v249
      %v317 = vpack.c.b16 %v287, %v285
      %v318 = vpack.c.b16 %v288, %v286
      %v319 = vpack.c.b16 %v291, %v289
      %v320 = vpack.c.b16 %v292, %v290
      %v321 = vpack.c.b16 %v295, %v293
      %v322 = vpack.c.b16 %v296, %v294
      %v323 = vpack.c.b16 %v299, %v297
      %v324 = vpack.c.b16 %v300, %v298
      %v325 = vpack.c.b16 %v303, %v301
      %v326 = vpack.c.b16 %v304, %v302
      %v327 = vpack.c.b16 %v307, %v305
      %v328 = vpack.c.b16 %v308, %v306
      %v329 = vpack.c.b16 %v311, %v309
      %v330 = vpack.c.b16 %v312, %v310
      %v331 = vpack.c.b16 %v315, %v313
      %v332 = vpack.c.b16 %v316, %v314
      %v360 = vunpack.c.l.b16 %v250
      %v361 = vunpack.c.l.b16 %v251
      %v362 = vunpack.c.l.b16 %v252
      %v363 = vunpack.c.l.b16 %v253
      %v364 = vunpack.c.l.b16 %v254
      %v365 = vunpack.c.l.b16 %v255
      %v366 = vunpack.c.l.b16 %v256
      %v367 = vunpack.c.l.b16 %v257
      %v368 = vunpack.c.l.b16 %v258
      %v369 = vunpack.c.l.b16 %v259
      %v370 = vunpack.c.l.b16 %v260
      %v371 = vunpack.c.l.b16 %v261
      %v372 = vunpack.c.l.b16 %v262
      %v373 = vunpack.c.l.b16 %v263
      %v374 = vunpack.c.l.b16 %v264
      %v375 = vunpack.c.l.b16 %v265
      %v376 = vunpack.c.l.b16 %v266
      %v377 = vunpack.c.l.b16 %v267
      %v378 = vunpack.c.l.b16 %v268
      %v379 = vpack.c.b16 %v361, %v360
      %v380 = vpack.c.b16 %v363, %v362
      %v381 = vpack.c.b16 %v365, %v364
      %v382 = vpack.c.b16 %v367, %v366
      %v383 = vpack.c.b16 %v369, %v368
      %v384 = vpack.c.b16 %v371, %v370
      %v385 = vpack.c.b16 %v373, %v372
      %v386 = vpack.c.b16 %v375, %v374
      %v387 = vpack.c.b16 %v377, %v376
      %v388 = vpack.c.b16 %v378, %v378
      %vm398 = vcmask 154624
      %v400 = vsel %vm398, %v318, 0
      %v403 = vsel %vm398, %v320, 0
      %v406 = vsel %vm398, %v322, 0
      %v409 = vsel %vm398, %v324, 0
      %v412 = vsel %vm398, %v326, 0
      %v415 = vsel %vm398, %v328, 0
      %v418 = vsel %vm398, %v330, 0
      %v421 = vsel %vm398, %v332, 0
      %vm423 = vcmask 1040384
      %vm424 = vcmask 1041408
      %v425 = vsel %vm423, 4294967295, 65535
      %v426 = vsel %vm424, %v425, 0
      %v428 = vand.u32 %v388, %v426
      %430 = vmatprep.subr.bf16.mxu0 0
      %431 = vmatpush1.bf16.msra.mxu0 %v379
      %432 = vmatprep.subr.bf16.mxu0 0
      %433 = vmatpush1.bf16.msra.mxu0 %v380
      %434 = vmatprep.subr.bf16.mxu0 0
      %435 = vmatpush1.bf16.msra.mxu0 %v381
      %436 = vmatprep.subr.bf16.mxu0 0
      %437 = vmatpush1.bf16.msra.mxu0 %v382
      %438 = vmatprep.subr.bf16.mxu0 0
      %439 = vmatpush1.bf16.msra.mxu0 %v383
      %440 = vmatprep.subr.bf16.mxu0 0
      %441 = vmatpush1.bf16.msra.mxu0 %v384
      %442 = vmatprep.subr.bf16.mxu0 0
      %443 = vmatpush1.bf16.msra.mxu0 %v385
      %444 = vmatprep.subr.bf16.mxu0 0
      %445 = vmatpush1.bf16.msra.mxu0 %v386
      %446 = vmatprep.subr.bf16.mxu0 0
      %447 = vmatpush1.bf16.msra.mxu0 %v387
      %448 = vmatprep.subr.bf16.mxu0 0
      %449 = vmatpush1.bf16.msra.mxu0 %v428
      %450 = vmatprep.subr.bf16.mxu0 0
      %451 = vmatpush1.bf16.msra.mxu0 0
      %452 = vmatprep.subr.bf16.mxu0 0
      %453 = vmatpush1.bf16.msra.mxu0 0
      %454 = vmatprep.subr.bf16.mxu0 0
      %455 = vmatpush1.bf16.msra.mxu0 0
      %456 = vmatprep.subr.bf16.mxu0 0
      %457 = vmatpush1.bf16.msra.mxu0 0
      %458 = vmatprep.subr.bf16.mxu0 0
      %459 = vmatpush1.bf16.msra.mxu0 0
      %460 = vmatprep.subr.bf16.mxu0 0
      %461 = vmatpush1.bf16.msra.mxu0 0
      %462 = vmatprep.mubr.bf16.mxu0 %v400
      %463 = vmatmul.mubr.bf16.gmra.mrb[0].mxu0 %v317
      %v464 = vpop.f32.mrb[0].mxu0
      %v465 = vadd.f32 0.0, %v464
      %v466 = vpop.f32.mrb[0].mxu0
      %v467 = vpop.f32.mrb[0].mxu0
      %v468 = vadd.f32 0.0, %v467
      %v469 = vpop.f32.mrb[0].mxu0
      %470 = vmatprep.mubr.bf16.mxu0 %v403
      %471 = vmatmul.mubr.bf16.gmra.mrb[0].mxu0 %v319
      %v472 = vpop.f32.mrb[0].mxu0
      %v473 = vadd.f32 0.0, %v472
      %v474 = vpop.f32.mrb[0].mxu0
      %v475 = vpop.f32.mrb[0].mxu0
      %v476 = vadd.f32 0.0, %v475
      %v477 = vpop.f32.mrb[0].mxu0
      %478 = vmatprep.mubr.bf16.mxu0 %v406
      %479 = vmatmul.mubr.bf16.gmra.mrb[0].mxu0 %v321
      %v480 = vpop.f32.mrb[0].mxu0
      %v481 = vadd.f32 0.0, %v480
      %v482 = vpop.f32.mrb[0].mxu0
      %v483 = vpop.f32.mrb[0].mxu0
      %v484 = vadd.f32 0.0, %v483
      %v485 = vpop.f32.mrb[0].mxu0
      %486 = vmatprep.mubr.bf16.mxu0 %v409
      %487 = vmatmul.mubr.bf16.gmra.mrb[0].mxu0 %v323
      %v488 = vpop.f32.mrb[0].mxu0
      %v489 = vadd.f32 0.0, %v488
      %v490 = vpop.f32.mrb[0].mxu0
      %v491 = vpop.f32.mrb[0].mxu0
      %v492 = vadd.f32 0.0, %v491
      %v493 = vpop.f32.mrb[0].mxu0
      %494 = vmatprep.mubr.bf16.mxu0 %v412
      %495 = vmatmul.mubr.bf16.gmra.mrb[0].mxu0 %v325
      %v496 = vpop.f32.mrb[0].mxu0
      %v497 = vadd.f32 0.0, %v496
      %v498 = vpop.f32.mrb[0].mxu0
      %v499 = vpop.f32.mrb[0].mxu0
      %v500 = vadd.f32 0.0, %v499
      %v501 = vpop.f32.mrb[0].mxu0
      %502 = vmatprep.mubr.bf16.mxu0 %v415
      %503 = vmatmul.mubr.bf16.gmra.mrb[0].mxu0 %v327
      %v504 = vpop.f32.mrb[0].mxu0
      %v505 = vadd.f32 0.0, %v504
      %v506 = vpop.f32.mrb[0].mxu0
      %v507 = vpop.f32.mrb[0].mxu0
      %v508 = vadd.f32 0.0, %v507
      %v509 = vpop.f32.mrb[0].mxu0
      %510 = vmatprep.mubr.bf16.mxu0 %v418
      %511 = vmatmul.mubr.bf16.gmra.mrb[0].mxu0 %v329
      %v512 = vpop.f32.mrb[0].mxu0
      %v513 = vadd.f32 0.0, %v512
      %v514 = vpop.f32.mrb[0].mxu0
      %v515 = vpop.f32.mrb[0].mxu0
      %v516 = vadd.f32 0.0, %v515
      %v517 = vpop.f32.mrb[0].mxu0
      %518 = vmatprep.mubr.bf16.mxu0 %v421
      %519 = vmatmul.mubr.bf16.gmra.mrb[0].mxu0 %v331
      %v520 = vpop.f32.mrb[0].mxu0
      %v521 = vadd.f32 0.0, %v520
      %v522 = vpop.f32.mrb[0].mxu0
      %v523 = vpop.f32.mrb[0].mxu0
      %v524 = vadd.f32 0.0, %v523
      %v525 = vpop.f32.mrb[0].mxu0
      %526 = vdwg.mxu0
      %v527 = vld [vmem:[%s3] ss:$0 sm:$0xff]
      %v528 = vmul.f32 %v465, %v527
      %v529 = vmul.f32 %v468, %v527
      %v530 = vmul.f32 %v473, %v527
      %v531 = vmul.f32 %v476, %v527
      %v532 = vmul.f32 %v481, %v527
      %v533 = vmul.f32 %v484, %v527
      %v534 = vmul.f32 %v489, %v527
      %v535 = vmul.f32 %v492, %v527
      %v536 = vmul.f32 %v497, %v527
      %v537 = vmul.f32 %v500, %v527
      %v538 = vmul.f32 %v505, %v527
      %v539 = vmul.f32 %v508, %v527
      %v540 = vmul.f32 %v513, %v527
      %v541 = vmul.f32 %v516, %v527
      %v542 = vmul.f32 %v521, %v527
      %v543 = vmul.f32 %v524, %v527
      %v544 = vld [vmem:[%s4] ss:$0 sm:$0xff]
      %v545 = vadd.f32 %v528, %v544
      %v546 = vadd.f32 %v529, %v544
      %v547 = vadd.f32 %v530, %v544
      %v548 = vadd.f32 %v531, %v544
      %v549 = vadd.f32 %v532, %v544
      %v550 = vadd.f32 %v533, %v544
      %v551 = vadd.f32 %v534, %v544
      %v552 = vadd.f32 %v535, %v544
      %v553 = vadd.f32 %v536, %v544
      %v554 = vadd.f32 %v537, %v544
      %v555 = vadd.f32 %v538, %v544
      %v556 = vadd.f32 %v539, %v544
      %v557 = vadd.f32 %v540, %v544
      %v558 = vadd.f32 %v541, %v544
      %v559 = vadd.f32 %v542, %v544
      %v560 = vadd.f32 %v543, %v544
      %v561 = vmax.f32 %v545, 0.0
      %v562 = vmax.f32 %v546, 0.0
      %v563 = vmax.f32 %v547, 0.0
      %v564 = vmax.f32 %v548, 0.0
      %v565 = vmax.f32 %v549, 0.0
      %v566 = vmax.f32 %v550, 0.0
      %v567 = vmax.f32 %v551, 0.0
      %v568 = vmax.f32 %v552, 0.0
      %v569 = vmax.f32 %v553, 0.0
      %v570 = vmax.f32 %v554, 0.0
      %v571 = vmax.f32 %v555, 0.0
      %v572 = vmax.f32 %v556, 0.0
      %v573 = vmax.f32 %v557, 0.0
      %v574 = vmax.f32 %v558, 0.0
      %v575 = vmax.f32 %v559, 0.0
      %v576 = vmax.f32 %v560, 0.0
      %v593 = vrot.slane %v561, 4
      %v594 = vrot.slane %v562, 4
      %v595 = vrot.slane %v563, 4
      %v596 = vrot.slane %v564, 4
      %v597 = vrot.slane %v565, 4
      %v598 = vrot.slane %v566, 4
      %v599 = vrot.slane %v567, 4
      %v600 = vrot.slane %v568, 4
      %v601 = vrot.slane %v569, 4
      %v602 = vrot.slane %v570, 4
      %v603 = vrot.slane %v571, 4
      %v604 = vrot.slane %v572, 4
      %v605 = vrot.slane %v573, 4
      %v606 = vrot.slane %v574, 4
      %v607 = vrot.slane %v575, 4
      %v608 = vrot.slane %v576, 4
      %v625 = vmax.f32 %v561, %v593
      %v626 = vmax.f32 %v562, %v594
      %v627 = vmax.f32 %v563, %v595
      %v628 = vmax.f32 %v564, %v596
      %v629 = vmax.f32 %v565, %v597
      %v630 = vmax.f32 %v566, %v598
      %v631 = vmax.f32 %v567, %v599
      %v632 = vmax.f32 %v568, %v600
      %v633 = vmax.f32 %v569, %v601
      %v634 = vmax.f32 %v570, %v602
      %v635 = vmax.f32 %v571, %v603
      %v636 = vmax.f32 %v572, %v604
      %v637 = vmax.f32 %v573, %v605
      %v638 = vmax.f32 %v574, %v606
      %v639 = vmax.f32 %v575, %v607
      %v640 = vmax.f32 %v576, %v608
      %v641 = vrot.slane %v561, 3
      %v642 = vrot.slane %v562, 3
      %v643 = vrot.slane %v563, 3
      %v644 = vrot.slane %v564, 3
      %v645 = vrot.slane %v565, 3
      %v646 = vrot.slane %v566, 3
      %v647 = vrot.slane %v567, 3
      %v648 = vrot.slane %v568, 3
      %v649 = vrot.slane %v569, 3
      %v650 = vrot.slane %v570, 3
      %v651 = vrot.slane %v571, 3
      %v652 = vrot.slane %v572, 3
      %v653 = vrot.slane %v573, 3
      %v654 = vrot.slane %v574, 3
      %v655 = vrot.slane %v575, 3
      %v656 = vrot.slane %v576, 3
      %v673 = vmax.f32 %v625, %v641
      %v674 = vmax.f32 %v626, %v642
      %v675 = vmax.f32 %v627, %v643
      %v676 = vmax.f32 %v628, %v644
      %v677 = vmax.f32 %v629, %v645
      %v678 = vmax.f32 %v630, %v646
      %v679 = vmax.f32 %v631, %v647
      %v680 = vmax.f32 %v632, %v648
      %v681 = vmax.f32 %v633, %v649
      %v682 = vmax.f32 %v634, %v650
      %v683 = vmax.f32 %v635, %v651
      %v684 = vmax.f32 %v636, %v652
      %v685 = vmax.f32 %v637, %v653
      %v686 = vmax.f32 %v638, %v654
      %v687 = vmax.f32 %v639, %v655
      %v688 = vmax.f32 %v640, %v656
      %v705 = vrot.slane %v626, 7
      %vm706 = vcmask 1041409
      %v707 = vsel %vm706, %v705, %v625
      %v708 = vrot.slane %v627, 6
      %vm709 = vcmask 1042434
      %v710 = vsel %vm709, %v708, %v707
      %v711 = vrot.slane %v628, 5
      %vm712 = vcmask 1043459
      %v713 = vsel %vm712, %v711, %v710
      %v714 = vrot.slane %v629, 4
      %vm715 = vcmask 1044484
      %v716 = vsel %vm715, %v714, %v713
      %v717 = vrot.slane %v630, 3
      %vm718 = vcmask 1045509
      %v719 = vsel %vm718, %v717, %v716
      %v720 = vrot.slane %v631, 2
      %vm721 = vcmask 1046534
      %v722 = vsel %vm721, %v720, %v719
      %v723 = vrot.slane %v632, 1
      %vm724 = vcmask 1047559
      %v725 = vsel %vm724, %v723, %v722
      %v726 = vrot.slane %v634, 7
      %v727 = vsel %vm706, %v726, %v633
      %v728 = vrot.slane %v635, 6
      %v729 = vsel %vm709, %v728, %v727
      %v730 = vrot.slane %v636, 5
      %v731 = vsel %vm712, %v730, %v729
      %v732 = vrot.slane %v637, 4
      %v733 = vsel %vm715, %v732, %v731
      %v734 = vrot.slane %v638, 3
      %v735 = vsel %vm718, %v734, %v733
      %v736 = vrot.slane %v639, 2
      %v737 = vsel %vm721, %v736, %v735
      %v738 = vrot.slane %v640, 1
      %v739 = vsel %vm724, %v738, %v737
      %v758 = vrot.slane %v673, 1
      %v759 = vsel %vm706, %v674, %v758
      %v760 = vrot.slane %v675, 7
      %v761 = vsel %vm709, %v760, %v759
      %v762 = vrot.slane %v676, 6
      %v763 = vsel %vm712, %v762, %v761
      %v764 = vrot.slane %v677, 5
      %v765 = vsel %vm715, %v764, %v763
      %v766 = vrot.slane %v678, 4
      %v767 = vsel %vm718, %v766, %v765
      %v768 = vrot.slane %v679, 3
      %v769 = vsel %vm721, %v768, %v767
      %v770 = vrot.slane %v680, 2
      %v771 = vsel %vm724, %v770, %v769
      %v772 = vrot.slane %v681, 1
      %v773 = vsel %vm706, %v682, %v772
      %v774 = vrot.slane %v683, 7
      %v775 = vsel %vm709, %v774, %v773
      %v776 = vrot.slane %v684, 6
      %v777 = vsel %vm712, %v776, %v775
      %v778 = vrot.slane %v685, 5
      %v779 = vsel %vm715, %v778, %v777
      %v780 = vrot.slane %v686, 4
      %v781 = vsel %vm718, %v780, %v779
      %v782 = vrot.slane %v687, 3
      %v783 = vsel %vm721, %v782, %v781
      %v784 = vrot.slane %v688, 2
      %v785 = vsel %vm724, %v784, %v783
      %786 = vrot.lane.b32.xlu0 %v771, 64
      %v787 = vpop.permute.xlu0 %786
      %788 = vrot.lane.b32.xlu0 %v785, 64
      %v789 = vpop.permute.xlu0 %788
      %v792 = vrot.slane %v673, 2
      %v793 = vrot.slane %v674, 1
      %v794 = vsel %vm706, %v793, %v792
      %v795 = vsel %vm709, %v675, %v794
      %v796 = vrot.slane %v676, 7
      %v797 = vsel %vm712, %v796, %v795
      %v798 = vrot.slane %v677, 6
      %v799 = vsel %vm715, %v798, %v797
      %v800 = vrot.slane %v678, 5
      %v801 = vsel %vm718, %v800, %v799
      %v802 = vrot.slane %v679, 4
      %v803 = vsel %vm721, %v802, %v801
      %v804 = vrot.slane %v680, 3
      %v805 = vsel %vm724, %v804, %v803
      %v806 = vrot.slane %v681, 2
      %v807 = vrot.slane %v682, 1
      %v808 = vsel %vm706, %v807, %v806
      %v809 = vsel %vm709, %v683, %v808
      %v810 = vrot.slane %v684, 7
      %v811 = vsel %vm712, %v810, %v809
      %v812 = vrot.slane %v685, 6
      %v813 = vsel %vm715, %v812, %v811
      %v814 = vrot.slane %v686, 5
      %v815 = vsel %vm718, %v814, %v813
      %v816 = vrot.slane %v687, 4
      %v817 = vsel %vm721, %v816, %v815
      %v818 = vrot.slane %v688, 3
      %v819 = vsel %vm724, %v818, %v817
      %v822 = vrot.slane %v673, 3
      %v823 = vrot.slane %v674, 2
      %v824 = vsel %vm706, %v823, %v822
      %v825 = vrot.slane %v675, 1
      %v826 = vsel %vm709, %v825, %v824
      %v827 = vsel %vm712, %v676, %v826
      %v828 = vrot.slane %v677, 7
      %v829 = vsel %vm715, %v828, %v827
      %v830 = vrot.slane %v678, 6
      %v831 = vsel %vm718, %v830, %v829
      %v832 = vrot.slane %v679, 5
      %v833 = vsel %vm721, %v832, %v831
      %v834 = vrot.slane %v680, 4
      %v835 = vsel %vm724, %v834, %v833
      %v836 = vrot.slane %v681, 3
      %v837 = vrot.slane %v682, 2
      %v838 = vsel %vm706, %v837, %v836
      %v839 = vrot.slane %v683, 1
      %v840 = vsel %vm709, %v839, %v838
      %v841 = vsel %vm712, %v684, %v840
      %v842 = vrot.slane %v685, 7
      %v843 = vsel %vm715, %v842, %v841
      %v844 = vrot.slane %v686, 6
      %v845 = vsel %vm718, %v844, %v843
      %v846 = vrot.slane %v687, 5
      %v847 = vsel %vm721, %v846, %v845
      %v848 = vrot.slane %v688, 4
      %v849 = vsel %vm724, %v848, %v847
      %850 = vrot.lane.b32.xlu0 %v835, 64
      %v851 = vpop.permute.xlu0 %850
      %852 = vrot.lane.b32.xlu0 %v849, 64
      %v853 = vpop.permute.xlu0 %852
      %vm856 = vcmask 523264
      %v857 = vsel %vm856, %v725, %v787
      %v858 = vsel %vm856, %v739, %v789
      %v859 = vsel %vm856, %v805, %v851
      %v860 = vsel %vm856, %v819, %v853
      %v865 = vrot.slane %v857, 3
      %v866 = vrot.slane %v859, 3
      %v867 = vrot.slane %v858, 3
      %v868 = vrot.slane %v860, 3
      %v873 = vsel %vm423, 0.0, %v865
      %v874 = vsel %vm423, 0.0, %v866
      %v875 = vsel %vm423, 0.0, %v867
      %v876 = vsel %vm423, 0.0, %v868
      %v877 = vrot.slane %v857, 4
      %v878 = vrot.slane %v859, 4
      %v879 = vrot.slane %v858, 4
      %v880 = vrot.slane %v860, 4
      %v885 = vmax.f32 %v857, %v877
      %v886 = vmax.f32 %v859, %v878
      %v887 = vmax.f32 %v858, %v879
      %v888 = vmax.f32 %v860, %v880
      %v889 = vmax.f32 %v885, %v873
      %v890 = vmax.f32 %v886, %v874
      %v891 = vmax.f32 %v887, %v875
      %v892 = vmax.f32 %v888, %v876
      %v897 = vrot.slane %v889, 7
      %v898 = vrot.slane %v890, 7
      %v899 = vrot.slane %v891, 7
      %v900 = vrot.slane %v892, 7
      %v905 = vsel %vm423, 0.0, %v897
      %v906 = vsel %vm423, 0.0, %v898
      %v907 = vsel %vm423, 0.0, %v899
      %v908 = vsel %vm423, 0.0, %v900
      %vm909 = vcmask 1044480
      %v910 = vsel %vm909, %v905, 0.0
      %v911 = vsel %vm909, %v906, 0.0
      %v912 = vsel %vm909, %v907, 0.0
      %v913 = vsel %vm909, %v908, 0.0
      %v914 = vlaneseq
      %v915 = vshrl.u32 %v914, 7
      %v916 = vadd.s32 %v915, 8
      %vm917 = vcmp.lt.s32.totalorder %v915, 0
      %v918 = vsub.s32 0, %v915
      %v919 = vsel %vm917, %v918, %v915
      %v920 = vshrl.u32 %v919, 3
      %v921 = vand.u32 %v919, 7
      %v922 = vsub.s32 0, %v921
      %v923 = vsel %vm917, %v922, %v921
      %vm924 = vcmp.lt.s32.totalorder %v916, 0
      %v925 = vsub.s32 0, %v916
      %v926 = vsel %vm924, %v925, %v916
      %v927 = vshrl.u32 %v926, 3
      %v928 = vand.u32 %v926, 7
      %v929 = vsub.s32 0, %v928
      %v930 = vsel %vm924, %v929, %v928
      %vm931 = vcmp.ne.s32.totalorder %v923, 0
      %vm932 = vcmp.ne.s32.totalorder %v930, 0
      %vm933 = vcmp.lt.s32.totalorder %v923, 0
      %vm934 = vcmp.lt.s32.totalorder %v930, 0
      %vm935 = vmand %vm933, %vm931
      %vm936 = vmand %vm934, %vm932
      %v937 = vadd.s32 %v923, 8
      %v938 = vadd.s32 %v930, 8
      %v939 = vsel %vm935, %v937, %v923
      %v940 = vsel %vm936, %v938, %v930
      %vm941 = vcmp.ge.s32.totalorder %v939, 1
      %vm942 = vcmp.ge.s32.totalorder %v940, 1
      %vm943 = vcmp.le.s32.totalorder %v939, 4
      %vm944 = vcmp.le.s32.totalorder %v940, 4
      %vm945 = vmand %vm941, %vm943
      %vm946 = vmand %vm942, %vm944
      %v951 = vrot.slane %v910, 7
      %v952 = vrot.slane %v911, 7
      %v953 = vrot.slane %v912, 7
      %v954 = vsel %vm423, %v951, %v953
      %v955 = vrot.slane %v913, 7
      %v956 = vsel %vm423, %v952, %v955
      %v961 = vsel %vm423, 0.0, %v951
      %v962 = vsel %vm423, 0.0, %v952
      %vm963 = vcmask 1046528
      %v964 = vrot.slane %v910, 1
      %v965 = vrot.slane %v912, 1
      %v966 = vsel %vm963, %v964, %v965
      %v967 = vrot.slane %v911, 1
      %v968 = vrot.slane %v913, 1
      %v969 = vsel %vm963, %v967, %v968
      %v974 = vsel %vm963, %v965, 0.0
      %v975 = vsel %vm963, %v968, 0.0
      %v976 = vpack.c.bf16 %v954, %v961
      %v977 = vpack.c.bf16 %v956, %v962
      %v978 = vpack.c.bf16 %v912, %v910
      %v979 = vpack.c.bf16 %v913, %v911
      %v980 = vpack.c.bf16 %v974, %v966
      %v981 = vpack.c.bf16 %v975, %v969
      %v982 = vld [vmem:[%s2] sm:$0xff]
      %v983 = vld [vmem:[%s2 + $0x8] sm:$0xff]
      %v984 = vld [vmem:[%s2 + $0x10] sm:$0xff]
      %v985 = vld [vmem:[%s2 + $0x18] sm:$0xff]
      %v986 = vld [vmem:[%s2 + $0x20] sm:$0xff]
      %v987 = vld [vmem:[%s2 + $0x28] sm:$0xff]
      %v988 = vld [vmem:[%s2 + $0x30] sm:$0xff]
      %v989 = vld [vmem:[%s2 + $0x38] sm:$0xff]
      %v990 = vld [vmem:[%s2 + $0x40] sm:$0xff]
      %v991 = vld [vmem:[%s2 + $0x48] sm:$0xff]
      %v992 = vld [vmem:[%s2 + $0x50] sm:$0xff]
      %v993 = vld [vmem:[%s2 + $0x58] sm:$0xff]
      %v994 = vld [vmem:[%s2 + $0x60] sm:$0xff]
      %v995 = vld [vmem:[%s2 + $0x68] sm:$0xff]
      %v996 = vld [vmem:[%s2 + $0x70] sm:$0xff]
      %v997 = vld [vmem:[%s2 + $0x78] sm:$0xff]
      %v998 = vld [vmem:[%s2 + $0x80] sm:$0xff]
      %v999 = vld [vmem:[%s2 + $0x88] sm:$0xff]
      %v1000 = vld [vmem:[%s2 + $0x90] sm:$0xff]
      %v1001 = vld [vmem:[%s2 + $0x98] sm:$0xff]
      %v1002 = vld [vmem:[%s2 + $0xa0] sm:$0xff]
      %v1003 = vld [vmem:[%s2 + $0xa8] sm:$0xff]
      %v1004 = vld [vmem:[%s2 + $0xb0] sm:$0xff]
      %v1005 = vld [vmem:[%s2 + $0xb8] sm:$0xff]
      %v1006 = vld [vmem:[%s2 + $0xc0] sm:$0xff]
      %v1007 = vld [vmem:[%s2 + $0xc8] sm:$0xff]
      %v1008 = vld [vmem:[%s2 + $0xd0] sm:$0xff]
      %v1009 = vld [vmem:[%s2 + $0xd8] sm:$0xff]
      %v1010 = vld [vmem:[%s2 + $0xe0] sm:$0xff]
      %v1011 = vld [vmem:[%s2 + $0xe8] sm:$0xff]
      %v1012 = vld [vmem:[%s2 + $0xf0] sm:$0xff]
      %v1013 = vld [vmem:[%s2 + $0xf8] sm:$0xff]
      %v1014 = vld [vmem:[%s2 + $0x100] sm:$0xff]
      %v1015 = vld [vmem:[%s2 + $0x108] sm:$0xff]
      %v1016 = vld [vmem:[%s2 + $0x110] sm:$0xff]
      %v1017 = vld [vmem:[%s2 + $0x118] sm:$0xff]
      %v1018 = vld [vmem:[%s2 + $0x120] sm:$0xff]
      %v1019 = vld [vmem:[%s2 + $0x128] sm:$0xff]
      %v1020 = vld [vmem:[%s2 + $0x130] sm:$0xff]
      %v1021 = vld [vmem:[%s2 + $0x138] sm:$0xff]
      %v1022 = vld [vmem:[%s2 + $0x140] sm:$0xff]
      %v1023 = vld [vmem:[%s2 + $0x148] sm:$0xff]
      %v1024 = vld [vmem:[%s2 + $0x150] sm:$0xff]
      %v1025 = vld [vmem:[%s2 + $0x158] sm:$0xff]
      %v1026 = vld [vmem:[%s2 + $0x160] sm:$0xff]
      %v1027 = vld [vmem:[%s2 + $0x168] sm:$0xff]
      %v1028 = vld [vmem:[%s2 + $0x170] sm:$0xff]
      %v1029 = vld [vmem:[%s2 + $0x178] sm:$0xff]
      %v1030 = vld [vmem:[%s2 + $0x180] sm:$0xff]
      %v1031 = vld [vmem:[%s2 + $0x188] sm:$0xff]
      %v1032 = vld [vmem:[%s2 + $0x190] sm:$0xff]
      %v1033 = vld [vmem:[%s2 + $0x198] sm:$0xff]
      %v1034 = vld [vmem:[%s2 + $0x1a0] sm:$0xff]
      %v1035 = vld [vmem:[%s2 + $0x1a8] sm:$0xff]
      %v1036 = vld [vmem:[%s2 + $0x1b0] sm:$0xff]
      %v1037 = vld [vmem:[%s2 + $0x1b8] sm:$0xff]
      %v1038 = vld [vmem:[%s2 + $0x1c0] sm:$0xff]
      %v1039 = vld [vmem:[%s2 + $0x1c8] sm:$0xff]
      %v1040 = vld [vmem:[%s2 + $0x1d0] sm:$0xff]
      %v1041 = vld [vmem:[%s2 + $0x1d8] sm:$0xff]
      %v1042 = vld [vmem:[%s2 + $0x1e0] sm:$0xff]
      %v1043 = vld [vmem:[%s2 + $0x1e8] sm:$0xff]
      %v1044 = vld [vmem:[%s2 + $0x1f0] sm:$0xff]
      %v1045 = vld [vmem:[%s2 + $0x1f8] sm:$0xff]
      %v1046 = vld [vmem:[%s2 + $0x200] sm:$0xff]
      %v1047 = vld [vmem:[%s2 + $0x208] sm:$0xff]
      %v1048 = vld [vmem:[%s2 + $0x210] sm:$0xff]
      %v1049 = vld [vmem:[%s2 + $0x218] sm:$0xff]
      %v1050 = vld [vmem:[%s2 + $0x220] sm:$0xff]
      %v1051 = vld [vmem:[%s2 + $0x228] sm:$0xff]
      %v1052 = vld [vmem:[%s2 + $0x230] sm:$0xff]
      %v1053 = vld [vmem:[%s2 + $0x238] sm:$0xff]
      %v1054 = vld [vmem:[%s2 + $0x240] sm:$0xff]
      %v1055 = vld [vmem:[%s2 + $0x248] sm:$0xff]
      %v1056 = vld [vmem:[%s2 + $0x250] sm:$0xff]
      %v1057 = vld [vmem:[%s2 + $0x258] sm:$0xff]
      %v1058 = vld [vmem:[%s2 + $0x260] sm:$0xff]
      %v1059 = vld [vmem:[%s2 + $0x268] sm:$0xff]
      %v1060 = vld [vmem:[%s2 + $0x270] sm:$0xff]
      %v1061 = vld [vmem:[%s2 + $0x278] sm:$0xff]
      %v1062 = vld [vmem:[%s2 + $0x280] sm:$0xff]
      %v1063 = vld [vmem:[%s2 + $0x288] sm:$0xff]
      %v1064 = vld [vmem:[%s2 + $0x290] sm:$0xff]
      %v1065 = vld [vmem:[%s2 + $0x298] sm:$0xff]
      %v1066 = vld [vmem:[%s2 + $0x2a0] sm:$0xff]
      %v1067 = vld [vmem:[%s2 + $0x2a8] sm:$0xff]
      %v1068 = vld [vmem:[%s2 + $0x2b0] sm:$0xff]
      %v1069 = vld [vmem:[%s2 + $0x2b8] sm:$0xff]
      %v1070 = vld [vmem:[%s2 + $0x2c0] sm:$0xff]
      %v1071 = vld [vmem:[%s2 + $0x2c8] sm:$0xff]
      %v1072 = vld [vmem:[%s2 + $0x2d0] sm:$0xff]
      %v1073 = vld [vmem:[%s2 + $0x2d8] sm:$0xff]
      %v1074 = vld [vmem:[%s2 + $0x2e0] sm:$0xff]
      %v1075 = vld [vmem:[%s2 + $0x2e8] sm:$0xff]
      %v1076 = vld [vmem:[%s2 + $0x2f0] sm:$0xff]
      %v1077 = vld [vmem:[%s2 + $0x2f8] sm:$0xff]
      %v1174 = vunpack.c.l.b16 %v982
      %v1175 = vunpack.c.h.b16 %v982
      %v1176 = vunpack.c.l.b16 %v983
      %v1177 = vunpack.c.h.b16 %v983
      %v1178 = vunpack.c.l.b16 %v984
      %v1179 = vunpack.c.h.b16 %v984
      %v1180 = vunpack.c.l.b16 %v985
      %v1181 = vunpack.c.h.b16 %v985
      %v1182 = vunpack.c.l.b16 %v986
      %v1183 = vunpack.c.h.b16 %v986
      %v1184 = vunpack.c.l.b16 %v987
      %v1185 = vunpack.c.h.b16 %v987
      %v1186 = vunpack.c.l.b16 %v988
      %v1187 = vunpack.c.h.b16 %v988
      %v1188 = vunpack.c.l.b16 %v989
      %v1189 = vunpack.c.h.b16 %v989
      %v1190 = vunpack.c.l.b16 %v990
      %v1191 = vunpack.c.h.b16 %v990
      %v1192 = vunpack.c.l.b16 %v991
      %v1193 = vunpack.c.h.b16 %v991
      %v1194 = vunpack.c.l.b16 %v992
      %v1195 = vunpack.c.h.b16 %v992
      %v1196 = vunpack.c.l.b16 %v993
      %v1197 = vunpack.c.h.b16 %v993
      %v1198 = vunpack.c.l.b16 %v994
      %v1199 = vunpack.c.h.b16 %v994
      %v1200 = vunpack.c.l.b16 %v995
      %v1201 = vunpack.c.h.b16 %v995
      %v1202 = vunpack.c.l.b16 %v996
      %v1203 = vunpack.c.h.b16 %v996
      %v1204 = vunpack.c.l.b16 %v997
      %v1205 = vunpack.c.h.b16 %v997
      %v1206 = vunpack.c.l.b16 %v998
      %v1207 = vunpack.c.h.b16 %v998
      %v1208 = vunpack.c.l.b16 %v999
      %v1209 = vunpack.c.h.b16 %v999
      %v1210 = vunpack.c.l.b16 %v1000
      %v1211 = vunpack.c.h.b16 %v1000
      %v1212 = vunpack.c.l.b16 %v1001
      %v1213 = vunpack.c.h.b16 %v1001
      %v1214 = vunpack.c.l.b16 %v1002
      %v1215 = vunpack.c.h.b16 %v1002
      %v1216 = vunpack.c.l.b16 %v1003
      %v1217 = vunpack.c.h.b16 %v1003
      %v1218 = vunpack.c.l.b16 %v1004
      %v1219 = vunpack.c.h.b16 %v1004
      %v1220 = vunpack.c.l.b16 %v1005
      %v1221 = vunpack.c.h.b16 %v1005
      %v1222 = vunpack.c.l.b16 %v1006
      %v1223 = vunpack.c.h.b16 %v1006
      %v1224 = vunpack.c.l.b16 %v1007
      %v1225 = vunpack.c.h.b16 %v1007
      %v1226 = vunpack.c.l.b16 %v1008
      %v1227 = vunpack.c.h.b16 %v1008
      %v1228 = vunpack.c.l.b16 %v1009
      %v1229 = vunpack.c.h.b16 %v1009
      %v1230 = vunpack.c.l.b16 %v1010
      %v1231 = vunpack.c.h.b16 %v1010
      %v1232 = vunpack.c.l.b16 %v1011
      %v1233 = vunpack.c.h.b16 %v1011
      %v1234 = vunpack.c.l.b16 %v1012
      %v1235 = vunpack.c.h.b16 %v1012
      %v1236 = vunpack.c.l.b16 %v1013
      %v1237 = vunpack.c.h.b16 %v1013
      %v1238 = vunpack.c.l.b16 %v1014
      %v1239 = vunpack.c.h.b16 %v1014
      %v1240 = vunpack.c.l.b16 %v1015
      %v1241 = vunpack.c.h.b16 %v1015
      %v1242 = vunpack.c.l.b16 %v1016
      %v1243 = vunpack.c.h.b16 %v1016
      %v1244 = vunpack.c.l.b16 %v1017
      %v1245 = vunpack.c.h.b16 %v1017
      %v1246 = vunpack.c.l.b16 %v1018
      %v1247 = vunpack.c.h.b16 %v1018
      %v1248 = vunpack.c.l.b16 %v1019
      %v1249 = vunpack.c.h.b16 %v1019
      %v1250 = vunpack.c.l.b16 %v1020
      %v1251 = vunpack.c.h.b16 %v1020
      %v1252 = vunpack.c.l.b16 %v1021
      %v1253 = vunpack.c.h.b16 %v1021
      %v1254 = vunpack.c.l.b16 %v1022
      %v1255 = vunpack.c.h.b16 %v1022
      %v1256 = vunpack.c.l.b16 %v1023
      %v1257 = vunpack.c.h.b16 %v1023
      %v1258 = vunpack.c.l.b16 %v1024
      %v1259 = vunpack.c.h.b16 %v1024
      %v1260 = vunpack.c.l.b16 %v1025
      %v1261 = vunpack.c.h.b16 %v1025
      %v1262 = vunpack.c.l.b16 %v1026
      %v1263 = vunpack.c.h.b16 %v1026
      %v1264 = vunpack.c.l.b16 %v1027
      %v1265 = vunpack.c.h.b16 %v1027
      %v1266 = vunpack.c.l.b16 %v1028
      %v1267 = vunpack.c.h.b16 %v1028
      %v1268 = vunpack.c.l.b16 %v1029
      %v1269 = vunpack.c.h.b16 %v1029
      %v1270 = vunpack.c.l.b16 %v1030
      %v1271 = vunpack.c.h.b16 %v1030
      %v1272 = vunpack.c.l.b16 %v1031
      %v1273 = vunpack.c.h.b16 %v1031
      %v1274 = vunpack.c.l.b16 %v1032
      %v1275 = vunpack.c.h.b16 %v1032
      %v1276 = vunpack.c.l.b16 %v1033
      %v1277 = vunpack.c.h.b16 %v1033
      %v1278 = vunpack.c.l.b16 %v1034
      %v1279 = vunpack.c.h.b16 %v1034
      %v1280 = vunpack.c.l.b16 %v1035
      %v1281 = vunpack.c.h.b16 %v1035
      %v1282 = vunpack.c.l.b16 %v1036
      %v1283 = vunpack.c.h.b16 %v1036
      %v1284 = vunpack.c.l.b16 %v1037
      %v1285 = vunpack.c.h.b16 %v1037
      %v1286 = vunpack.c.l.b16 %v1038
      %v1287 = vunpack.c.h.b16 %v1038
      %v1288 = vunpack.c.l.b16 %v1039
      %v1289 = vunpack.c.h.b16 %v1039
      %v1290 = vunpack.c.l.b16 %v1040
      %v1291 = vunpack.c.h.b16 %v1040
      %v1292 = vunpack.c.l.b16 %v1041
      %v1293 = vunpack.c.h.b16 %v1041
      %v1294 = vunpack.c.l.b16 %v1042
      %v1295 = vunpack.c.h.b16 %v1042
      %v1296 = vunpack.c.l.b16 %v1043
      %v1297 = vunpack.c.h.b16 %v1043
      %v1298 = vunpack.c.l.b16 %v1044
      %v1299 = vunpack.c.h.b16 %v1044
      %v1300 = vunpack.c.l.b16 %v1045
      %v1301 = vunpack.c.h.b16 %v1045
      %v1302 = vunpack.c.l.b16 %v1046
      %v1303 = vunpack.c.h.b16 %v1046
      %v1304 = vunpack.c.l.b16 %v1047
      %v1305 = vunpack.c.h.b16 %v1047
      %v1306 = vunpack.c.l.b16 %v1048
      %v1307 = vunpack.c.h.b16 %v1048
      %v1308 = vunpack.c.l.b16 %v1049
      %v1309 = vunpack.c.h.b16 %v1049
      %v1310 = vunpack.c.l.b16 %v1050
      %v1311 = vunpack.c.h.b16 %v1050
      %v1312 = vunpack.c.l.b16 %v1051
      %v1313 = vunpack.c.h.b16 %v1051
      %v1314 = vunpack.c.l.b16 %v1052
      %v1315 = vunpack.c.h.b16 %v1052
      %v1316 = vunpack.c.l.b16 %v1053
      %v1317 = vunpack.c.h.b16 %v1053
      %v1318 = vunpack.c.l.b16 %v1054
      %v1319 = vunpack.c.h.b16 %v1054
      %v1320 = vunpack.c.l.b16 %v1055
      %v1321 = vunpack.c.h.b16 %v1055
      %v1322 = vunpack.c.l.b16 %v1056
      %v1323 = vunpack.c.h.b16 %v1056
      %v1324 = vunpack.c.l.b16 %v1057
      %v1325 = vunpack.c.h.b16 %v1057
      %v1326 = vunpack.c.l.b16 %v1058
      %v1327 = vunpack.c.h.b16 %v1058
      %v1328 = vunpack.c.l.b16 %v1059
      %v1329 = vunpack.c.h.b16 %v1059
      %v1330 = vunpack.c.l.b16 %v1060
      %v1331 = vunpack.c.h.b16 %v1060
      %v1332 = vunpack.c.l.b16 %v1061
      %v1333 = vunpack.c.h.b16 %v1061
      %v1334 = vunpack.c.l.b16 %v1062
      %v1335 = vunpack.c.h.b16 %v1062
      %v1336 = vunpack.c.l.b16 %v1063
      %v1337 = vunpack.c.h.b16 %v1063
      %v1338 = vunpack.c.l.b16 %v1064
      %v1339 = vunpack.c.h.b16 %v1064
      %v1340 = vunpack.c.l.b16 %v1065
      %v1341 = vunpack.c.h.b16 %v1065
      %v1342 = vunpack.c.l.b16 %v1066
      %v1343 = vunpack.c.h.b16 %v1066
      %v1344 = vunpack.c.l.b16 %v1067
      %v1345 = vunpack.c.h.b16 %v1067
      %v1346 = vunpack.c.l.b16 %v1068
      %v1347 = vunpack.c.h.b16 %v1068
      %v1348 = vunpack.c.l.b16 %v1069
      %v1349 = vunpack.c.h.b16 %v1069
      %v1350 = vunpack.c.l.b16 %v1070
      %v1351 = vunpack.c.h.b16 %v1070
      %v1352 = vunpack.c.l.b16 %v1071
      %v1353 = vunpack.c.h.b16 %v1071
      %v1354 = vunpack.c.l.b16 %v1072
      %v1355 = vunpack.c.h.b16 %v1072
      %v1356 = vunpack.c.l.b16 %v1073
      %v1357 = vunpack.c.h.b16 %v1073
      %v1358 = vunpack.c.l.b16 %v1074
      %v1359 = vunpack.c.h.b16 %v1074
      %v1360 = vunpack.c.l.b16 %v1075
      %v1361 = vunpack.c.h.b16 %v1075
      %v1362 = vunpack.c.l.b16 %v1076
      %v1363 = vunpack.c.h.b16 %v1076
      %v1364 = vunpack.c.l.b16 %v1077
      %v1365 = vunpack.c.h.b16 %v1077
      %v1366 = vpack.c.b16 %v1176, %v1174
      %v1367 = vpack.c.b16 %v1177, %v1175
      %v1368 = vpack.c.b16 %v1180, %v1178
      %v1369 = vpack.c.b16 %v1181, %v1179
      %v1370 = vpack.c.b16 %v1184, %v1182
      %v1371 = vpack.c.b16 %v1185, %v1183
      %v1372 = vpack.c.b16 %v1188, %v1186
      %v1373 = vpack.c.b16 %v1189, %v1187
      %v1374 = vpack.c.b16 %v1192, %v1190
      %v1375 = vpack.c.b16 %v1193, %v1191
      %v1376 = vpack.c.b16 %v1196, %v1194
      %v1377 = vpack.c.b16 %v1197, %v1195
      %v1378 = vpack.c.b16 %v1200, %v1198
      %v1379 = vpack.c.b16 %v1201, %v1199
      %v1380 = vpack.c.b16 %v1204, %v1202
      %v1381 = vpack.c.b16 %v1205, %v1203
      %v1382 = vpack.c.b16 %v1208, %v1206
      %v1383 = vpack.c.b16 %v1209, %v1207
      %v1384 = vpack.c.b16 %v1212, %v1210
      %v1385 = vpack.c.b16 %v1213, %v1211
      %v1386 = vpack.c.b16 %v1216, %v1214
      %v1387 = vpack.c.b16 %v1217, %v1215
      %v1388 = vpack.c.b16 %v1220, %v1218
      %v1389 = vpack.c.b16 %v1221, %v1219
      %v1390 = vpack.c.b16 %v1224, %v1222
      %v1391 = vpack.c.b16 %v1225, %v1223
      %v1392 = vpack.c.b16 %v1228, %v1226
      %v1393 = vpack.c.b16 %v1229, %v1227
      %v1394 = vpack.c.b16 %v1232, %v1230
      %v1395 = vpack.c.b16 %v1233, %v1231
      %v1396 = vpack.c.b16 %v1236, %v1234
      %v1397 = vpack.c.b16 %v1237, %v1235
      %v1398 = vpack.c.b16 %v1240, %v1238
      %v1399 = vpack.c.b16 %v1241, %v1239
      %v1400 = vpack.c.b16 %v1244, %v1242
      %v1401 = vpack.c.b16 %v1245, %v1243
      %v1402 = vpack.c.b16 %v1248, %v1246
      %v1403 = vpack.c.b16 %v1249, %v1247
      %v1404 = vpack.c.b16 %v1252, %v1250
      %v1405 = vpack.c.b16 %v1253, %v1251
      %v1406 = vpack.c.b16 %v1256, %v1254
      %v1407 = vpack.c.b16 %v1257, %v1255
      %v1408 = vpack.c.b16 %v1260, %v1258
      %v1409 = vpack.c.b16 %v1261, %v1259
      %v1410 = vpack.c.b16 %v1264, %v1262
      %v1411 = vpack.c.b16 %v1265, %v1263
      %v1412 = vpack.c.b16 %v1268, %v1266
      %v1413 = vpack.c.b16 %v1269, %v1267
      %v1414 = vpack.c.b16 %v1272, %v1270
      %v1415 = vpack.c.b16 %v1273, %v1271
      %v1416 = vpack.c.b16 %v1276, %v1274
      %v1417 = vpack.c.b16 %v1277, %v1275
      %v1418 = vpack.c.b16 %v1280, %v1278
      %v1419 = vpack.c.b16 %v1281, %v1279
      %v1420 = vpack.c.b16 %v1284, %v1282
      %v1421 = vpack.c.b16 %v1285, %v1283
      %v1422 = vpack.c.b16 %v1288, %v1286
      %v1423 = vpack.c.b16 %v1289, %v1287
      %v1424 = vpack.c.b16 %v1292, %v1290
      %v1425 = vpack.c.b16 %v1293, %v1291
      %v1426 = vpack.c.b16 %v1296, %v1294
      %v1427 = vpack.c.b16 %v1297, %v1295
      %v1428 = vpack.c.b16 %v1300, %v1298
      %v1429 = vpack.c.b16 %v1301, %v1299
      %v1430 = vpack.c.b16 %v1304, %v1302
      %v1431 = vpack.c.b16 %v1305, %v1303
      %v1432 = vpack.c.b16 %v1308, %v1306
      %v1433 = vpack.c.b16 %v1309, %v1307
      %v1434 = vpack.c.b16 %v1312, %v1310
      %v1435 = vpack.c.b16 %v1313, %v1311
      %v1436 = vpack.c.b16 %v1316, %v1314
      %v1437 = vpack.c.b16 %v1317, %v1315
      %v1438 = vpack.c.b16 %v1320, %v1318
      %v1439 = vpack.c.b16 %v1321, %v1319
      %v1440 = vpack.c.b16 %v1324, %v1322
      %v1441 = vpack.c.b16 %v1325, %v1323
      %v1442 = vpack.c.b16 %v1328, %v1326
      %v1443 = vpack.c.b16 %v1329, %v1327
      %v1444 = vpack.c.b16 %v1332, %v1330
      %v1445 = vpack.c.b16 %v1333, %v1331
      %v1446 = vpack.c.b16 %v1336, %v1334
      %v1447 = vpack.c.b16 %v1337, %v1335
      %v1448 = vpack.c.b16 %v1340, %v1338
      %v1449 = vpack.c.b16 %v1341, %v1339
      %v1450 = vpack.c.b16 %v1344, %v1342
      %v1451 = vpack.c.b16 %v1345, %v1343
      %v1452 = vpack.c.b16 %v1348, %v1346
      %v1453 = vpack.c.b16 %v1349, %v1347
      %v1454 = vpack.c.b16 %v1352, %v1350
      %v1455 = vpack.c.b16 %v1353, %v1351
      %v1456 = vpack.c.b16 %v1356, %v1354
      %v1457 = vpack.c.b16 %v1357, %v1355
      %v1458 = vpack.c.b16 %v1360, %v1358
      %v1459 = vpack.c.b16 %v1361, %v1359
      %v1460 = vpack.c.b16 %v1364, %v1362
      %v1461 = vpack.c.b16 %v1365, %v1363
      %1558 = vmatprep.subr.bf16.mxu0 %v1367
      %1559 = vmatpush1.bf16.msra.mxu0 %v1366
      %1560 = vmatprep.subr.bf16.mxu0 %v1369
      %1561 = vmatpush1.bf16.msra.mxu0 %v1368
      %1562 = vmatprep.subr.bf16.mxu0 %v1371
      %1563 = vmatpush1.bf16.msra.mxu0 %v1370
      %1564 = vmatprep.subr.bf16.mxu0 %v1373
      %1565 = vmatpush1.bf16.msra.mxu0 %v1372
      %1566 = vmatprep.subr.bf16.mxu0 %v1375
      %1567 = vmatpush1.bf16.msra.mxu0 %v1374
      %1568 = vmatprep.subr.bf16.mxu0 %v1377
      %1569 = vmatpush1.bf16.msra.mxu0 %v1376
      %1570 = vmatprep.subr.bf16.mxu0 %v1379
      %1571 = vmatpush1.bf16.msra.mxu0 %v1378
      %1572 = vmatprep.subr.bf16.mxu0 %v1381
      %1573 = vmatpush1.bf16.msra.mxu0 %v1380
      %1574 = vmatprep.subr.bf16.mxu0 %v1383
      %1575 = vmatpush1.bf16.msra.mxu0 %v1382
      %1576 = vmatprep.subr.bf16.mxu0 %v1385
      %1577 = vmatpush1.bf16.msra.mxu0 %v1384
      %1578 = vmatprep.subr.bf16.mxu0 %v1387
      %1579 = vmatpush1.bf16.msra.mxu0 %v1386
      %1580 = vmatprep.subr.bf16.mxu0 %v1389
      %1581 = vmatpush1.bf16.msra.mxu0 %v1388
      %1582 = vmatprep.subr.bf16.mxu0 %v1391
      %1583 = vmatpush1.bf16.msra.mxu0 %v1390
      %1584 = vmatprep.subr.bf16.mxu0 %v1393
      %1585 = vmatpush1.bf16.msra.mxu0 %v1392
      %1586 = vmatprep.subr.bf16.mxu0 %v1395
      %1587 = vmatpush1.bf16.msra.mxu0 %v1394
      %1588 = vmatprep.subr.bf16.mxu0 %v1397
      %1589 = vmatpush1.bf16.msra.mxu0 %v1396
      %1590 = vmatprep.mubr.bf16.mxu0 %v977
      %1591 = vmatmul.mubr.bf16.gmra.mrb[0].mxu0 %v976
      %v1592 = vpop.f32.mrb[0].mxu0
      %v1593 = vadd.f32 0.0, %v1592
      %v1594 = vpop.f32.mrb[0].mxu0
      %v1595 = vadd.f32 0.0, %v1594
      %v1596 = vpop.f32.mrb[0].mxu0
      %v1597 = vadd.f32 0.0, %v1596
      %v1598 = vpop.f32.mrb[0].mxu0
      %v1599 = vadd.f32 0.0, %v1598
      %1600 = vdwg.mxu0
      %1601 = vmatprep.subr.bf16.mxu0 %v1399
      %1602 = vmatpush1.bf16.msra.mxu0 %v1398
      %1603 = vmatprep.subr.bf16.mxu0 %v1401
      %1604 = vmatpush1.bf16.msra.mxu0 %v1400
      %1605 = vmatprep.subr.bf16.mxu0 %v1403
      %1606 = vmatpush1.bf16.msra.mxu0 %v1402
      %1607 = vmatprep.subr.bf16.mxu0 %v1405
      %1608 = vmatpush1.bf16.msra.mxu0 %v1404
      %1609 = vmatprep.subr.bf16.mxu0 %v1407
      %1610 = vmatpush1.bf16.msra.mxu0 %v1406
      %1611 = vmatprep.subr.bf16.mxu0 %v1409
      %1612 = vmatpush1.bf16.msra.mxu0 %v1408
      %1613 = vmatprep.subr.bf16.mxu0 %v1411
      %1614 = vmatpush1.bf16.msra.mxu0 %v1410
      %1615 = vmatprep.subr.bf16.mxu0 %v1413
      %1616 = vmatpush1.bf16.msra.mxu0 %v1412
      %1617 = vmatprep.subr.bf16.mxu0 %v1415
      %1618 = vmatpush1.bf16.msra.mxu0 %v1414
      %1619 = vmatprep.subr.bf16.mxu0 %v1417
      %1620 = vmatpush1.bf16.msra.mxu0 %v1416
      %1621 = vmatprep.subr.bf16.mxu0 %v1419
      %1622 = vmatpush1.bf16.msra.mxu0 %v1418
      %1623 = vmatprep.subr.bf16.mxu0 %v1421
      %1624 = vmatpush1.bf16.msra.mxu0 %v1420
      %1625 = vmatprep.subr.bf16.mxu0 %v1423
      %1626 = vmatpush1.bf16.msra.mxu0 %v1422
      %1627 = vmatprep.subr.bf16.mxu0 %v1425
      %1628 = vmatpush1.bf16.msra.mxu0 %v1424
      %1629 = vmatprep.subr.bf16.mxu0 %v1427
      %1630 = vmatpush1.bf16.msra.mxu0 %v1426
      %1631 = vmatprep.subr.bf16.mxu0 %v1429
      %1632 = vmatpush1.bf16.msra.mxu0 %v1428
      %1633 = vmatprep.mubr.bf16.mxu0 %v979
      %1634 = vmatmul.mubr.bf16.gmra.mrb[0].mxu0 %v978
      %v1635 = vpop.f32.mrb[0].mxu0
      %v1636 = vadd.f32 %v1593, %v1635
      %v1637 = vpop.f32.mrb[0].mxu0
      %v1638 = vadd.f32 %v1595, %v1637
      %v1639 = vpop.f32.mrb[0].mxu0
      %v1640 = vadd.f32 %v1597, %v1639
      %v1641 = vpop.f32.mrb[0].mxu0
      %v1642 = vadd.f32 %v1599, %v1641
      %1643 = vdwg.mxu0
      %1644 = vmatprep.subr.bf16.mxu0 %v1431
      %1645 = vmatpush1.bf16.msra.mxu0 %v1430
      %1646 = vmatprep.subr.bf16.mxu0 %v1433
      %1647 = vmatpush1.bf16.msra.mxu0 %v1432
      %1648 = vmatprep.subr.bf16.mxu0 %v1435
      %1649 = vmatpush1.bf16.msra.mxu0 %v1434
      %1650 = vmatprep.subr.bf16.mxu0 %v1437
      %1651 = vmatpush1.bf16.msra.mxu0 %v1436
      %1652 = vmatprep.subr.bf16.mxu0 %v1439
      %1653 = vmatpush1.bf16.msra.mxu0 %v1438
      %1654 = vmatprep.subr.bf16.mxu0 %v1441
      %1655 = vmatpush1.bf16.msra.mxu0 %v1440
      %1656 = vmatprep.subr.bf16.mxu0 %v1443
      %1657 = vmatpush1.bf16.msra.mxu0 %v1442
      %1658 = vmatprep.subr.bf16.mxu0 %v1445
      %1659 = vmatpush1.bf16.msra.mxu0 %v1444
      %1660 = vmatprep.subr.bf16.mxu0 %v1447
      %1661 = vmatpush1.bf16.msra.mxu0 %v1446
      %1662 = vmatprep.subr.bf16.mxu0 %v1449
      %1663 = vmatpush1.bf16.msra.mxu0 %v1448
      %1664 = vmatprep.subr.bf16.mxu0 %v1451
      %1665 = vmatpush1.bf16.msra.mxu0 %v1450
      %1666 = vmatprep.subr.bf16.mxu0 %v1453
      %1667 = vmatpush1.bf16.msra.mxu0 %v1452
      %1668 = vmatprep.subr.bf16.mxu0 %v1455
      %1669 = vmatpush1.bf16.msra.mxu0 %v1454
      %1670 = vmatprep.subr.bf16.mxu0 %v1457
      %1671 = vmatpush1.bf16.msra.mxu0 %v1456
      %1672 = vmatprep.subr.bf16.mxu0 %v1459
      %1673 = vmatpush1.bf16.msra.mxu0 %v1458
      %1674 = vmatprep.subr.bf16.mxu0 %v1461
      %1675 = vmatpush1.bf16.msra.mxu0 %v1460
      %1676 = vmatprep.mubr.bf16.mxu0 %v981
      %1677 = vmatmul.mubr.bf16.gmra.mrb[0].mxu0 %v980
      %v1678 = vpop.f32.mrb[0].mxu0
      %v1679 = vadd.f32 %v1636, %v1678
      %v1680 = vpop.f32.mrb[0].mxu0
      %v1681 = vadd.f32 %v1638, %v1680
      %v1682 = vpop.f32.mrb[0].mxu0
      %v1683 = vadd.f32 %v1640, %v1682
      %v1684 = vpop.f32.mrb[0].mxu0
      %v1685 = vadd.f32 %v1642, %v1684
      %1686 = vdwg.mxu0
      %s1687 = scalar_lea.vmem %s3, 1
      %v1688 = vld [vmem:[%s1687] ss:$8 sm:$0x3]
      %v1690 = vlaneseq
      %v1691 = vshrl.u32 %v1690, 7
      %v1692 = vsub.s32 0, %v1691
      %v1693 = vrot.slane %v1688, %v1692
      %v1694 = vlaneseq
      %v1695 = vshrl.u32 %v1694, 7
      %v1696 = vsub.s32 1, %v1695
      %v1697 = vrot.slane %v1688, %v1696
      %v1700 = vmul.f32 %v1679, %v1693
      %v1701 = vmul.f32 %v1681, %v1697
      %v1702 = vmul.f32 %v1683, %v1693
      %v1703 = vmul.f32 %v1685, %v1697
      %s1704 = scalar_lea.vmem %s4, 1
      %v1705 = vld [vmem:[%s1704] ss:$8 sm:$0x3]
      %v1707 = vlaneseq
      %v1708 = vshrl.u32 %v1707, 7
      %v1709 = vsub.s32 0, %v1708
      %v1710 = vrot.slane %v1705, %v1709
      %v1711 = vlaneseq
      %v1712 = vshrl.u32 %v1711, 7
      %v1713 = vsub.s32 1, %v1712
      %v1714 = vrot.slane %v1705, %v1713
      %v1717 = vadd.f32 %v1700, %v1710
      %v1718 = vadd.f32 %v1701, %v1714
      %v1719 = vadd.f32 %v1702, %v1710
      %v1720 = vadd.f32 %v1703, %v1714
      %v1721 = vmax.f32 %v1717, 0.0
      %v1722 = vmax.f32 %v1718, 0.0
      %v1723 = vmax.f32 %v1719, 0.0
      %v1724 = vmax.f32 %v1720, 0.0
      %v1725 = vsel %vm945, %v1721, 0.0
      %v1726 = vsel %vm945, %v1722, 0.0
      %v1727 = vsel %vm946, %v1723, 0.0
      %v1728 = vsel %vm946, %v1724, 0.0
      %v1733 = vrot.slane %v1725, 7
      %v1734 = vrot.slane %v1726, 7
      %v1735 = vrot.slane %v1727, 7
      %v1736 = vsel %vm423, %v1733, %v1735
      %v1737 = vrot.slane %v1728, 7
      %v1738 = vsel %vm423, %v1734, %v1737
      %v1743 = vsel %vm423, 0.0, %v1733
      %v1744 = vsel %vm423, 0.0, %v1734
      %v1745 = vrot.slane %v1725, 1
      %v1746 = vrot.slane %v1727, 1
      %v1747 = vsel %vm963, %v1745, %v1746
      %v1748 = vrot.slane %v1726, 1
      %v1749 = vrot.slane %v1728, 1
      %v1750 = vsel %vm963, %v1748, %v1749
      %v1755 = vsel %vm963, %v1746, 0.0
      %v1756 = vsel %vm963, %v1749, 0.0
      %v1757 = vpack.c.bf16 %v1736, %v1743
      %v1758 = vpack.c.bf16 %v1738, %v1744
      %v1759 = vpack.c.bf16 %v1727, %v1725
      %v1760 = vpack.c.bf16 %v1728, %v1726
      %v1761 = vpack.c.bf16 %v1755, %v1747
      %v1762 = vpack.c.bf16 %v1756, %v1750
      %s1763 = scalar_lea.vmem %s2, 768
      %v1764 = vld [vmem:[%s1763] sm:$0xff]
      %v1765 = vld [vmem:[%s1763 + $0x8] sm:$0xff]
      %v1766 = vld [vmem:[%s1763 + $0x10] sm:$0xff]
      %v1767 = vld [vmem:[%s1763 + $0x18] sm:$0xff]
      %v1768 = vld [vmem:[%s1763 + $0x20] sm:$0xff]
      %v1769 = vld [vmem:[%s1763 + $0x28] sm:$0xff]
      %v1770 = vld [vmem:[%s1763 + $0x30] sm:$0xff]
      %v1771 = vld [vmem:[%s1763 + $0x38] sm:$0xff]
      %v1772 = vld [vmem:[%s1763 + $0x40] sm:$0xff]
      %v1773 = vld [vmem:[%s1763 + $0x48] sm:$0xff]
      %v1774 = vld [vmem:[%s1763 + $0x50] sm:$0xff]
      %v1775 = vld [vmem:[%s1763 + $0x58] sm:$0xff]
      %v1776 = vld [vmem:[%s1763 + $0x60] sm:$0xff]
      %v1777 = vld [vmem:[%s1763 + $0x68] sm:$0xff]
      %v1778 = vld [vmem:[%s1763 + $0x70] sm:$0xff]
      %v1779 = vld [vmem:[%s1763 + $0x78] sm:$0xff]
      %v1780 = vld [vmem:[%s1763 + $0x80] sm:$0xff]
      %v1781 = vld [vmem:[%s1763 + $0x88] sm:$0xff]
      %v1782 = vld [vmem:[%s1763 + $0x90] sm:$0xff]
      %v1783 = vld [vmem:[%s1763 + $0x98] sm:$0xff]
      %v1784 = vld [vmem:[%s1763 + $0xa0] sm:$0xff]
      %v1785 = vld [vmem:[%s1763 + $0xa8] sm:$0xff]
      %v1786 = vld [vmem:[%s1763 + $0xb0] sm:$0xff]
      %v1787 = vld [vmem:[%s1763 + $0xb8] sm:$0xff]
      %v1788 = vld [vmem:[%s1763 + $0xc0] sm:$0xff]
      %v1789 = vld [vmem:[%s1763 + $0xc8] sm:$0xff]
      %v1790 = vld [vmem:[%s1763 + $0xd0] sm:$0xff]
      %v1791 = vld [vmem:[%s1763 + $0xd8] sm:$0xff]
      %v1792 = vld [vmem:[%s1763 + $0xe0] sm:$0xff]
      %v1793 = vld [vmem:[%s1763 + $0xe8] sm:$0xff]
      %v1794 = vld [vmem:[%s1763 + $0xf0] sm:$0xff]
      %v1795 = vld [vmem:[%s1763 + $0xf8] sm:$0xff]
      %v1796 = vld [vmem:[%s1763 + $0x100] sm:$0xff]
      %v1797 = vld [vmem:[%s1763 + $0x108] sm:$0xff]
      %v1798 = vld [vmem:[%s1763 + $0x110] sm:$0xff]
      %v1799 = vld [vmem:[%s1763 + $0x118] sm:$0xff]
      %v1800 = vld [vmem:[%s1763 + $0x120] sm:$0xff]
      %v1801 = vld [vmem:[%s1763 + $0x128] sm:$0xff]
      %v1802 = vld [vmem:[%s1763 + $0x130] sm:$0xff]
      %v1803 = vld [vmem:[%s1763 + $0x138] sm:$0xff]
      %v1804 = vld [vmem:[%s1763 + $0x140] sm:$0xff]
      %v1805 = vld [vmem:[%s1763 + $0x148] sm:$0xff]
      %v1806 = vld [vmem:[%s1763 + $0x150] sm:$0xff]
      %v1807 = vld [vmem:[%s1763 + $0x158] sm:$0xff]
      %v1808 = vld [vmem:[%s1763 + $0x160] sm:$0xff]
      %v1809 = vld [vmem:[%s1763 + $0x168] sm:$0xff]
      %v1810 = vld [vmem:[%s1763 + $0x170] sm:$0xff]
      %v1811 = vld [vmem:[%s1763 + $0x178] sm:$0xff]
      %v1812 = vld [vmem:[%s1763 + $0x180] sm:$0xff]
      %v1813 = vld [vmem:[%s1763 + $0x188] sm:$0xff]
      %v1814 = vld [vmem:[%s1763 + $0x190] sm:$0xff]
      %v1815 = vld [vmem:[%s1763 + $0x198] sm:$0xff]
      %v1816 = vld [vmem:[%s1763 + $0x1a0] sm:$0xff]
      %v1817 = vld [vmem:[%s1763 + $0x1a8] sm:$0xff]
      %v1818 = vld [vmem:[%s1763 + $0x1b0] sm:$0xff]
      %v1819 = vld [vmem:[%s1763 + $0x1b8] sm:$0xff]
      %v1820 = vld [vmem:[%s1763 + $0x1c0] sm:$0xff]
      %v1821 = vld [vmem:[%s1763 + $0x1c8] sm:$0xff]
      %v1822 = vld [vmem:[%s1763 + $0x1d0] sm:$0xff]
      %v1823 = vld [vmem:[%s1763 + $0x1d8] sm:$0xff]
      %v1824 = vld [vmem:[%s1763 + $0x1e0] sm:$0xff]
      %v1825 = vld [vmem:[%s1763 + $0x1e8] sm:$0xff]
      %v1826 = vld [vmem:[%s1763 + $0x1f0] sm:$0xff]
      %v1827 = vld [vmem:[%s1763 + $0x1f8] sm:$0xff]
      %v1828 = vld [vmem:[%s1763 + $0x200] sm:$0xff]
      %v1829 = vld [vmem:[%s1763 + $0x208] sm:$0xff]
      %v1830 = vld [vmem:[%s1763 + $0x210] sm:$0xff]
      %v1831 = vld [vmem:[%s1763 + $0x218] sm:$0xff]
      %v1832 = vld [vmem:[%s1763 + $0x220] sm:$0xff]
      %v1833 = vld [vmem:[%s1763 + $0x228] sm:$0xff]
      %v1834 = vld [vmem:[%s1763 + $0x230] sm:$0xff]
      %v1835 = vld [vmem:[%s1763 + $0x238] sm:$0xff]
      %v1836 = vld [vmem:[%s1763 + $0x240] sm:$0xff]
      %v1837 = vld [vmem:[%s1763 + $0x248] sm:$0xff]
      %v1838 = vld [vmem:[%s1763 + $0x250] sm:$0xff]
      %v1839 = vld [vmem:[%s1763 + $0x258] sm:$0xff]
      %v1840 = vld [vmem:[%s1763 + $0x260] sm:$0xff]
      %v1841 = vld [vmem:[%s1763 + $0x268] sm:$0xff]
      %v1842 = vld [vmem:[%s1763 + $0x270] sm:$0xff]
      %v1843 = vld [vmem:[%s1763 + $0x278] sm:$0xff]
      %v1844 = vld [vmem:[%s1763 + $0x280] sm:$0xff]
      %v1845 = vld [vmem:[%s1763 + $0x288] sm:$0xff]
      %v1846 = vld [vmem:[%s1763 + $0x290] sm:$0xff]
      %v1847 = vld [vmem:[%s1763 + $0x298] sm:$0xff]
      %v1848 = vld [vmem:[%s1763 + $0x2a0] sm:$0xff]
      %v1849 = vld [vmem:[%s1763 + $0x2a8] sm:$0xff]
      %v1850 = vld [vmem:[%s1763 + $0x2b0] sm:$0xff]
      %v1851 = vld [vmem:[%s1763 + $0x2b8] sm:$0xff]
      %v1852 = vld [vmem:[%s1763 + $0x2c0] sm:$0xff]
      %v1853 = vld [vmem:[%s1763 + $0x2c8] sm:$0xff]
      %v1854 = vld [vmem:[%s1763 + $0x2d0] sm:$0xff]
      %v1855 = vld [vmem:[%s1763 + $0x2d8] sm:$0xff]
      %v1856 = vld [vmem:[%s1763 + $0x2e0] sm:$0xff]
      %v1857 = vld [vmem:[%s1763 + $0x2e8] sm:$0xff]
      %v1858 = vld [vmem:[%s1763 + $0x2f0] sm:$0xff]
      %v1859 = vld [vmem:[%s1763 + $0x2f8] sm:$0xff]
      %v1956 = vunpack.c.l.b16 %v1764
      %v1957 = vunpack.c.h.b16 %v1764
      %v1958 = vunpack.c.l.b16 %v1765
      %v1959 = vunpack.c.h.b16 %v1765
      %v1960 = vunpack.c.l.b16 %v1766
      %v1961 = vunpack.c.h.b16 %v1766
      %v1962 = vunpack.c.l.b16 %v1767
      %v1963 = vunpack.c.h.b16 %v1767
      %v1964 = vunpack.c.l.b16 %v1768
      %v1965 = vunpack.c.h.b16 %v1768
      %v1966 = vunpack.c.l.b16 %v1769
      %v1967 = vunpack.c.h.b16 %v1769
      %v1968 = vunpack.c.l.b16 %v1770
      %v1969 = vunpack.c.h.b16 %v1770
      %v1970 = vunpack.c.l.b16 %v1771
      %v1971 = vunpack.c.h.b16 %v1771
      %v1972 = vunpack.c.l.b16 %v1772
      %v1973 = vunpack.c.h.b16 %v1772
      %v1974 = vunpack.c.l.b16 %v1773
      %v1975 = vunpack.c.h.b16 %v1773
      %v1976 = vunpack.c.l.b16 %v1774
      %v1977 = vunpack.c.h.b16 %v1774
      %v1978 = vunpack.c.l.b16 %v1775
      %v1979 = vunpack.c.h.b16 %v1775
      %v1980 = vunpack.c.l.b16 %v1776
      %v1981 = vunpack.c.h.b16 %v1776
      %v1982 = vunpack.c.l.b16 %v1777
      %v1983 = vunpack.c.h.b16 %v1777
      %v1984 = vunpack.c.l.b16 %v1778
      %v1985 = vunpack.c.h.b16 %v1778
      %v1986 = vunpack.c.l.b16 %v1779
      %v1987 = vunpack.c.h.b16 %v1779
      %v1988 = vunpack.c.l.b16 %v1780
      %v1989 = vunpack.c.h.b16 %v1780
      %v1990 = vunpack.c.l.b16 %v1781
      %v1991 = vunpack.c.h.b16 %v1781
      %v1992 = vunpack.c.l.b16 %v1782
      %v1993 = vunpack.c.h.b16 %v1782
      %v1994 = vunpack.c.l.b16 %v1783
      %v1995 = vunpack.c.h.b16 %v1783
      %v1996 = vunpack.c.l.b16 %v1784
      %v1997 = vunpack.c.h.b16 %v1784
      %v1998 = vunpack.c.l.b16 %v1785
      %v1999 = vunpack.c.h.b16 %v1785
      %v2000 = vunpack.c.l.b16 %v1786
      %v2001 = vunpack.c.h.b16 %v1786
      %v2002 = vunpack.c.l.b16 %v1787
      %v2003 = vunpack.c.h.b16 %v1787
      %v2004 = vunpack.c.l.b16 %v1788
      %v2005 = vunpack.c.h.b16 %v1788
      %v2006 = vunpack.c.l.b16 %v1789
      %v2007 = vunpack.c.h.b16 %v1789
      %v2008 = vunpack.c.l.b16 %v1790
      %v2009 = vunpack.c.h.b16 %v1790
      %v2010 = vunpack.c.l.b16 %v1791
      %v2011 = vunpack.c.h.b16 %v1791
      %v2012 = vunpack.c.l.b16 %v1792
      %v2013 = vunpack.c.h.b16 %v1792
      %v2014 = vunpack.c.l.b16 %v1793
      %v2015 = vunpack.c.h.b16 %v1793
      %v2016 = vunpack.c.l.b16 %v1794
      %v2017 = vunpack.c.h.b16 %v1794
      %v2018 = vunpack.c.l.b16 %v1795
      %v2019 = vunpack.c.h.b16 %v1795
      %v2020 = vunpack.c.l.b16 %v1796
      %v2021 = vunpack.c.h.b16 %v1796
      %v2022 = vunpack.c.l.b16 %v1797
      %v2023 = vunpack.c.h.b16 %v1797
      %v2024 = vunpack.c.l.b16 %v1798
      %v2025 = vunpack.c.h.b16 %v1798
      %v2026 = vunpack.c.l.b16 %v1799
      %v2027 = vunpack.c.h.b16 %v1799
      %v2028 = vunpack.c.l.b16 %v1800
      %v2029 = vunpack.c.h.b16 %v1800
      %v2030 = vunpack.c.l.b16 %v1801
      %v2031 = vunpack.c.h.b16 %v1801
      %v2032 = vunpack.c.l.b16 %v1802
      %v2033 = vunpack.c.h.b16 %v1802
      %v2034 = vunpack.c.l.b16 %v1803
      %v2035 = vunpack.c.h.b16 %v1803
      %v2036 = vunpack.c.l.b16 %v1804
      %v2037 = vunpack.c.h.b16 %v1804
      %v2038 = vunpack.c.l.b16 %v1805
      %v2039 = vunpack.c.h.b16 %v1805
      %v2040 = vunpack.c.l.b16 %v1806
      %v2041 = vunpack.c.h.b16 %v1806
      %v2042 = vunpack.c.l.b16 %v1807
      %v2043 = vunpack.c.h.b16 %v1807
      %v2044 = vunpack.c.l.b16 %v1808
      %v2045 = vunpack.c.h.b16 %v1808
      %v2046 = vunpack.c.l.b16 %v1809
      %v2047 = vunpack.c.h.b16 %v1809
      %v2048 = vunpack.c.l.b16 %v1810
      %v2049 = vunpack.c.h.b16 %v1810
      %v2050 = vunpack.c.l.b16 %v1811
      %v2051 = vunpack.c.h.b16 %v1811
      %v2052 = vunpack.c.l.b16 %v1812
      %v2053 = vunpack.c.h.b16 %v1812
      %v2054 = vunpack.c.l.b16 %v1813
      %v2055 = vunpack.c.h.b16 %v1813
      %v2056 = vunpack.c.l.b16 %v1814
      %v2057 = vunpack.c.h.b16 %v1814
      %v2058 = vunpack.c.l.b16 %v1815
      %v2059 = vunpack.c.h.b16 %v1815
      %v2060 = vunpack.c.l.b16 %v1816
      %v2061 = vunpack.c.h.b16 %v1816
      %v2062 = vunpack.c.l.b16 %v1817
      %v2063 = vunpack.c.h.b16 %v1817
      %v2064 = vunpack.c.l.b16 %v1818
      %v2065 = vunpack.c.h.b16 %v1818
      %v2066 = vunpack.c.l.b16 %v1819
      %v2067 = vunpack.c.h.b16 %v1819
      %v2068 = vunpack.c.l.b16 %v1820
      %v2069 = vunpack.c.h.b16 %v1820
      %v2070 = vunpack.c.l.b16 %v1821
      %v2071 = vunpack.c.h.b16 %v1821
      %v2072 = vunpack.c.l.b16 %v1822
      %v2073 = vunpack.c.h.b16 %v1822
      %v2074 = vunpack.c.l.b16 %v1823
      %v2075 = vunpack.c.h.b16 %v1823
      %v2076 = vunpack.c.l.b16 %v1824
      %v2077 = vunpack.c.h.b16 %v1824
      %v2078 = vunpack.c.l.b16 %v1825
      %v2079 = vunpack.c.h.b16 %v1825
      %v2080 = vunpack.c.l.b16 %v1826
      %v2081 = vunpack.c.h.b16 %v1826
      %v2082 = vunpack.c.l.b16 %v1827
      %v2083 = vunpack.c.h.b16 %v1827
      %v2084 = vunpack.c.l.b16 %v1828
      %v2085 = vunpack.c.h.b16 %v1828
      %v2086 = vunpack.c.l.b16 %v1829
      %v2087 = vunpack.c.h.b16 %v1829
      %v2088 = vunpack.c.l.b16 %v1830
      %v2089 = vunpack.c.h.b16 %v1830
      %v2090 = vunpack.c.l.b16 %v1831
      %v2091 = vunpack.c.h.b16 %v1831
      %v2092 = vunpack.c.l.b16 %v1832
      %v2093 = vunpack.c.h.b16 %v1832
      %v2094 = vunpack.c.l.b16 %v1833
      %v2095 = vunpack.c.h.b16 %v1833
      %v2096 = vunpack.c.l.b16 %v1834
      %v2097 = vunpack.c.h.b16 %v1834
      %v2098 = vunpack.c.l.b16 %v1835
      %v2099 = vunpack.c.h.b16 %v1835
      %v2100 = vunpack.c.l.b16 %v1836
      %v2101 = vunpack.c.h.b16 %v1836
      %v2102 = vunpack.c.l.b16 %v1837
      %v2103 = vunpack.c.h.b16 %v1837
      %v2104 = vunpack.c.l.b16 %v1838
      %v2105 = vunpack.c.h.b16 %v1838
      %v2106 = vunpack.c.l.b16 %v1839
      %v2107 = vunpack.c.h.b16 %v1839
      %v2108 = vunpack.c.l.b16 %v1840
      %v2109 = vunpack.c.h.b16 %v1840
      %v2110 = vunpack.c.l.b16 %v1841
      %v2111 = vunpack.c.h.b16 %v1841
      %v2112 = vunpack.c.l.b16 %v1842
      %v2113 = vunpack.c.h.b16 %v1842
      %v2114 = vunpack.c.l.b16 %v1843
      %v2115 = vunpack.c.h.b16 %v1843
      %v2116 = vunpack.c.l.b16 %v1844
      %v2117 = vunpack.c.h.b16 %v1844
      %v2118 = vunpack.c.l.b16 %v1845
      %v2119 = vunpack.c.h.b16 %v1845
      %v2120 = vunpack.c.l.b16 %v1846
      %v2121 = vunpack.c.h.b16 %v1846
      %v2122 = vunpack.c.l.b16 %v1847
      %v2123 = vunpack.c.h.b16 %v1847
      %v2124 = vunpack.c.l.b16 %v1848
      %v2125 = vunpack.c.h.b16 %v1848
      %v2126 = vunpack.c.l.b16 %v1849
      %v2127 = vunpack.c.h.b16 %v1849
      %v2128 = vunpack.c.l.b16 %v1850
      %v2129 = vunpack.c.h.b16 %v1850
      %v2130 = vunpack.c.l.b16 %v1851
      %v2131 = vunpack.c.h.b16 %v1851
      %v2132 = vunpack.c.l.b16 %v1852
      %v2133 = vunpack.c.h.b16 %v1852
      %v2134 = vunpack.c.l.b16 %v1853
      %v2135 = vunpack.c.h.b16 %v1853
      %v2136 = vunpack.c.l.b16 %v1854
      %v2137 = vunpack.c.h.b16 %v1854
      %v2138 = vunpack.c.l.b16 %v1855
      %v2139 = vunpack.c.h.b16 %v1855
      %v2140 = vunpack.c.l.b16 %v1856
      %v2141 = vunpack.c.h.b16 %v1856
      %v2142 = vunpack.c.l.b16 %v1857
      %v2143 = vunpack.c.h.b16 %v1857
      %v2144 = vunpack.c.l.b16 %v1858
      %v2145 = vunpack.c.h.b16 %v1858
      %v2146 = vunpack.c.l.b16 %v1859
      %v2147 = vunpack.c.h.b16 %v1859
      %v2148 = vpack.c.b16 %v1958, %v1956
      %v2149 = vpack.c.b16 %v1959, %v1957
      %v2150 = vpack.c.b16 %v1962, %v1960
      %v2151 = vpack.c.b16 %v1963, %v1961
      %v2152 = vpack.c.b16 %v1966, %v1964
      %v2153 = vpack.c.b16 %v1967, %v1965
      %v2154 = vpack.c.b16 %v1970, %v1968
      %v2155 = vpack.c.b16 %v1971, %v1969
      %v2156 = vpack.c.b16 %v1974, %v1972
      %v2157 = vpack.c.b16 %v1975, %v1973
      %v2158 = vpack.c.b16 %v1978, %v1976
      %v2159 = vpack.c.b16 %v1979, %v1977
      %v2160 = vpack.c.b16 %v1982, %v1980
      %v2161 = vpack.c.b16 %v1983, %v1981
      %v2162 = vpack.c.b16 %v1986, %v1984
      %v2163 = vpack.c.b16 %v1987, %v1985
      %v2164 = vpack.c.b16 %v1990, %v1988
      %v2165 = vpack.c.b16 %v1991, %v1989
      %v2166 = vpack.c.b16 %v1994, %v1992
      %v2167 = vpack.c.b16 %v1995, %v1993
      %v2168 = vpack.c.b16 %v1998, %v1996
      %v2169 = vpack.c.b16 %v1999, %v1997
      %v2170 = vpack.c.b16 %v2002, %v2000
      %v2171 = vpack.c.b16 %v2003, %v2001
      %v2172 = vpack.c.b16 %v2006, %v2004
      %v2173 = vpack.c.b16 %v2007, %v2005
      %v2174 = vpack.c.b16 %v2010, %v2008
      %v2175 = vpack.c.b16 %v2011, %v2009
      %v2176 = vpack.c.b16 %v2014, %v2012
      %v2177 = vpack.c.b16 %v2015, %v2013
      %v2178 = vpack.c.b16 %v2018, %v2016
      %v2179 = vpack.c.b16 %v2019, %v2017
      %v2180 = vpack.c.b16 %v2022, %v2020
      %v2181 = vpack.c.b16 %v2023, %v2021
      %v2182 = vpack.c.b16 %v2026, %v2024
      %v2183 = vpack.c.b16 %v2027, %v2025
      %v2184 = vpack.c.b16 %v2030, %v2028
      %v2185 = vpack.c.b16 %v2031, %v2029
      %v2186 = vpack.c.b16 %v2034, %v2032
      %v2187 = vpack.c.b16 %v2035, %v2033
      %v2188 = vpack.c.b16 %v2038, %v2036
      %v2189 = vpack.c.b16 %v2039, %v2037
      %v2190 = vpack.c.b16 %v2042, %v2040
      %v2191 = vpack.c.b16 %v2043, %v2041
      %v2192 = vpack.c.b16 %v2046, %v2044
      %v2193 = vpack.c.b16 %v2047, %v2045
      %v2194 = vpack.c.b16 %v2050, %v2048
      %v2195 = vpack.c.b16 %v2051, %v2049
      %v2196 = vpack.c.b16 %v2054, %v2052
      %v2197 = vpack.c.b16 %v2055, %v2053
      %v2198 = vpack.c.b16 %v2058, %v2056
      %v2199 = vpack.c.b16 %v2059, %v2057
      %v2200 = vpack.c.b16 %v2062, %v2060
      %v2201 = vpack.c.b16 %v2063, %v2061
      %v2202 = vpack.c.b16 %v2066, %v2064
      %v2203 = vpack.c.b16 %v2067, %v2065
      %v2204 = vpack.c.b16 %v2070, %v2068
      %v2205 = vpack.c.b16 %v2071, %v2069
      %v2206 = vpack.c.b16 %v2074, %v2072
      %v2207 = vpack.c.b16 %v2075, %v2073
      %v2208 = vpack.c.b16 %v2078, %v2076
      %v2209 = vpack.c.b16 %v2079, %v2077
      %v2210 = vpack.c.b16 %v2082, %v2080
      %v2211 = vpack.c.b16 %v2083, %v2081
      %v2212 = vpack.c.b16 %v2086, %v2084
      %v2213 = vpack.c.b16 %v2087, %v2085
      %v2214 = vpack.c.b16 %v2090, %v2088
      %v2215 = vpack.c.b16 %v2091, %v2089
      %v2216 = vpack.c.b16 %v2094, %v2092
      %v2217 = vpack.c.b16 %v2095, %v2093
      %v2218 = vpack.c.b16 %v2098, %v2096
      %v2219 = vpack.c.b16 %v2099, %v2097
      %v2220 = vpack.c.b16 %v2102, %v2100
      %v2221 = vpack.c.b16 %v2103, %v2101
      %v2222 = vpack.c.b16 %v2106, %v2104
      %v2223 = vpack.c.b16 %v2107, %v2105
      %v2224 = vpack.c.b16 %v2110, %v2108
      %v2225 = vpack.c.b16 %v2111, %v2109
      %v2226 = vpack.c.b16 %v2114, %v2112
      %v2227 = vpack.c.b16 %v2115, %v2113
      %v2228 = vpack.c.b16 %v2118, %v2116
      %v2229 = vpack.c.b16 %v2119, %v2117
      %v2230 = vpack.c.b16 %v2122, %v2120
      %v2231 = vpack.c.b16 %v2123, %v2121
      %v2232 = vpack.c.b16 %v2126, %v2124
      %v2233 = vpack.c.b16 %v2127, %v2125
      %v2234 = vpack.c.b16 %v2130, %v2128
      %v2235 = vpack.c.b16 %v2131, %v2129
      %v2236 = vpack.c.b16 %v2134, %v2132
      %v2237 = vpack.c.b16 %v2135, %v2133
      %v2238 = vpack.c.b16 %v2138, %v2136
      %v2239 = vpack.c.b16 %v2139, %v2137
      %v2240 = vpack.c.b16 %v2142, %v2140
      %v2241 = vpack.c.b16 %v2143, %v2141
      %v2242 = vpack.c.b16 %v2146, %v2144
      %v2243 = vpack.c.b16 %v2147, %v2145
      %2340 = vmatprep.subr.bf16.mxu0 %v2149
      %2341 = vmatpush1.bf16.msra.mxu0 %v2148
      %2342 = vmatprep.subr.bf16.mxu0 %v2151
      %2343 = vmatpush1.bf16.msra.mxu0 %v2150
      %2344 = vmatprep.subr.bf16.mxu0 %v2153
      %2345 = vmatpush1.bf16.msra.mxu0 %v2152
      %2346 = vmatprep.subr.bf16.mxu0 %v2155
      %2347 = vmatpush1.bf16.msra.mxu0 %v2154
      %2348 = vmatprep.subr.bf16.mxu0 %v2157
      %2349 = vmatpush1.bf16.msra.mxu0 %v2156
      %2350 = vmatprep.subr.bf16.mxu0 %v2159
      %2351 = vmatpush1.bf16.msra.mxu0 %v2158
      %2352 = vmatprep.subr.bf16.mxu0 %v2161
      %2353 = vmatpush1.bf16.msra.mxu0 %v2160
      %2354 = vmatprep.subr.bf16.mxu0 %v2163
      %2355 = vmatpush1.bf16.msra.mxu0 %v2162
      %2356 = vmatprep.subr.bf16.mxu0 %v2165
      %2357 = vmatpush1.bf16.msra.mxu0 %v2164
      %2358 = vmatprep.subr.bf16.mxu0 %v2167
      %2359 = vmatpush1.bf16.msra.mxu0 %v2166
      %2360 = vmatprep.subr.bf16.mxu0 %v2169
      %2361 = vmatpush1.bf16.msra.mxu0 %v2168
      %2362 = vmatprep.subr.bf16.mxu0 %v2171
      %2363 = vmatpush1.bf16.msra.mxu0 %v2170
      %2364 = vmatprep.subr.bf16.mxu0 %v2173
      %2365 = vmatpush1.bf16.msra.mxu0 %v2172
      %2366 = vmatprep.subr.bf16.mxu0 %v2175
      %2367 = vmatpush1.bf16.msra.mxu0 %v2174
      %2368 = vmatprep.subr.bf16.mxu0 %v2177
      %2369 = vmatpush1.bf16.msra.mxu0 %v2176
      %2370 = vmatprep.subr.bf16.mxu0 %v2179
      %2371 = vmatpush1.bf16.msra.mxu0 %v2178
      %2372 = vmatprep.mubr.bf16.mxu0 %v1758
      %2373 = vmatmul.mubr.bf16.gmra.mrb[0].mxu0 %v1757
      %v2374 = vpop.f32.mrb[0].mxu0
      %v2375 = vadd.f32 0.0, %v2374
      %v2376 = vpop.f32.mrb[0].mxu0
      %v2377 = vadd.f32 0.0, %v2376
      %v2378 = vpop.f32.mrb[0].mxu0
      %v2379 = vadd.f32 0.0, %v2378
      %v2380 = vpop.f32.mrb[0].mxu0
      %v2381 = vadd.f32 0.0, %v2380
      %2382 = vdwg.mxu0
      %2383 = vmatprep.subr.bf16.mxu0 %v2181
      %2384 = vmatpush1.bf16.msra.mxu0 %v2180
      %2385 = vmatprep.subr.bf16.mxu0 %v2183
      %2386 = vmatpush1.bf16.msra.mxu0 %v2182
      %2387 = vmatprep.subr.bf16.mxu0 %v2185
      %2388 = vmatpush1.bf16.msra.mxu0 %v2184
      %2389 = vmatprep.subr.bf16.mxu0 %v2187
      %2390 = vmatpush1.bf16.msra.mxu0 %v2186
      %2391 = vmatprep.subr.bf16.mxu0 %v2189
      %2392 = vmatpush1.bf16.msra.mxu0 %v2188
      %2393 = vmatprep.subr.bf16.mxu0 %v2191
      %2394 = vmatpush1.bf16.msra.mxu0 %v2190
      %2395 = vmatprep.subr.bf16.mxu0 %v2193
      %2396 = vmatpush1.bf16.msra.mxu0 %v2192
      %2397 = vmatprep.subr.bf16.mxu0 %v2195
      %2398 = vmatpush1.bf16.msra.mxu0 %v2194
      %2399 = vmatprep.subr.bf16.mxu0 %v2197
      %2400 = vmatpush1.bf16.msra.mxu0 %v2196
      %2401 = vmatprep.subr.bf16.mxu0 %v2199
      %2402 = vmatpush1.bf16.msra.mxu0 %v2198
      %2403 = vmatprep.subr.bf16.mxu0 %v2201
      %2404 = vmatpush1.bf16.msra.mxu0 %v2200
      %2405 = vmatprep.subr.bf16.mxu0 %v2203
      %2406 = vmatpush1.bf16.msra.mxu0 %v2202
      %2407 = vmatprep.subr.bf16.mxu0 %v2205
      %2408 = vmatpush1.bf16.msra.mxu0 %v2204
      %2409 = vmatprep.subr.bf16.mxu0 %v2207
      %2410 = vmatpush1.bf16.msra.mxu0 %v2206
      %2411 = vmatprep.subr.bf16.mxu0 %v2209
      %2412 = vmatpush1.bf16.msra.mxu0 %v2208
      %2413 = vmatprep.subr.bf16.mxu0 %v2211
      %2414 = vmatpush1.bf16.msra.mxu0 %v2210
      %2415 = vmatprep.mubr.bf16.mxu0 %v1760
      %2416 = vmatmul.mubr.bf16.gmra.mrb[0].mxu0 %v1759
      %v2417 = vpop.f32.mrb[0].mxu0
      %v2418 = vadd.f32 %v2375, %v2417
      %v2419 = vpop.f32.mrb[0].mxu0
      %v2420 = vadd.f32 %v2377, %v2419
      %v2421 = vpop.f32.mrb[0].mxu0
      %v2422 = vadd.f32 %v2379, %v2421
      %v2423 = vpop.f32.mrb[0].mxu0
      %v2424 = vadd.f32 %v2381, %v2423
      %2425 = vdwg.mxu0
      %2426 = vmatprep.subr.bf16.mxu0 %v2213
      %2427 = vmatpush1.bf16.msra.mxu0 %v2212
      %2428 = vmatprep.subr.bf16.mxu0 %v2215
      %2429 = vmatpush1.bf16.msra.mxu0 %v2214
      %2430 = vmatprep.subr.bf16.mxu0 %v2217
      %2431 = vmatpush1.bf16.msra.mxu0 %v2216
      %2432 = vmatprep.subr.bf16.mxu0 %v2219
      %2433 = vmatpush1.bf16.msra.mxu0 %v2218
      %2434 = vmatprep.subr.bf16.mxu0 %v2221
      %2435 = vmatpush1.bf16.msra.mxu0 %v2220
      %2436 = vmatprep.subr.bf16.mxu0 %v2223
      %2437 = vmatpush1.bf16.msra.mxu0 %v2222
      %2438 = vmatprep.subr.bf16.mxu0 %v2225
      %2439 = vmatpush1.bf16.msra.mxu0 %v2224
      %2440 = vmatprep.subr.bf16.mxu0 %v2227
      %2441 = vmatpush1.bf16.msra.mxu0 %v2226
      %2442 = vmatprep.subr.bf16.mxu0 %v2229
      %2443 = vmatpush1.bf16.msra.mxu0 %v2228
      %2444 = vmatprep.subr.bf16.mxu0 %v2231
      %2445 = vmatpush1.bf16.msra.mxu0 %v2230
      %2446 = vmatprep.subr.bf16.mxu0 %v2233
      %2447 = vmatpush1.bf16.msra.mxu0 %v2232
      %2448 = vmatprep.subr.bf16.mxu0 %v2235
      %2449 = vmatpush1.bf16.msra.mxu0 %v2234
      %2450 = vmatprep.subr.bf16.mxu0 %v2237
      %2451 = vmatpush1.bf16.msra.mxu0 %v2236
      %2452 = vmatprep.subr.bf16.mxu0 %v2239
      %2453 = vmatpush1.bf16.msra.mxu0 %v2238
      %2454 = vmatprep.subr.bf16.mxu0 %v2241
      %2455 = vmatpush1.bf16.msra.mxu0 %v2240
      %2456 = vmatprep.subr.bf16.mxu0 %v2243
      %2457 = vmatpush1.bf16.msra.mxu0 %v2242
      %2458 = vmatprep.mubr.bf16.mxu0 %v1762
      %2459 = vmatmul.mubr.bf16.gmra.mrb[0].mxu0 %v1761
      %v2460 = vpop.f32.mrb[0].mxu0
      %v2461 = vadd.f32 %v2418, %v2460
      %v2462 = vpop.f32.mrb[0].mxu0
      %v2463 = vadd.f32 %v2420, %v2462
      %v2464 = vpop.f32.mrb[0].mxu0
      %v2465 = vadd.f32 %v2422, %v2464
      %v2466 = vpop.f32.mrb[0].mxu0
      %v2467 = vadd.f32 %v2424, %v2466
      %2468 = vdwg.mxu0
      %s2469 = scalar_lea.vmem %s3, 2
      %v2470 = vld [vmem:[%s2469] ss:$8 sm:$0x3]
      %v2472 = vlaneseq
      %v2473 = vshrl.u32 %v2472, 7
      %v2474 = vsub.s32 0, %v2473
      %v2475 = vrot.slane %v2470, %v2474
      %v2476 = vlaneseq
      %v2477 = vshrl.u32 %v2476, 7
      %v2478 = vsub.s32 1, %v2477
      %v2479 = vrot.slane %v2470, %v2478
      %v2482 = vmul.f32 %v2461, %v2475
      %v2483 = vmul.f32 %v2463, %v2479
      %v2484 = vmul.f32 %v2465, %v2475
      %v2485 = vmul.f32 %v2467, %v2479
      %s2486 = scalar_lea.vmem %s4, 2
      %v2487 = vld [vmem:[%s2486] ss:$8 sm:$0x3]
      %v2489 = vlaneseq
      %v2490 = vshrl.u32 %v2489, 7
      %v2491 = vsub.s32 0, %v2490
      %v2492 = vrot.slane %v2487, %v2491
      %v2493 = vlaneseq
      %v2494 = vshrl.u32 %v2493, 7
      %v2495 = vsub.s32 1, %v2494
      %v2496 = vrot.slane %v2487, %v2495
      %v2499 = vadd.f32 %v2482, %v2492
      %v2500 = vadd.f32 %v2483, %v2496
      %v2501 = vadd.f32 %v2484, %v2492
      %v2502 = vadd.f32 %v2485, %v2496
      %v2503 = vadd.f32 %v2499, %v910
      %v2504 = vadd.f32 %v2500, %v911
      %v2505 = vadd.f32 %v2501, %v912
      %v2506 = vadd.f32 %v2502, %v913
      %v2507 = vmax.f32 %v2503, 0.0
      %v2508 = vmax.f32 %v2504, 0.0
      %v2509 = vmax.f32 %v2505, 0.0
      %v2510 = vmax.f32 %v2506, 0.0
      %v2511 = vsel %vm945, %v2507, 0.0
      %v2512 = vsel %vm945, %v2508, 0.0
      %v2513 = vsel %vm946, %v2509, 0.0
      %v2514 = vsel %vm946, %v2510, 0.0
      %v2519 = vrot.slane %v2511, 7
      %v2520 = vrot.slane %v2512, 7
      %v2521 = vrot.slane %v2513, 7
      %v2522 = vsel %vm423, %v2519, %v2521
      %v2523 = vrot.slane %v2514, 7
      %v2524 = vsel %vm423, %v2520, %v2523
      %v2529 = vsel %vm423, 0.0, %v2519
      %v2530 = vsel %vm423, 0.0, %v2520
      %v2531 = vrot.slane %v2511, 1
      %v2532 = vrot.slane %v2513, 1
      %v2533 = vsel %vm963, %v2531, %v2532
      %v2534 = vrot.slane %v2512, 1
      %v2535 = vrot.slane %v2514, 1
      %v2536 = vsel %vm963, %v2534, %v2535
      %v2541 = vsel %vm963, %v2532, 0.0
      %v2542 = vsel %vm963, %v2535, 0.0
      %v2543 = vpack.c.bf16 %v2522, %v2529
      %v2544 = vpack.c.bf16 %v2524, %v2530
      %v2545 = vpack.c.bf16 %v2513, %v2511
      %v2546 = vpack.c.bf16 %v2514, %v2512
      %v2547 = vpack.c.bf16 %v2541, %v2533
      %v2548 = vpack.c.bf16 %v2542, %v2536
      %s2549 = scalar_lea.vmem %s2, 1536
      %v2550 = vld [vmem:[%s2549] sm:$0xff]
      %v2551 = vld [vmem:[%s2549 + $0x8] sm:$0xff]
      %v2552 = vld [vmem:[%s2549 + $0x10] sm:$0xff]
      %v2553 = vld [vmem:[%s2549 + $0x18] sm:$0xff]
      %v2554 = vld [vmem:[%s2549 + $0x20] sm:$0xff]
      %v2555 = vld [vmem:[%s2549 + $0x28] sm:$0xff]
      %v2556 = vld [vmem:[%s2549 + $0x30] sm:$0xff]
      %v2557 = vld [vmem:[%s2549 + $0x38] sm:$0xff]
      %v2558 = vld [vmem:[%s2549 + $0x40] sm:$0xff]
      %v2559 = vld [vmem:[%s2549 + $0x48] sm:$0xff]
      %v2560 = vld [vmem:[%s2549 + $0x50] sm:$0xff]
      %v2561 = vld [vmem:[%s2549 + $0x58] sm:$0xff]
      %v2562 = vld [vmem:[%s2549 + $0x60] sm:$0xff]
      %v2563 = vld [vmem:[%s2549 + $0x68] sm:$0xff]
      %v2564 = vld [vmem:[%s2549 + $0x70] sm:$0xff]
      %v2565 = vld [vmem:[%s2549 + $0x78] sm:$0xff]
      %v2566 = vld [vmem:[%s2549 + $0x80] sm:$0xff]
      %v2567 = vld [vmem:[%s2549 + $0x88] sm:$0xff]
      %v2568 = vld [vmem:[%s2549 + $0x90] sm:$0xff]
      %v2569 = vld [vmem:[%s2549 + $0x98] sm:$0xff]
      %v2570 = vld [vmem:[%s2549 + $0xa0] sm:$0xff]
      %v2571 = vld [vmem:[%s2549 + $0xa8] sm:$0xff]
      %v2572 = vld [vmem:[%s2549 + $0xb0] sm:$0xff]
      %v2573 = vld [vmem:[%s2549 + $0xb8] sm:$0xff]
      %v2574 = vld [vmem:[%s2549 + $0xc0] sm:$0xff]
      %v2575 = vld [vmem:[%s2549 + $0xc8] sm:$0xff]
      %v2576 = vld [vmem:[%s2549 + $0xd0] sm:$0xff]
      %v2577 = vld [vmem:[%s2549 + $0xd8] sm:$0xff]
      %v2578 = vld [vmem:[%s2549 + $0xe0] sm:$0xff]
      %v2579 = vld [vmem:[%s2549 + $0xe8] sm:$0xff]
      %v2580 = vld [vmem:[%s2549 + $0xf0] sm:$0xff]
      %v2581 = vld [vmem:[%s2549 + $0xf8] sm:$0xff]
      %v2582 = vld [vmem:[%s2549 + $0x100] sm:$0xff]
      %v2583 = vld [vmem:[%s2549 + $0x108] sm:$0xff]
      %v2584 = vld [vmem:[%s2549 + $0x110] sm:$0xff]
      %v2585 = vld [vmem:[%s2549 + $0x118] sm:$0xff]
      %v2586 = vld [vmem:[%s2549 + $0x120] sm:$0xff]
      %v2587 = vld [vmem:[%s2549 + $0x128] sm:$0xff]
      %v2588 = vld [vmem:[%s2549 + $0x130] sm:$0xff]
      %v2589 = vld [vmem:[%s2549 + $0x138] sm:$0xff]
      %v2590 = vld [vmem:[%s2549 + $0x140] sm:$0xff]
      %v2591 = vld [vmem:[%s2549 + $0x148] sm:$0xff]
      %v2592 = vld [vmem:[%s2549 + $0x150] sm:$0xff]
      %v2593 = vld [vmem:[%s2549 + $0x158] sm:$0xff]
      %v2594 = vld [vmem:[%s2549 + $0x160] sm:$0xff]
      %v2595 = vld [vmem:[%s2549 + $0x168] sm:$0xff]
      %v2596 = vld [vmem:[%s2549 + $0x170] sm:$0xff]
      %v2597 = vld [vmem:[%s2549 + $0x178] sm:$0xff]
      %v2598 = vld [vmem:[%s2549 + $0x180] sm:$0xff]
      %v2599 = vld [vmem:[%s2549 + $0x188] sm:$0xff]
      %v2600 = vld [vmem:[%s2549 + $0x190] sm:$0xff]
      %v2601 = vld [vmem:[%s2549 + $0x198] sm:$0xff]
      %v2602 = vld [vmem:[%s2549 + $0x1a0] sm:$0xff]
      %v2603 = vld [vmem:[%s2549 + $0x1a8] sm:$0xff]
      %v2604 = vld [vmem:[%s2549 + $0x1b0] sm:$0xff]
      %v2605 = vld [vmem:[%s2549 + $0x1b8] sm:$0xff]
      %v2606 = vld [vmem:[%s2549 + $0x1c0] sm:$0xff]
      %v2607 = vld [vmem:[%s2549 + $0x1c8] sm:$0xff]
      %v2608 = vld [vmem:[%s2549 + $0x1d0] sm:$0xff]
      %v2609 = vld [vmem:[%s2549 + $0x1d8] sm:$0xff]
      %v2610 = vld [vmem:[%s2549 + $0x1e0] sm:$0xff]
      %v2611 = vld [vmem:[%s2549 + $0x1e8] sm:$0xff]
      %v2612 = vld [vmem:[%s2549 + $0x1f0] sm:$0xff]
      %v2613 = vld [vmem:[%s2549 + $0x1f8] sm:$0xff]
      %v2614 = vld [vmem:[%s2549 + $0x200] sm:$0xff]
      %v2615 = vld [vmem:[%s2549 + $0x208] sm:$0xff]
      %v2616 = vld [vmem:[%s2549 + $0x210] sm:$0xff]
      %v2617 = vld [vmem:[%s2549 + $0x218] sm:$0xff]
      %v2618 = vld [vmem:[%s2549 + $0x220] sm:$0xff]
      %v2619 = vld [vmem:[%s2549 + $0x228] sm:$0xff]
      %v2620 = vld [vmem:[%s2549 + $0x230] sm:$0xff]
      %v2621 = vld [vmem:[%s2549 + $0x238] sm:$0xff]
      %v2622 = vld [vmem:[%s2549 + $0x240] sm:$0xff]
      %v2623 = vld [vmem:[%s2549 + $0x248] sm:$0xff]
      %v2624 = vld [vmem:[%s2549 + $0x250] sm:$0xff]
      %v2625 = vld [vmem:[%s2549 + $0x258] sm:$0xff]
      %v2626 = vld [vmem:[%s2549 + $0x260] sm:$0xff]
      %v2627 = vld [vmem:[%s2549 + $0x268] sm:$0xff]
      %v2628 = vld [vmem:[%s2549 + $0x270] sm:$0xff]
      %v2629 = vld [vmem:[%s2549 + $0x278] sm:$0xff]
      %v2630 = vld [vmem:[%s2549 + $0x280] sm:$0xff]
      %v2631 = vld [vmem:[%s2549 + $0x288] sm:$0xff]
      %v2632 = vld [vmem:[%s2549 + $0x290] sm:$0xff]
      %v2633 = vld [vmem:[%s2549 + $0x298] sm:$0xff]
      %v2634 = vld [vmem:[%s2549 + $0x2a0] sm:$0xff]
      %v2635 = vld [vmem:[%s2549 + $0x2a8] sm:$0xff]
      %v2636 = vld [vmem:[%s2549 + $0x2b0] sm:$0xff]
      %v2637 = vld [vmem:[%s2549 + $0x2b8] sm:$0xff]
      %v2638 = vld [vmem:[%s2549 + $0x2c0] sm:$0xff]
      %v2639 = vld [vmem:[%s2549 + $0x2c8] sm:$0xff]
      %v2640 = vld [vmem:[%s2549 + $0x2d0] sm:$0xff]
      %v2641 = vld [vmem:[%s2549 + $0x2d8] sm:$0xff]
      %v2642 = vld [vmem:[%s2549 + $0x2e0] sm:$0xff]
      %v2643 = vld [vmem:[%s2549 + $0x2e8] sm:$0xff]
      %v2644 = vld [vmem:[%s2549 + $0x2f0] sm:$0xff]
      %v2645 = vld [vmem:[%s2549 + $0x2f8] sm:$0xff]
      %v2742 = vunpack.c.l.b16 %v2550
      %v2743 = vunpack.c.h.b16 %v2550
      %v2744 = vunpack.c.l.b16 %v2551
      %v2745 = vunpack.c.h.b16 %v2551
      %v2746 = vunpack.c.l.b16 %v2552
      %v2747 = vunpack.c.h.b16 %v2552
      %v2748 = vunpack.c.l.b16 %v2553
      %v2749 = vunpack.c.h.b16 %v2553
      %v2750 = vunpack.c.l.b16 %v2554
      %v2751 = vunpack.c.h.b16 %v2554
      %v2752 = vunpack.c.l.b16 %v2555
      %v2753 = vunpack.c.h.b16 %v2555
      %v2754 = vunpack.c.l.b16 %v2556
      %v2755 = vunpack.c.h.b16 %v2556
      %v2756 = vunpack.c.l.b16 %v2557
      %v2757 = vunpack.c.h.b16 %v2557
      %v2758 = vunpack.c.l.b16 %v2558
      %v2759 = vunpack.c.h.b16 %v2558
      %v2760 = vunpack.c.l.b16 %v2559
      %v2761 = vunpack.c.h.b16 %v2559
      %v2762 = vunpack.c.l.b16 %v2560
      %v2763 = vunpack.c.h.b16 %v2560
      %v2764 = vunpack.c.l.b16 %v2561
      %v2765 = vunpack.c.h.b16 %v2561
      %v2766 = vunpack.c.l.b16 %v2562
      %v2767 = vunpack.c.h.b16 %v2562
      %v2768 = vunpack.c.l.b16 %v2563
      %v2769 = vunpack.c.h.b16 %v2563
      %v2770 = vunpack.c.l.b16 %v2564
      %v2771 = vunpack.c.h.b16 %v2564
      %v2772 = vunpack.c.l.b16 %v2565
      %v2773 = vunpack.c.h.b16 %v2565
      %v2774 = vunpack.c.l.b16 %v2566
      %v2775 = vunpack.c.h.b16 %v2566
      %v2776 = vunpack.c.l.b16 %v2567
      %v2777 = vunpack.c.h.b16 %v2567
      %v2778 = vunpack.c.l.b16 %v2568
      %v2779 = vunpack.c.h.b16 %v2568
      %v2780 = vunpack.c.l.b16 %v2569
      %v2781 = vunpack.c.h.b16 %v2569
      %v2782 = vunpack.c.l.b16 %v2570
      %v2783 = vunpack.c.h.b16 %v2570
      %v2784 = vunpack.c.l.b16 %v2571
      %v2785 = vunpack.c.h.b16 %v2571
      %v2786 = vunpack.c.l.b16 %v2572
      %v2787 = vunpack.c.h.b16 %v2572
      %v2788 = vunpack.c.l.b16 %v2573
      %v2789 = vunpack.c.h.b16 %v2573
      %v2790 = vunpack.c.l.b16 %v2574
      %v2791 = vunpack.c.h.b16 %v2574
      %v2792 = vunpack.c.l.b16 %v2575
      %v2793 = vunpack.c.h.b16 %v2575
      %v2794 = vunpack.c.l.b16 %v2576
      %v2795 = vunpack.c.h.b16 %v2576
      %v2796 = vunpack.c.l.b16 %v2577
      %v2797 = vunpack.c.h.b16 %v2577
      %v2798 = vunpack.c.l.b16 %v2578
      %v2799 = vunpack.c.h.b16 %v2578
      %v2800 = vunpack.c.l.b16 %v2579
      %v2801 = vunpack.c.h.b16 %v2579
      %v2802 = vunpack.c.l.b16 %v2580
      %v2803 = vunpack.c.h.b16 %v2580
      %v2804 = vunpack.c.l.b16 %v2581
      %v2805 = vunpack.c.h.b16 %v2581
      %v2806 = vunpack.c.l.b16 %v2582
      %v2807 = vunpack.c.h.b16 %v2582
      %v2808 = vunpack.c.l.b16 %v2583
      %v2809 = vunpack.c.h.b16 %v2583
      %v2810 = vunpack.c.l.b16 %v2584
      %v2811 = vunpack.c.h.b16 %v2584
      %v2812 = vunpack.c.l.b16 %v2585
      %v2813 = vunpack.c.h.b16 %v2585
      %v2814 = vunpack.c.l.b16 %v2586
      %v2815 = vunpack.c.h.b16 %v2586
      %v2816 = vunpack.c.l.b16 %v2587
      %v2817 = vunpack.c.h.b16 %v2587
      %v2818 = vunpack.c.l.b16 %v2588
      %v2819 = vunpack.c.h.b16 %v2588
      %v2820 = vunpack.c.l.b16 %v2589
      %v2821 = vunpack.c.h.b16 %v2589
      %v2822 = vunpack.c.l.b16 %v2590
      %v2823 = vunpack.c.h.b16 %v2590
      %v2824 = vunpack.c.l.b16 %v2591
      %v2825 = vunpack.c.h.b16 %v2591
      %v2826 = vunpack.c.l.b16 %v2592
      %v2827 = vunpack.c.h.b16 %v2592
      %v2828 = vunpack.c.l.b16 %v2593
      %v2829 = vunpack.c.h.b16 %v2593
      %v2830 = vunpack.c.l.b16 %v2594
      %v2831 = vunpack.c.h.b16 %v2594
      %v2832 = vunpack.c.l.b16 %v2595
      %v2833 = vunpack.c.h.b16 %v2595
      %v2834 = vunpack.c.l.b16 %v2596
      %v2835 = vunpack.c.h.b16 %v2596
      %v2836 = vunpack.c.l.b16 %v2597
      %v2837 = vunpack.c.h.b16 %v2597
      %v2838 = vunpack.c.l.b16 %v2598
      %v2839 = vunpack.c.h.b16 %v2598
      %v2840 = vunpack.c.l.b16 %v2599
      %v2841 = vunpack.c.h.b16 %v2599
      %v2842 = vunpack.c.l.b16 %v2600
      %v2843 = vunpack.c.h.b16 %v2600
      %v2844 = vunpack.c.l.b16 %v2601
      %v2845 = vunpack.c.h.b16 %v2601
      %v2846 = vunpack.c.l.b16 %v2602
      %v2847 = vunpack.c.h.b16 %v2602
      %v2848 = vunpack.c.l.b16 %v2603
      %v2849 = vunpack.c.h.b16 %v2603
      %v2850 = vunpack.c.l.b16 %v2604
      %v2851 = vunpack.c.h.b16 %v2604
      %v2852 = vunpack.c.l.b16 %v2605
      %v2853 = vunpack.c.h.b16 %v2605
      %v2854 = vunpack.c.l.b16 %v2606
      %v2855 = vunpack.c.h.b16 %v2606
      %v2856 = vunpack.c.l.b16 %v2607
      %v2857 = vunpack.c.h.b16 %v2607
      %v2858 = vunpack.c.l.b16 %v2608
      %v2859 = vunpack.c.h.b16 %v2608
      %v2860 = vunpack.c.l.b16 %v2609
      %v2861 = vunpack.c.h.b16 %v2609
      %v2862 = vunpack.c.l.b16 %v2610
      %v2863 = vunpack.c.h.b16 %v2610
      %v2864 = vunpack.c.l.b16 %v2611
      %v2865 = vunpack.c.h.b16 %v2611
      %v2866 = vunpack.c.l.b16 %v2612
      %v2867 = vunpack.c.h.b16 %v2612
      %v2868 = vunpack.c.l.b16 %v2613
      %v2869 = vunpack.c.h.b16 %v2613
      %v2870 = vunpack.c.l.b16 %v2614
      %v2871 = vunpack.c.h.b16 %v2614
      %v2872 = vunpack.c.l.b16 %v2615
      %v2873 = vunpack.c.h.b16 %v2615
      %v2874 = vunpack.c.l.b16 %v2616
      %v2875 = vunpack.c.h.b16 %v2616
      %v2876 = vunpack.c.l.b16 %v2617
      %v2877 = vunpack.c.h.b16 %v2617
      %v2878 = vunpack.c.l.b16 %v2618
      %v2879 = vunpack.c.h.b16 %v2618
      %v2880 = vunpack.c.l.b16 %v2619
      %v2881 = vunpack.c.h.b16 %v2619
      %v2882 = vunpack.c.l.b16 %v2620
      %v2883 = vunpack.c.h.b16 %v2620
      %v2884 = vunpack.c.l.b16 %v2621
      %v2885 = vunpack.c.h.b16 %v2621
      %v2886 = vunpack.c.l.b16 %v2622
      %v2887 = vunpack.c.h.b16 %v2622
      %v2888 = vunpack.c.l.b16 %v2623
      %v2889 = vunpack.c.h.b16 %v2623
      %v2890 = vunpack.c.l.b16 %v2624
      %v2891 = vunpack.c.h.b16 %v2624
      %v2892 = vunpack.c.l.b16 %v2625
      %v2893 = vunpack.c.h.b16 %v2625
      %v2894 = vunpack.c.l.b16 %v2626
      %v2895 = vunpack.c.h.b16 %v2626
      %v2896 = vunpack.c.l.b16 %v2627
      %v2897 = vunpack.c.h.b16 %v2627
      %v2898 = vunpack.c.l.b16 %v2628
      %v2899 = vunpack.c.h.b16 %v2628
      %v2900 = vunpack.c.l.b16 %v2629
      %v2901 = vunpack.c.h.b16 %v2629
      %v2902 = vunpack.c.l.b16 %v2630
      %v2903 = vunpack.c.h.b16 %v2630
      %v2904 = vunpack.c.l.b16 %v2631
      %v2905 = vunpack.c.h.b16 %v2631
      %v2906 = vunpack.c.l.b16 %v2632
      %v2907 = vunpack.c.h.b16 %v2632
      %v2908 = vunpack.c.l.b16 %v2633
      %v2909 = vunpack.c.h.b16 %v2633
      %v2910 = vunpack.c.l.b16 %v2634
      %v2911 = vunpack.c.h.b16 %v2634
      %v2912 = vunpack.c.l.b16 %v2635
      %v2913 = vunpack.c.h.b16 %v2635
      %v2914 = vunpack.c.l.b16 %v2636
      %v2915 = vunpack.c.h.b16 %v2636
      %v2916 = vunpack.c.l.b16 %v2637
      %v2917 = vunpack.c.h.b16 %v2637
      %v2918 = vunpack.c.l.b16 %v2638
      %v2919 = vunpack.c.h.b16 %v2638
      %v2920 = vunpack.c.l.b16 %v2639
      %v2921 = vunpack.c.h.b16 %v2639
      %v2922 = vunpack.c.l.b16 %v2640
      %v2923 = vunpack.c.h.b16 %v2640
      %v2924 = vunpack.c.l.b16 %v2641
      %v2925 = vunpack.c.h.b16 %v2641
      %v2926 = vunpack.c.l.b16 %v2642
      %v2927 = vunpack.c.h.b16 %v2642
      %v2928 = vunpack.c.l.b16 %v2643
      %v2929 = vunpack.c.h.b16 %v2643
      %v2930 = vunpack.c.l.b16 %v2644
      %v2931 = vunpack.c.h.b16 %v2644
      %v2932 = vunpack.c.l.b16 %v2645
      %v2933 = vunpack.c.h.b16 %v2645
      %v2934 = vpack.c.b16 %v2744, %v2742
      %v2935 = vpack.c.b16 %v2745, %v2743
      %v2936 = vpack.c.b16 %v2748, %v2746
      %v2937 = vpack.c.b16 %v2749, %v2747
      %v2938 = vpack.c.b16 %v2752, %v2750
      %v2939 = vpack.c.b16 %v2753, %v2751
      %v2940 = vpack.c.b16 %v2756, %v2754
      %v2941 = vpack.c.b16 %v2757, %v2755
      %v2942 = vpack.c.b16 %v2760, %v2758
      %v2943 = vpack.c.b16 %v2761, %v2759
      %v2944 = vpack.c.b16 %v2764, %v2762
      %v2945 = vpack.c.b16 %v2765, %v2763
      %v2946 = vpack.c.b16 %v2768, %v2766
      %v2947 = vpack.c.b16 %v2769, %v2767
      %v2948 = vpack.c.b16 %v2772, %v2770
      %v2949 = vpack.c.b16 %v2773, %v2771
      %v2950 = vpack.c.b16 %v2776, %v2774
      %v2951 = vpack.c.b16 %v2777, %v2775
      %v2952 = vpack.c.b16 %v2780, %v2778
      %v2953 = vpack.c.b16 %v2781, %v2779
      %v2954 = vpack.c.b16 %v2784, %v2782
      %v2955 = vpack.c.b16 %v2785, %v2783
      %v2956 = vpack.c.b16 %v2788, %v2786
      %v2957 = vpack.c.b16 %v2789, %v2787
      %v2958 = vpack.c.b16 %v2792, %v2790
      %v2959 = vpack.c.b16 %v2793, %v2791
      %v2960 = vpack.c.b16 %v2796, %v2794
      %v2961 = vpack.c.b16 %v2797, %v2795
      %v2962 = vpack.c.b16 %v2800, %v2798
      %v2963 = vpack.c.b16 %v2801, %v2799
      %v2964 = vpack.c.b16 %v2804, %v2802
      %v2965 = vpack.c.b16 %v2805, %v2803
      %v2966 = vpack.c.b16 %v2808, %v2806
      %v2967 = vpack.c.b16 %v2809, %v2807
      %v2968 = vpack.c.b16 %v2812, %v2810
      %v2969 = vpack.c.b16 %v2813, %v2811
      %v2970 = vpack.c.b16 %v2816, %v2814
      %v2971 = vpack.c.b16 %v2817, %v2815
      %v2972 = vpack.c.b16 %v2820, %v2818
      %v2973 = vpack.c.b16 %v2821, %v2819
      %v2974 = vpack.c.b16 %v2824, %v2822
      %v2975 = vpack.c.b16 %v2825, %v2823
      %v2976 = vpack.c.b16 %v2828, %v2826
      %v2977 = vpack.c.b16 %v2829, %v2827
      %v2978 = vpack.c.b16 %v2832, %v2830
      %v2979 = vpack.c.b16 %v2833, %v2831
      %v2980 = vpack.c.b16 %v2836, %v2834
      %v2981 = vpack.c.b16 %v2837, %v2835
      %v2982 = vpack.c.b16 %v2840, %v2838
      %v2983 = vpack.c.b16 %v2841, %v2839
      %v2984 = vpack.c.b16 %v2844, %v2842
      %v2985 = vpack.c.b16 %v2845, %v2843
      %v2986 = vpack.c.b16 %v2848, %v2846
      %v2987 = vpack.c.b16 %v2849, %v2847
      %v2988 = vpack.c.b16 %v2852, %v2850
      %v2989 = vpack.c.b16 %v2853, %v2851
      %v2990 = vpack.c.b16 %v2856, %v2854
      %v2991 = vpack.c.b16 %v2857, %v2855
      %v2992 = vpack.c.b16 %v2860, %v2858
      %v2993 = vpack.c.b16 %v2861, %v2859
      %v2994 = vpack.c.b16 %v2864, %v2862
      %v2995 = vpack.c.b16 %v2865, %v2863
      %v2996 = vpack.c.b16 %v2868, %v2866
      %v2997 = vpack.c.b16 %v2869, %v2867
      %v2998 = vpack.c.b16 %v2872, %v2870
      %v2999 = vpack.c.b16 %v2873, %v2871
      %v3000 = vpack.c.b16 %v2876, %v2874
      %v3001 = vpack.c.b16 %v2877, %v2875
      %v3002 = vpack.c.b16 %v2880, %v2878
      %v3003 = vpack.c.b16 %v2881, %v2879
      %v3004 = vpack.c.b16 %v2884, %v2882
      %v3005 = vpack.c.b16 %v2885, %v2883
      %v3006 = vpack.c.b16 %v2888, %v2886
      %v3007 = vpack.c.b16 %v2889, %v2887
      %v3008 = vpack.c.b16 %v2892, %v2890
      %v3009 = vpack.c.b16 %v2893, %v2891
      %v3010 = vpack.c.b16 %v2896, %v2894
      %v3011 = vpack.c.b16 %v2897, %v2895
      %v3012 = vpack.c.b16 %v2900, %v2898
      %v3013 = vpack.c.b16 %v2901, %v2899
      %v3014 = vpack.c.b16 %v2904, %v2902
      %v3015 = vpack.c.b16 %v2905, %v2903
      %v3016 = vpack.c.b16 %v2908, %v2906
      %v3017 = vpack.c.b16 %v2909, %v2907
      %v3018 = vpack.c.b16 %v2912, %v2910
      %v3019 = vpack.c.b16 %v2913, %v2911
      %v3020 = vpack.c.b16 %v2916, %v2914
      %v3021 = vpack.c.b16 %v2917, %v2915
      %v3022 = vpack.c.b16 %v2920, %v2918
      %v3023 = vpack.c.b16 %v2921, %v2919
      %v3024 = vpack.c.b16 %v2924, %v2922
      %v3025 = vpack.c.b16 %v2925, %v2923
      %v3026 = vpack.c.b16 %v2928, %v2926
      %v3027 = vpack.c.b16 %v2929, %v2927
      %v3028 = vpack.c.b16 %v2932, %v2930
      %v3029 = vpack.c.b16 %v2933, %v2931
      %3126 = vmatprep.subr.bf16.mxu0 %v2935
      %3127 = vmatpush1.bf16.msra.mxu0 %v2934
      %3128 = vmatprep.subr.bf16.mxu0 %v2937
      %3129 = vmatpush1.bf16.msra.mxu0 %v2936
      %3130 = vmatprep.subr.bf16.mxu0 %v2939
      %3131 = vmatpush1.bf16.msra.mxu0 %v2938
      %3132 = vmatprep.subr.bf16.mxu0 %v2941
      %3133 = vmatpush1.bf16.msra.mxu0 %v2940
      %3134 = vmatprep.subr.bf16.mxu0 %v2943
      %3135 = vmatpush1.bf16.msra.mxu0 %v2942
      %3136 = vmatprep.subr.bf16.mxu0 %v2945
      %3137 = vmatpush1.bf16.msra.mxu0 %v2944
      %3138 = vmatprep.subr.bf16.mxu0 %v2947
      %3139 = vmatpush1.bf16.msra.mxu0 %v2946
      %3140 = vmatprep.subr.bf16.mxu0 %v2949
      %3141 = vmatpush1.bf16.msra.mxu0 %v2948
      %3142 = vmatprep.subr.bf16.mxu0 %v2951
      %3143 = vmatpush1.bf16.msra.mxu0 %v2950
      %3144 = vmatprep.subr.bf16.mxu0 %v2953
      %3145 = vmatpush1.bf16.msra.mxu0 %v2952
      %3146 = vmatprep.subr.bf16.mxu0 %v2955
      %3147 = vmatpush1.bf16.msra.mxu0 %v2954
      %3148 = vmatprep.subr.bf16.mxu0 %v2957
      %3149 = vmatpush1.bf16.msra.mxu0 %v2956
      %3150 = vmatprep.subr.bf16.mxu0 %v2959
      %3151 = vmatpush1.bf16.msra.mxu0 %v2958
      %3152 = vmatprep.subr.bf16.mxu0 %v2961
      %3153 = vmatpush1.bf16.msra.mxu0 %v2960
      %3154 = vmatprep.subr.bf16.mxu0 %v2963
      %3155 = vmatpush1.bf16.msra.mxu0 %v2962
      %3156 = vmatprep.subr.bf16.mxu0 %v2965
      %3157 = vmatpush1.bf16.msra.mxu0 %v2964
      %3158 = vmatprep.mubr.bf16.mxu0 %v2544
      %3159 = vmatmul.mubr.bf16.gmra.mrb[0].mxu0 %v2543
      %v3160 = vpop.f32.mrb[0].mxu0
      %v3161 = vadd.f32 0.0, %v3160
      %v3162 = vpop.f32.mrb[0].mxu0
      %v3163 = vadd.f32 0.0, %v3162
      %v3164 = vpop.f32.mrb[0].mxu0
      %v3165 = vadd.f32 0.0, %v3164
      %v3166 = vpop.f32.mrb[0].mxu0
      %v3167 = vadd.f32 0.0, %v3166
      %3168 = vdwg.mxu0
      %3169 = vmatprep.subr.bf16.mxu0 %v2967
      %3170 = vmatpush1.bf16.msra.mxu0 %v2966
      %3171 = vmatprep.subr.bf16.mxu0 %v2969
      %3172 = vmatpush1.bf16.msra.mxu0 %v2968
      %3173 = vmatprep.subr.bf16.mxu0 %v2971
      %3174 = vmatpush1.bf16.msra.mxu0 %v2970
      %3175 = vmatprep.subr.bf16.mxu0 %v2973
      %3176 = vmatpush1.bf16.msra.mxu0 %v2972
      %3177 = vmatprep.subr.bf16.mxu0 %v2975
      %3178 = vmatpush1.bf16.msra.mxu0 %v2974
      %3179 = vmatprep.subr.bf16.mxu0 %v2977
      %3180 = vmatpush1.bf16.msra.mxu0 %v2976
      %3181 = vmatprep.subr.bf16.mxu0 %v2979
      %3182 = vmatpush1.bf16.msra.mxu0 %v2978
      %3183 = vmatprep.subr.bf16.mxu0 %v2981
      %3184 = vmatpush1.bf16.msra.mxu0 %v2980
      %3185 = vmatprep.subr.bf16.mxu0 %v2983
      %3186 = vmatpush1.bf16.msra.mxu0 %v2982
      %3187 = vmatprep.subr.bf16.mxu0 %v2985
      %3188 = vmatpush1.bf16.msra.mxu0 %v2984
      %3189 = vmatprep.subr.bf16.mxu0 %v2987
      %3190 = vmatpush1.bf16.msra.mxu0 %v2986
      %3191 = vmatprep.subr.bf16.mxu0 %v2989
      %3192 = vmatpush1.bf16.msra.mxu0 %v2988
      %3193 = vmatprep.subr.bf16.mxu0 %v2991
      %3194 = vmatpush1.bf16.msra.mxu0 %v2990
      %3195 = vmatprep.subr.bf16.mxu0 %v2993
      %3196 = vmatpush1.bf16.msra.mxu0 %v2992
      %3197 = vmatprep.subr.bf16.mxu0 %v2995
      %3198 = vmatpush1.bf16.msra.mxu0 %v2994
      %3199 = vmatprep.subr.bf16.mxu0 %v2997
      %3200 = vmatpush1.bf16.msra.mxu0 %v2996
      %3201 = vmatprep.mubr.bf16.mxu0 %v2546
      %3202 = vmatmul.mubr.bf16.gmra.mrb[0].mxu0 %v2545
      %v3203 = vpop.f32.mrb[0].mxu0
      %v3204 = vadd.f32 %v3161, %v3203
      %v3205 = vpop.f32.mrb[0].mxu0
      %v3206 = vadd.f32 %v3163, %v3205
      %v3207 = vpop.f32.mrb[0].mxu0
      %v3208 = vadd.f32 %v3165, %v3207
      %v3209 = vpop.f32.mrb[0].mxu0
      %v3210 = vadd.f32 %v3167, %v3209
      %3211 = vdwg.mxu0
      %3212 = vmatprep.subr.bf16.mxu0 %v2999
      %3213 = vmatpush1.bf16.msra.mxu0 %v2998
      %3214 = vmatprep.subr.bf16.mxu0 %v3001
      %3215 = vmatpush1.bf16.msra.mxu0 %v3000
      %3216 = vmatprep.subr.bf16.mxu0 %v3003
      %3217 = vmatpush1.bf16.msra.mxu0 %v3002
      %3218 = vmatprep.subr.bf16.mxu0 %v3005
      %3219 = vmatpush1.bf16.msra.mxu0 %v3004
      %3220 = vmatprep.subr.bf16.mxu0 %v3007
      %3221 = vmatpush1.bf16.msra.mxu0 %v3006
      %3222 = vmatprep.subr.bf16.mxu0 %v3009
      %3223 = vmatpush1.bf16.msra.mxu0 %v3008
      %3224 = vmatprep.subr.bf16.mxu0 %v3011
      %3225 = vmatpush1.bf16.msra.mxu0 %v3010
      %3226 = vmatprep.subr.bf16.mxu0 %v3013
      %3227 = vmatpush1.bf16.msra.mxu0 %v3012
      %3228 = vmatprep.subr.bf16.mxu0 %v3015
      %3229 = vmatpush1.bf16.msra.mxu0 %v3014
      %3230 = vmatprep.subr.bf16.mxu0 %v3017
      %3231 = vmatpush1.bf16.msra.mxu0 %v3016
      %3232 = vmatprep.subr.bf16.mxu0 %v3019
      %3233 = vmatpush1.bf16.msra.mxu0 %v3018
      %3234 = vmatprep.subr.bf16.mxu0 %v3021
      %3235 = vmatpush1.bf16.msra.mxu0 %v3020
      %3236 = vmatprep.subr.bf16.mxu0 %v3023
      %3237 = vmatpush1.bf16.msra.mxu0 %v3022
      %3238 = vmatprep.subr.bf16.mxu0 %v3025
      %3239 = vmatpush1.bf16.msra.mxu0 %v3024
      %3240 = vmatprep.subr.bf16.mxu0 %v3027
      %3241 = vmatpush1.bf16.msra.mxu0 %v3026
      %3242 = vmatprep.subr.bf16.mxu0 %v3029
      %3243 = vmatpush1.bf16.msra.mxu0 %v3028
      %3244 = vmatprep.mubr.bf16.mxu0 %v2548
      %3245 = vmatmul.mubr.bf16.gmra.mrb[0].mxu0 %v2547
      %v3246 = vpop.f32.mrb[0].mxu0
      %v3247 = vadd.f32 %v3204, %v3246
      %v3248 = vpop.f32.mrb[0].mxu0
      %v3249 = vadd.f32 %v3206, %v3248
      %v3250 = vpop.f32.mrb[0].mxu0
      %v3251 = vadd.f32 %v3208, %v3250
      %v3252 = vpop.f32.mrb[0].mxu0
      %v3253 = vadd.f32 %v3210, %v3252
      %3254 = vdwg.mxu0
      %s3255 = scalar_lea.vmem %s3, 3
      %v3256 = vld [vmem:[%s3255] ss:$8 sm:$0x3]
      %v3258 = vlaneseq
      %v3259 = vshrl.u32 %v3258, 7
      %v3260 = vsub.s32 0, %v3259
      %v3261 = vrot.slane %v3256, %v3260
      %v3262 = vlaneseq
      %v3263 = vshrl.u32 %v3262, 7
      %v3264 = vsub.s32 1, %v3263
      %v3265 = vrot.slane %v3256, %v3264
      %v3268 = vmul.f32 %v3247, %v3261
      %v3269 = vmul.f32 %v3249, %v3265
      %v3270 = vmul.f32 %v3251, %v3261
      %v3271 = vmul.f32 %v3253, %v3265
      %s3272 = scalar_lea.vmem %s4, 3
      %v3273 = vld [vmem:[%s3272] ss:$8 sm:$0x3]
      %v3275 = vlaneseq
      %v3276 = vshrl.u32 %v3275, 7
      %v3277 = vsub.s32 0, %v3276
      %v3278 = vrot.slane %v3273, %v3277
      %v3279 = vlaneseq
      %v3280 = vshrl.u32 %v3279, 7
      %v3281 = vsub.s32 1, %v3280
      %v3282 = vrot.slane %v3273, %v3281
      %v3285 = vadd.f32 %v3268, %v3278
      %v3286 = vadd.f32 %v3269, %v3282
      %v3287 = vadd.f32 %v3270, %v3278
      %v3288 = vadd.f32 %v3271, %v3282
      %v3289 = vmax.f32 %v3285, 0.0
      %v3290 = vmax.f32 %v3286, 0.0
      %v3291 = vmax.f32 %v3287, 0.0
      %v3292 = vmax.f32 %v3288, 0.0
      %v3293 = vsel %vm945, %v3289, 0.0
      %v3294 = vsel %vm945, %v3290, 0.0
      %v3295 = vsel %vm946, %v3291, 0.0
      %v3296 = vsel %vm946, %v3292, 0.0
      %v3301 = vrot.slane %v3293, 7
      %v3302 = vrot.slane %v3294, 7
      %v3303 = vrot.slane %v3295, 7
      %v3304 = vsel %vm423, %v3301, %v3303
      %v3305 = vrot.slane %v3296, 7
      %v3306 = vsel %vm423, %v3302, %v3305
      %v3311 = vsel %vm423, 0.0, %v3301
      %v3312 = vsel %vm423, 0.0, %v3302
      %v3313 = vrot.slane %v3293, 1
      %v3314 = vrot.slane %v3295, 1
      %v3315 = vsel %vm963, %v3313, %v3314
      %v3316 = vrot.slane %v3294, 1
      %v3317 = vrot.slane %v3296, 1
      %v3318 = vsel %vm963, %v3316, %v3317
      %v3323 = vsel %vm963, %v3314, 0.0
      %v3324 = vsel %vm963, %v3317, 0.0
      %v3325 = vpack.c.bf16 %v3304, %v3311
      %v3326 = vpack.c.bf16 %v3306, %v3312
      %v3327 = vpack.c.bf16 %v3295, %v3293
      %v3328 = vpack.c.bf16 %v3296, %v3294
      %v3329 = vpack.c.bf16 %v3323, %v3315
      %v3330 = vpack.c.bf16 %v3324, %v3318
      %s3331 = scalar_lea.vmem %s2, 2304
      %v3332 = vld [vmem:[%s3331] sm:$0xff]
      %v3333 = vld [vmem:[%s3331 + $0x8] sm:$0xff]
      %v3334 = vld [vmem:[%s3331 + $0x10] sm:$0xff]
      %v3335 = vld [vmem:[%s3331 + $0x18] sm:$0xff]
      %v3336 = vld [vmem:[%s3331 + $0x20] sm:$0xff]
      %v3337 = vld [vmem:[%s3331 + $0x28] sm:$0xff]
      %v3338 = vld [vmem:[%s3331 + $0x30] sm:$0xff]
      %v3339 = vld [vmem:[%s3331 + $0x38] sm:$0xff]
      %v3340 = vld [vmem:[%s3331 + $0x40] sm:$0xff]
      %v3341 = vld [vmem:[%s3331 + $0x48] sm:$0xff]
      %v3342 = vld [vmem:[%s3331 + $0x50] sm:$0xff]
      %v3343 = vld [vmem:[%s3331 + $0x58] sm:$0xff]
      %v3344 = vld [vmem:[%s3331 + $0x60] sm:$0xff]
      %v3345 = vld [vmem:[%s3331 + $0x68] sm:$0xff]
      %v3346 = vld [vmem:[%s3331 + $0x70] sm:$0xff]
      %v3347 = vld [vmem:[%s3331 + $0x78] sm:$0xff]
      %v3348 = vld [vmem:[%s3331 + $0x80] sm:$0xff]
      %v3349 = vld [vmem:[%s3331 + $0x88] sm:$0xff]
      %v3350 = vld [vmem:[%s3331 + $0x90] sm:$0xff]
      %v3351 = vld [vmem:[%s3331 + $0x98] sm:$0xff]
      %v3352 = vld [vmem:[%s3331 + $0xa0] sm:$0xff]
      %v3353 = vld [vmem:[%s3331 + $0xa8] sm:$0xff]
      %v3354 = vld [vmem:[%s3331 + $0xb0] sm:$0xff]
      %v3355 = vld [vmem:[%s3331 + $0xb8] sm:$0xff]
      %v3356 = vld [vmem:[%s3331 + $0xc0] sm:$0xff]
      %v3357 = vld [vmem:[%s3331 + $0xc8] sm:$0xff]
      %v3358 = vld [vmem:[%s3331 + $0xd0] sm:$0xff]
      %v3359 = vld [vmem:[%s3331 + $0xd8] sm:$0xff]
      %v3360 = vld [vmem:[%s3331 + $0xe0] sm:$0xff]
      %v3361 = vld [vmem:[%s3331 + $0xe8] sm:$0xff]
      %v3362 = vld [vmem:[%s3331 + $0xf0] sm:$0xff]
      %v3363 = vld [vmem:[%s3331 + $0xf8] sm:$0xff]
      %v3364 = vld [vmem:[%s3331 + $0x100] sm:$0xff]
      %v3365 = vld [vmem:[%s3331 + $0x108] sm:$0xff]
      %v3366 = vld [vmem:[%s3331 + $0x110] sm:$0xff]
      %v3367 = vld [vmem:[%s3331 + $0x118] sm:$0xff]
      %v3368 = vld [vmem:[%s3331 + $0x120] sm:$0xff]
      %v3369 = vld [vmem:[%s3331 + $0x128] sm:$0xff]
      %v3370 = vld [vmem:[%s3331 + $0x130] sm:$0xff]
      %v3371 = vld [vmem:[%s3331 + $0x138] sm:$0xff]
      %v3372 = vld [vmem:[%s3331 + $0x140] sm:$0xff]
      %v3373 = vld [vmem:[%s3331 + $0x148] sm:$0xff]
      %v3374 = vld [vmem:[%s3331 + $0x150] sm:$0xff]
      %v3375 = vld [vmem:[%s3331 + $0x158] sm:$0xff]
      %v3376 = vld [vmem:[%s3331 + $0x160] sm:$0xff]
      %v3377 = vld [vmem:[%s3331 + $0x168] sm:$0xff]
      %v3378 = vld [vmem:[%s3331 + $0x170] sm:$0xff]
      %v3379 = vld [vmem:[%s3331 + $0x178] sm:$0xff]
      %v3380 = vld [vmem:[%s3331 + $0x180] sm:$0xff]
      %v3381 = vld [vmem:[%s3331 + $0x188] sm:$0xff]
      %v3382 = vld [vmem:[%s3331 + $0x190] sm:$0xff]
      %v3383 = vld [vmem:[%s3331 + $0x198] sm:$0xff]
      %v3384 = vld [vmem:[%s3331 + $0x1a0] sm:$0xff]
      %v3385 = vld [vmem:[%s3331 + $0x1a8] sm:$0xff]
      %v3386 = vld [vmem:[%s3331 + $0x1b0] sm:$0xff]
      %v3387 = vld [vmem:[%s3331 + $0x1b8] sm:$0xff]
      %v3388 = vld [vmem:[%s3331 + $0x1c0] sm:$0xff]
      %v3389 = vld [vmem:[%s3331 + $0x1c8] sm:$0xff]
      %v3390 = vld [vmem:[%s3331 + $0x1d0] sm:$0xff]
      %v3391 = vld [vmem:[%s3331 + $0x1d8] sm:$0xff]
      %v3392 = vld [vmem:[%s3331 + $0x1e0] sm:$0xff]
      %v3393 = vld [vmem:[%s3331 + $0x1e8] sm:$0xff]
      %v3394 = vld [vmem:[%s3331 + $0x1f0] sm:$0xff]
      %v3395 = vld [vmem:[%s3331 + $0x1f8] sm:$0xff]
      %v3396 = vld [vmem:[%s3331 + $0x200] sm:$0xff]
      %v3397 = vld [vmem:[%s3331 + $0x208] sm:$0xff]
      %v3398 = vld [vmem:[%s3331 + $0x210] sm:$0xff]
      %v3399 = vld [vmem:[%s3331 + $0x218] sm:$0xff]
      %v3400 = vld [vmem:[%s3331 + $0x220] sm:$0xff]
      %v3401 = vld [vmem:[%s3331 + $0x228] sm:$0xff]
      %v3402 = vld [vmem:[%s3331 + $0x230] sm:$0xff]
      %v3403 = vld [vmem:[%s3331 + $0x238] sm:$0xff]
      %v3404 = vld [vmem:[%s3331 + $0x240] sm:$0xff]
      %v3405 = vld [vmem:[%s3331 + $0x248] sm:$0xff]
      %v3406 = vld [vmem:[%s3331 + $0x250] sm:$0xff]
      %v3407 = vld [vmem:[%s3331 + $0x258] sm:$0xff]
      %v3408 = vld [vmem:[%s3331 + $0x260] sm:$0xff]
      %v3409 = vld [vmem:[%s3331 + $0x268] sm:$0xff]
      %v3410 = vld [vmem:[%s3331 + $0x270] sm:$0xff]
      %v3411 = vld [vmem:[%s3331 + $0x278] sm:$0xff]
      %v3412 = vld [vmem:[%s3331 + $0x280] sm:$0xff]
      %v3413 = vld [vmem:[%s3331 + $0x288] sm:$0xff]
      %v3414 = vld [vmem:[%s3331 + $0x290] sm:$0xff]
      %v3415 = vld [vmem:[%s3331 + $0x298] sm:$0xff]
      %v3416 = vld [vmem:[%s3331 + $0x2a0] sm:$0xff]
      %v3417 = vld [vmem:[%s3331 + $0x2a8] sm:$0xff]
      %v3418 = vld [vmem:[%s3331 + $0x2b0] sm:$0xff]
      %v3419 = vld [vmem:[%s3331 + $0x2b8] sm:$0xff]
      %v3420 = vld [vmem:[%s3331 + $0x2c0] sm:$0xff]
      %v3421 = vld [vmem:[%s3331 + $0x2c8] sm:$0xff]
      %v3422 = vld [vmem:[%s3331 + $0x2d0] sm:$0xff]
      %v3423 = vld [vmem:[%s3331 + $0x2d8] sm:$0xff]
      %v3424 = vld [vmem:[%s3331 + $0x2e0] sm:$0xff]
      %v3425 = vld [vmem:[%s3331 + $0x2e8] sm:$0xff]
      %v3426 = vld [vmem:[%s3331 + $0x2f0] sm:$0xff]
      %v3427 = vld [vmem:[%s3331 + $0x2f8] sm:$0xff]
      %v3524 = vunpack.c.l.b16 %v3332
      %v3525 = vunpack.c.h.b16 %v3332
      %v3526 = vunpack.c.l.b16 %v3333
      %v3527 = vunpack.c.h.b16 %v3333
      %v3528 = vunpack.c.l.b16 %v3334
      %v3529 = vunpack.c.h.b16 %v3334
      %v3530 = vunpack.c.l.b16 %v3335
      %v3531 = vunpack.c.h.b16 %v3335
      %v3532 = vunpack.c.l.b16 %v3336
      %v3533 = vunpack.c.h.b16 %v3336
      %v3534 = vunpack.c.l.b16 %v3337
      %v3535 = vunpack.c.h.b16 %v3337
      %v3536 = vunpack.c.l.b16 %v3338
      %v3537 = vunpack.c.h.b16 %v3338
      %v3538 = vunpack.c.l.b16 %v3339
      %v3539 = vunpack.c.h.b16 %v3339
      %v3540 = vunpack.c.l.b16 %v3340
      %v3541 = vunpack.c.h.b16 %v3340
      %v3542 = vunpack.c.l.b16 %v3341
      %v3543 = vunpack.c.h.b16 %v3341
      %v3544 = vunpack.c.l.b16 %v3342
      %v3545 = vunpack.c.h.b16 %v3342
      %v3546 = vunpack.c.l.b16 %v3343
      %v3547 = vunpack.c.h.b16 %v3343
      %v3548 = vunpack.c.l.b16 %v3344
      %v3549 = vunpack.c.h.b16 %v3344
      %v3550 = vunpack.c.l.b16 %v3345
      %v3551 = vunpack.c.h.b16 %v3345
      %v3552 = vunpack.c.l.b16 %v3346
      %v3553 = vunpack.c.h.b16 %v3346
      %v3554 = vunpack.c.l.b16 %v3347
      %v3555 = vunpack.c.h.b16 %v3347
      %v3556 = vunpack.c.l.b16 %v3348
      %v3557 = vunpack.c.h.b16 %v3348
      %v3558 = vunpack.c.l.b16 %v3349
      %v3559 = vunpack.c.h.b16 %v3349
      %v3560 = vunpack.c.l.b16 %v3350
      %v3561 = vunpack.c.h.b16 %v3350
      %v3562 = vunpack.c.l.b16 %v3351
      %v3563 = vunpack.c.h.b16 %v3351
      %v3564 = vunpack.c.l.b16 %v3352
      %v3565 = vunpack.c.h.b16 %v3352
      %v3566 = vunpack.c.l.b16 %v3353
      %v3567 = vunpack.c.h.b16 %v3353
      %v3568 = vunpack.c.l.b16 %v3354
      %v3569 = vunpack.c.h.b16 %v3354
      %v3570 = vunpack.c.l.b16 %v3355
      %v3571 = vunpack.c.h.b16 %v3355
      %v3572 = vunpack.c.l.b16 %v3356
      %v3573 = vunpack.c.h.b16 %v3356
      %v3574 = vunpack.c.l.b16 %v3357
      %v3575 = vunpack.c.h.b16 %v3357
      %v3576 = vunpack.c.l.b16 %v3358
      %v3577 = vunpack.c.h.b16 %v3358
      %v3578 = vunpack.c.l.b16 %v3359
      %v3579 = vunpack.c.h.b16 %v3359
      %v3580 = vunpack.c.l.b16 %v3360
      %v3581 = vunpack.c.h.b16 %v3360
      %v3582 = vunpack.c.l.b16 %v3361
      %v3583 = vunpack.c.h.b16 %v3361
      %v3584 = vunpack.c.l.b16 %v3362
      %v3585 = vunpack.c.h.b16 %v3362
      %v3586 = vunpack.c.l.b16 %v3363
      %v3587 = vunpack.c.h.b16 %v3363
      %v3588 = vunpack.c.l.b16 %v3364
      %v3589 = vunpack.c.h.b16 %v3364
      %v3590 = vunpack.c.l.b16 %v3365
      %v3591 = vunpack.c.h.b16 %v3365
      %v3592 = vunpack.c.l.b16 %v3366
      %v3593 = vunpack.c.h.b16 %v3366
      %v3594 = vunpack.c.l.b16 %v3367
      %v3595 = vunpack.c.h.b16 %v3367
      %v3596 = vunpack.c.l.b16 %v3368
      %v3597 = vunpack.c.h.b16 %v3368
      %v3598 = vunpack.c.l.b16 %v3369
      %v3599 = vunpack.c.h.b16 %v3369
      %v3600 = vunpack.c.l.b16 %v3370
      %v3601 = vunpack.c.h.b16 %v3370
      %v3602 = vunpack.c.l.b16 %v3371
      %v3603 = vunpack.c.h.b16 %v3371
      %v3604 = vunpack.c.l.b16 %v3372
      %v3605 = vunpack.c.h.b16 %v3372
      %v3606 = vunpack.c.l.b16 %v3373
      %v3607 = vunpack.c.h.b16 %v3373
      %v3608 = vunpack.c.l.b16 %v3374
      %v3609 = vunpack.c.h.b16 %v3374
      %v3610 = vunpack.c.l.b16 %v3375
      %v3611 = vunpack.c.h.b16 %v3375
      %v3612 = vunpack.c.l.b16 %v3376
      %v3613 = vunpack.c.h.b16 %v3376
      %v3614 = vunpack.c.l.b16 %v3377
      %v3615 = vunpack.c.h.b16 %v3377
      %v3616 = vunpack.c.l.b16 %v3378
      %v3617 = vunpack.c.h.b16 %v3378
      %v3618 = vunpack.c.l.b16 %v3379
      %v3619 = vunpack.c.h.b16 %v3379
      %v3620 = vunpack.c.l.b16 %v3380
      %v3621 = vunpack.c.h.b16 %v3380
      %v3622 = vunpack.c.l.b16 %v3381
      %v3623 = vunpack.c.h.b16 %v3381
      %v3624 = vunpack.c.l.b16 %v3382
      %v3625 = vunpack.c.h.b16 %v3382
      %v3626 = vunpack.c.l.b16 %v3383
      %v3627 = vunpack.c.h.b16 %v3383
      %v3628 = vunpack.c.l.b16 %v3384
      %v3629 = vunpack.c.h.b16 %v3384
      %v3630 = vunpack.c.l.b16 %v3385
      %v3631 = vunpack.c.h.b16 %v3385
      %v3632 = vunpack.c.l.b16 %v3386
      %v3633 = vunpack.c.h.b16 %v3386
      %v3634 = vunpack.c.l.b16 %v3387
      %v3635 = vunpack.c.h.b16 %v3387
      %v3636 = vunpack.c.l.b16 %v3388
      %v3637 = vunpack.c.h.b16 %v3388
      %v3638 = vunpack.c.l.b16 %v3389
      %v3639 = vunpack.c.h.b16 %v3389
      %v3640 = vunpack.c.l.b16 %v3390
      %v3641 = vunpack.c.h.b16 %v3390
      %v3642 = vunpack.c.l.b16 %v3391
      %v3643 = vunpack.c.h.b16 %v3391
      %v3644 = vunpack.c.l.b16 %v3392
      %v3645 = vunpack.c.h.b16 %v3392
      %v3646 = vunpack.c.l.b16 %v3393
      %v3647 = vunpack.c.h.b16 %v3393
      %v3648 = vunpack.c.l.b16 %v3394
      %v3649 = vunpack.c.h.b16 %v3394
      %v3650 = vunpack.c.l.b16 %v3395
      %v3651 = vunpack.c.h.b16 %v3395
      %v3652 = vunpack.c.l.b16 %v3396
      %v3653 = vunpack.c.h.b16 %v3396
      %v3654 = vunpack.c.l.b16 %v3397
      %v3655 = vunpack.c.h.b16 %v3397
      %v3656 = vunpack.c.l.b16 %v3398
      %v3657 = vunpack.c.h.b16 %v3398
      %v3658 = vunpack.c.l.b16 %v3399
      %v3659 = vunpack.c.h.b16 %v3399
      %v3660 = vunpack.c.l.b16 %v3400
      %v3661 = vunpack.c.h.b16 %v3400
      %v3662 = vunpack.c.l.b16 %v3401
      %v3663 = vunpack.c.h.b16 %v3401
      %v3664 = vunpack.c.l.b16 %v3402
      %v3665 = vunpack.c.h.b16 %v3402
      %v3666 = vunpack.c.l.b16 %v3403
      %v3667 = vunpack.c.h.b16 %v3403
      %v3668 = vunpack.c.l.b16 %v3404
      %v3669 = vunpack.c.h.b16 %v3404
      %v3670 = vunpack.c.l.b16 %v3405
      %v3671 = vunpack.c.h.b16 %v3405
      %v3672 = vunpack.c.l.b16 %v3406
      %v3673 = vunpack.c.h.b16 %v3406
      %v3674 = vunpack.c.l.b16 %v3407
      %v3675 = vunpack.c.h.b16 %v3407
      %v3676 = vunpack.c.l.b16 %v3408
      %v3677 = vunpack.c.h.b16 %v3408
      %v3678 = vunpack.c.l.b16 %v3409
      %v3679 = vunpack.c.h.b16 %v3409
      %v3680 = vunpack.c.l.b16 %v3410
      %v3681 = vunpack.c.h.b16 %v3410
      %v3682 = vunpack.c.l.b16 %v3411
      %v3683 = vunpack.c.h.b16 %v3411
      %v3684 = vunpack.c.l.b16 %v3412
      %v3685 = vunpack.c.h.b16 %v3412
      %v3686 = vunpack.c.l.b16 %v3413
      %v3687 = vunpack.c.h.b16 %v3413
      %v3688 = vunpack.c.l.b16 %v3414
      %v3689 = vunpack.c.h.b16 %v3414
      %v3690 = vunpack.c.l.b16 %v3415
      %v3691 = vunpack.c.h.b16 %v3415
      %v3692 = vunpack.c.l.b16 %v3416
      %v3693 = vunpack.c.h.b16 %v3416
      %v3694 = vunpack.c.l.b16 %v3417
      %v3695 = vunpack.c.h.b16 %v3417
      %v3696 = vunpack.c.l.b16 %v3418
      %v3697 = vunpack.c.h.b16 %v3418
      %v3698 = vunpack.c.l.b16 %v3419
      %v3699 = vunpack.c.h.b16 %v3419
      %v3700 = vunpack.c.l.b16 %v3420
      %v3701 = vunpack.c.h.b16 %v3420
      %v3702 = vunpack.c.l.b16 %v3421
      %v3703 = vunpack.c.h.b16 %v3421
      %v3704 = vunpack.c.l.b16 %v3422
      %v3705 = vunpack.c.h.b16 %v3422
      %v3706 = vunpack.c.l.b16 %v3423
      %v3707 = vunpack.c.h.b16 %v3423
      %v3708 = vunpack.c.l.b16 %v3424
      %v3709 = vunpack.c.h.b16 %v3424
      %v3710 = vunpack.c.l.b16 %v3425
      %v3711 = vunpack.c.h.b16 %v3425
      %v3712 = vunpack.c.l.b16 %v3426
      %v3713 = vunpack.c.h.b16 %v3426
      %v3714 = vunpack.c.l.b16 %v3427
      %v3715 = vunpack.c.h.b16 %v3427
      %v3716 = vpack.c.b16 %v3526, %v3524
      %v3717 = vpack.c.b16 %v3527, %v3525
      %v3718 = vpack.c.b16 %v3530, %v3528
      %v3719 = vpack.c.b16 %v3531, %v3529
      %v3720 = vpack.c.b16 %v3534, %v3532
      %v3721 = vpack.c.b16 %v3535, %v3533
      %v3722 = vpack.c.b16 %v3538, %v3536
      %v3723 = vpack.c.b16 %v3539, %v3537
      %v3724 = vpack.c.b16 %v3542, %v3540
      %v3725 = vpack.c.b16 %v3543, %v3541
      %v3726 = vpack.c.b16 %v3546, %v3544
      %v3727 = vpack.c.b16 %v3547, %v3545
      %v3728 = vpack.c.b16 %v3550, %v3548
      %v3729 = vpack.c.b16 %v3551, %v3549
      %v3730 = vpack.c.b16 %v3554, %v3552
      %v3731 = vpack.c.b16 %v3555, %v3553
      %v3732 = vpack.c.b16 %v3558, %v3556
      %v3733 = vpack.c.b16 %v3559, %v3557
      %v3734 = vpack.c.b16 %v3562, %v3560
      %v3735 = vpack.c.b16 %v3563, %v3561
      %v3736 = vpack.c.b16 %v3566, %v3564
      %v3737 = vpack.c.b16 %v3567, %v3565
      %v3738 = vpack.c.b16 %v3570, %v3568
      %v3739 = vpack.c.b16 %v3571, %v3569
      %v3740 = vpack.c.b16 %v3574, %v3572
      %v3741 = vpack.c.b16 %v3575, %v3573
      %v3742 = vpack.c.b16 %v3578, %v3576
      %v3743 = vpack.c.b16 %v3579, %v3577
      %v3744 = vpack.c.b16 %v3582, %v3580
      %v3745 = vpack.c.b16 %v3583, %v3581
      %v3746 = vpack.c.b16 %v3586, %v3584
      %v3747 = vpack.c.b16 %v3587, %v3585
      %v3748 = vpack.c.b16 %v3590, %v3588
      %v3749 = vpack.c.b16 %v3591, %v3589
      %v3750 = vpack.c.b16 %v3594, %v3592
      %v3751 = vpack.c.b16 %v3595, %v3593
      %v3752 = vpack.c.b16 %v3598, %v3596
      %v3753 = vpack.c.b16 %v3599, %v3597
      %v3754 = vpack.c.b16 %v3602, %v3600
      %v3755 = vpack.c.b16 %v3603, %v3601
      %v3756 = vpack.c.b16 %v3606, %v3604
      %v3757 = vpack.c.b16 %v3607, %v3605
      %v3758 = vpack.c.b16 %v3610, %v3608
      %v3759 = vpack.c.b16 %v3611, %v3609
      %v3760 = vpack.c.b16 %v3614, %v3612
      %v3761 = vpack.c.b16 %v3615, %v3613
      %v3762 = vpack.c.b16 %v3618, %v3616
      %v3763 = vpack.c.b16 %v3619, %v3617
      %v3764 = vpack.c.b16 %v3622, %v3620
      %v3765 = vpack.c.b16 %v3623, %v3621
      %v3766 = vpack.c.b16 %v3626, %v3624
      %v3767 = vpack.c.b16 %v3627, %v3625
      %v3768 = vpack.c.b16 %v3630, %v3628
      %v3769 = vpack.c.b16 %v3631, %v3629
      %v3770 = vpack.c.b16 %v3634, %v3632
      %v3771 = vpack.c.b16 %v3635, %v3633
      %v3772 = vpack.c.b16 %v3638, %v3636
      %v3773 = vpack.c.b16 %v3639, %v3637
      %v3774 = vpack.c.b16 %v3642, %v3640
      %v3775 = vpack.c.b16 %v3643, %v3641
      %v3776 = vpack.c.b16 %v3646, %v3644
      %v3777 = vpack.c.b16 %v3647, %v3645
      %v3778 = vpack.c.b16 %v3650, %v3648
      %v3779 = vpack.c.b16 %v3651, %v3649
      %v3780 = vpack.c.b16 %v3654, %v3652
      %v3781 = vpack.c.b16 %v3655, %v3653
      %v3782 = vpack.c.b16 %v3658, %v3656
      %v3783 = vpack.c.b16 %v3659, %v3657
      %v3784 = vpack.c.b16 %v3662, %v3660
      %v3785 = vpack.c.b16 %v3663, %v3661
      %v3786 = vpack.c.b16 %v3666, %v3664
      %v3787 = vpack.c.b16 %v3667, %v3665
      %v3788 = vpack.c.b16 %v3670, %v3668
      %v3789 = vpack.c.b16 %v3671, %v3669
      %v3790 = vpack.c.b16 %v3674, %v3672
      %v3791 = vpack.c.b16 %v3675, %v3673
      %v3792 = vpack.c.b16 %v3678, %v3676
      %v3793 = vpack.c.b16 %v3679, %v3677
      %v3794 = vpack.c.b16 %v3682, %v3680
      %v3795 = vpack.c.b16 %v3683, %v3681
      %v3796 = vpack.c.b16 %v3686, %v3684
      %v3797 = vpack.c.b16 %v3687, %v3685
      %v3798 = vpack.c.b16 %v3690, %v3688
      %v3799 = vpack.c.b16 %v3691, %v3689
      %v3800 = vpack.c.b16 %v3694, %v3692
      %v3801 = vpack.c.b16 %v3695, %v3693
      %v3802 = vpack.c.b16 %v3698, %v3696
      %v3803 = vpack.c.b16 %v3699, %v3697
      %v3804 = vpack.c.b16 %v3702, %v3700
      %v3805 = vpack.c.b16 %v3703, %v3701
      %v3806 = vpack.c.b16 %v3706, %v3704
      %v3807 = vpack.c.b16 %v3707, %v3705
      %v3808 = vpack.c.b16 %v3710, %v3708
      %v3809 = vpack.c.b16 %v3711, %v3709
      %v3810 = vpack.c.b16 %v3714, %v3712
      %v3811 = vpack.c.b16 %v3715, %v3713
      %3908 = vmatprep.subr.bf16.mxu0 %v3717
      %3909 = vmatpush1.bf16.msra.mxu0 %v3716
      %3910 = vmatprep.subr.bf16.mxu0 %v3719
      %3911 = vmatpush1.bf16.msra.mxu0 %v3718
      %3912 = vmatprep.subr.bf16.mxu0 %v3721
      %3913 = vmatpush1.bf16.msra.mxu0 %v3720
      %3914 = vmatprep.subr.bf16.mxu0 %v3723
      %3915 = vmatpush1.bf16.msra.mxu0 %v3722
      %3916 = vmatprep.subr.bf16.mxu0 %v3725
      %3917 = vmatpush1.bf16.msra.mxu0 %v3724
      %3918 = vmatprep.subr.bf16.mxu0 %v3727
      %3919 = vmatpush1.bf16.msra.mxu0 %v3726
      %3920 = vmatprep.subr.bf16.mxu0 %v3729
      %3921 = vmatpush1.bf16.msra.mxu0 %v3728
      %3922 = vmatprep.subr.bf16.mxu0 %v3731
      %3923 = vmatpush1.bf16.msra.mxu0 %v3730
      %3924 = vmatprep.subr.bf16.mxu0 %v3733
      %3925 = vmatpush1.bf16.msra.mxu0 %v3732
      %3926 = vmatprep.subr.bf16.mxu0 %v3735
      %3927 = vmatpush1.bf16.msra.mxu0 %v3734
      %3928 = vmatprep.subr.bf16.mxu0 %v3737
      %3929 = vmatpush1.bf16.msra.mxu0 %v3736
      %3930 = vmatprep.subr.bf16.mxu0 %v3739
      %3931 = vmatpush1.bf16.msra.mxu0 %v3738
      %3932 = vmatprep.subr.bf16.mxu0 %v3741
      %3933 = vmatpush1.bf16.msra.mxu0 %v3740
      %3934 = vmatprep.subr.bf16.mxu0 %v3743
      %3935 = vmatpush1.bf16.msra.mxu0 %v3742
      %3936 = vmatprep.subr.bf16.mxu0 %v3745
      %3937 = vmatpush1.bf16.msra.mxu0 %v3744
      %3938 = vmatprep.subr.bf16.mxu0 %v3747
      %3939 = vmatpush1.bf16.msra.mxu0 %v3746
      %3940 = vmatprep.mubr.bf16.mxu0 %v3326
      %3941 = vmatmul.mubr.bf16.gmra.mrb[0].mxu0 %v3325
      %v3942 = vpop.f32.mrb[0].mxu0
      %v3943 = vadd.f32 0.0, %v3942
      %v3944 = vpop.f32.mrb[0].mxu0
      %v3945 = vadd.f32 0.0, %v3944
      %v3946 = vpop.f32.mrb[0].mxu0
      %v3947 = vadd.f32 0.0, %v3946
      %v3948 = vpop.f32.mrb[0].mxu0
      %v3949 = vadd.f32 0.0, %v3948
      %3950 = vdwg.mxu0
      %3951 = vmatprep.subr.bf16.mxu0 %v3749
      %3952 = vmatpush1.bf16.msra.mxu0 %v3748
      %3953 = vmatprep.subr.bf16.mxu0 %v3751
      %3954 = vmatpush1.bf16.msra.mxu0 %v3750
      %3955 = vmatprep.subr.bf16.mxu0 %v3753
      %3956 = vmatpush1.bf16.msra.mxu0 %v3752
      %3957 = vmatprep.subr.bf16.mxu0 %v3755
      %3958 = vmatpush1.bf16.msra.mxu0 %v3754
      %3959 = vmatprep.subr.bf16.mxu0 %v3757
      %3960 = vmatpush1.bf16.msra.mxu0 %v3756
      %3961 = vmatprep.subr.bf16.mxu0 %v3759
      %3962 = vmatpush1.bf16.msra.mxu0 %v3758
      %3963 = vmatprep.subr.bf16.mxu0 %v3761
      %3964 = vmatpush1.bf16.msra.mxu0 %v3760
      %3965 = vmatprep.subr.bf16.mxu0 %v3763
      %3966 = vmatpush1.bf16.msra.mxu0 %v3762
      %3967 = vmatprep.subr.bf16.mxu0 %v3765
      %3968 = vmatpush1.bf16.msra.mxu0 %v3764
      %3969 = vmatprep.subr.bf16.mxu0 %v3767
      %3970 = vmatpush1.bf16.msra.mxu0 %v3766
      %3971 = vmatprep.subr.bf16.mxu0 %v3769
      %3972 = vmatpush1.bf16.msra.mxu0 %v3768
      %3973 = vmatprep.subr.bf16.mxu0 %v3771
      %3974 = vmatpush1.bf16.msra.mxu0 %v3770
      %3975 = vmatprep.subr.bf16.mxu0 %v3773
      %3976 = vmatpush1.bf16.msra.mxu0 %v3772
      %3977 = vmatprep.subr.bf16.mxu0 %v3775
      %3978 = vmatpush1.bf16.msra.mxu0 %v3774
      %3979 = vmatprep.subr.bf16.mxu0 %v3777
      %3980 = vmatpush1.bf16.msra.mxu0 %v3776
      %3981 = vmatprep.subr.bf16.mxu0 %v3779
      %3982 = vmatpush1.bf16.msra.mxu0 %v3778
      %3983 = vmatprep.mubr.bf16.mxu0 %v3328
      %3984 = vmatmul.mubr.bf16.gmra.mrb[0].mxu0 %v3327
      %v3985 = vpop.f32.mrb[0].mxu0
      %v3986 = vadd.f32 %v3943, %v3985
      %v3987 = vpop.f32.mrb[0].mxu0
      %v3988 = vadd.f32 %v3945, %v3987
      %v3989 = vpop.f32.mrb[0].mxu0
      %v3990 = vadd.f32 %v3947, %v3989
      %v3991 = vpop.f32.mrb[0].mxu0
      %v3992 = vadd.f32 %v3949, %v3991
      %3993 = vdwg.mxu0
      %3994 = vmatprep.subr.bf16.mxu0 %v3781
      %3995 = vmatpush1.bf16.msra.mxu0 %v3780
      %3996 = vmatprep.subr.bf16.mxu0 %v3783
      %3997 = vmatpush1.bf16.msra.mxu0 %v3782
      %3998 = vmatprep.subr.bf16.mxu0 %v3785
      %3999 = vmatpush1.bf16.msra.mxu0 %v3784
      %4000 = vmatprep.subr.bf16.mxu0 %v3787
      %4001 = vmatpush1.bf16.msra.mxu0 %v3786
      %4002 = vmatprep.subr.bf16.mxu0 %v3789
      %4003 = vmatpush1.bf16.msra.mxu0 %v3788
      %4004 = vmatprep.subr.bf16.mxu0 %v3791
      %4005 = vmatpush1.bf16.msra.mxu0 %v3790
      %4006 = vmatprep.subr.bf16.mxu0 %v3793
      %4007 = vmatpush1.bf16.msra.mxu0 %v3792
      %4008 = vmatprep.subr.bf16.mxu0 %v3795
      %4009 = vmatpush1.bf16.msra.mxu0 %v3794
      %4010 = vmatprep.subr.bf16.mxu0 %v3797
      %4011 = vmatpush1.bf16.msra.mxu0 %v3796
      %4012 = vmatprep.subr.bf16.mxu0 %v3799
      %4013 = vmatpush1.bf16.msra.mxu0 %v3798
      %4014 = vmatprep.subr.bf16.mxu0 %v3801
      %4015 = vmatpush1.bf16.msra.mxu0 %v3800
      %4016 = vmatprep.subr.bf16.mxu0 %v3803
      %4017 = vmatpush1.bf16.msra.mxu0 %v3802
      %4018 = vmatprep.subr.bf16.mxu0 %v3805
      %4019 = vmatpush1.bf16.msra.mxu0 %v3804
      %4020 = vmatprep.subr.bf16.mxu0 %v3807
      %4021 = vmatpush1.bf16.msra.mxu0 %v3806
      %4022 = vmatprep.subr.bf16.mxu0 %v3809
      %4023 = vmatpush1.bf16.msra.mxu0 %v3808
      %4024 = vmatprep.subr.bf16.mxu0 %v3811
      %4025 = vmatpush1.bf16.msra.mxu0 %v3810
      %4026 = vmatprep.mubr.bf16.mxu0 %v3330
      %4027 = vmatmul.mubr.bf16.gmra.mrb[0].mxu0 %v3329
      %v4028 = vpop.f32.mrb[0].mxu0
      %v4029 = vadd.f32 %v3986, %v4028
      %v4030 = vpop.f32.mrb[0].mxu0
      %v4031 = vadd.f32 %v3988, %v4030
      %v4032 = vpop.f32.mrb[0].mxu0
      %v4033 = vadd.f32 %v3990, %v4032
      %v4034 = vpop.f32.mrb[0].mxu0
      %v4035 = vadd.f32 %v3992, %v4034
      %4036 = vdwg.mxu0
      %s4037 = scalar_lea.vmem %s3, 4
      %v4038 = vld [vmem:[%s4037] ss:$8 sm:$0x3]
      %v4040 = vlaneseq
      %v4041 = vshrl.u32 %v4040, 7
      %v4042 = vsub.s32 0, %v4041
      %v4043 = vrot.slane %v4038, %v4042
      %v4044 = vlaneseq
      %v4045 = vshrl.u32 %v4044, 7
      %v4046 = vsub.s32 1, %v4045
      %v4047 = vrot.slane %v4038, %v4046
      %v4050 = vmul.f32 %v4029, %v4043
      %v4051 = vmul.f32 %v4031, %v4047
      %v4052 = vmul.f32 %v4033, %v4043
      %v4053 = vmul.f32 %v4035, %v4047
      %s4054 = scalar_lea.vmem %s4, 4
      %v4055 = vld [vmem:[%s4054] ss:$8 sm:$0x3]
      %v4057 = vlaneseq
      %v4058 = vshrl.u32 %v4057, 7
      %v4059 = vsub.s32 0, %v4058
      %v4060 = vrot.slane %v4055, %v4059
      %v4061 = vlaneseq
      %v4062 = vshrl.u32 %v4061, 7
      %v4063 = vsub.s32 1, %v4062
      %v4064 = vrot.slane %v4055, %v4063
      %v4067 = vadd.f32 %v4050, %v4060
      %v4068 = vadd.f32 %v4051, %v4064
      %v4069 = vadd.f32 %v4052, %v4060
      %v4070 = vadd.f32 %v4053, %v4064
      %v4071 = vadd.f32 %v4067, %v2511
      %v4072 = vadd.f32 %v4068, %v2512
      %v4073 = vadd.f32 %v4069, %v2513
      %v4074 = vadd.f32 %v4070, %v2514
      %v4075 = vmax.f32 %v4071, 0.0
      %v4076 = vmax.f32 %v4072, 0.0
      %v4077 = vmax.f32 %v4073, 0.0
      %v4078 = vmax.f32 %v4074, 0.0
      %v4079 = vsel %vm945, %v4075, 0.0
      %v4080 = vsel %vm945, %v4076, 0.0
      %v4081 = vsel %vm946, %v4077, 0.0
      %v4082 = vsel %vm946, %v4078, 0.0
      %4083 = vst [vmem:[%s231] sm:$0xff] %v4079
      %4084 = vst [vmem:[%s231 + $0x8] sm:$0xff] %v4080
      %4085 = vst [vmem:[%s231 + $0x10] sm:$0xff] %v4081
      %4086 = vst [vmem:[%s231 + $0x18] sm:$0xff] %v4082
      %s4087 = smul.u32 2, %s16
      %p4088 = scmp.lt.s32.totalorder %s4087, 3
      %s4089 = scalar_select %p4088, %s4087, 3
      %s4090 = smul.addr %s4089, 2
      %s4091 = smul.addr %s4090, 8
      %s4092 = scalar_lea.vmem %s5, %s4091
      // Predicated region
      $region41: #{fenet_forward.1} parent=39 // pred_check
        %p4093 = pneg %p144
      $region42: #{fenet_forward.1} parent=39 // pred_check_branch
        %4095 = sbr.rel (%p4093) target = $region44
      $region43: #{fenet_forward.1} parent=39 // pred_region
        %s4096 = smul.u32 2, %s16
      $region44: #{fenet_forward.1} parent=39 // pred_fallthru
        _
    $region40: #{fenet_forward.1} parent=5 // pred_fallthru
      _
    %p4097 = scmp.le.s32.totalorder 2, %s11
    // Predicated region
    $region45: #{fenet_forward.1} parent=5 // pred_check
      %p4098 = pneg %p4097
    $region46: #{fenet_forward.1} parent=5 // pred_check_branch
      %4100 = sbr.rel (%p4098) target = $region48
    $region47: #{fenet_forward.1} parent=5 // pred_region
      %s4101 = ssub.s32 %s11, 2
      // Predicated region
      $region49: #{fenet_forward.1} parent=47 // pred_check
        %p4102 = pneg %p150
      $region50: #{fenet_forward.1} parent=47 // pred_check_branch
        %4104 = sbr.rel (%p4102) target = $region52
      $region51: #{fenet_forward.1} parent=47 // pred_region
        %s4105 = smul.u32 2, %s17
        %p4106 = scmp.lt.s32.totalorder %s4105, 3
        %s4107 = scalar_select %p4106, %s4105, 3
        %s4108 = smul.addr %s4107, 2
        %s4109 = smul.addr %s4108, 8
        %s4110 = scalar_lea.vmem %s5, %s4109
      $region52: #{fenet_forward.1} parent=47 // pred_fallthru
        _
    $region48: #{fenet_forward.1} parent=5 // pred_fallthru
      _
  $region6: #{fenet_forward.1} parent=0 // loop_footer
    %s15 = sadd.s32 1, %s11
  $region7: #{fenet_forward.1} parent=0 // loop_footer_branch
    %10 = sbr.rel target = $region3
  $region8: #{fenet_forward.1} parent=0 // loop_exit
    _

</llo_original>
